<compile_context>
chip_gen: v7x
topology: tpu7x:2x2x1
jax: 0.10.0
libtpu: 0.0.40
codegen_flags: <defaults>
</compile_context>

<pallas_src>
import functools

import jax
import jax.numpy as jnp
from jax.experimental import pallas as pl
from jax.experimental.pallas import tpu as pltpu


# ----------------------------------------------------------------------------
# Kernel: one (sample, row-band) per grid step.
# Output is column-phase separated: o_ref[ph, l, j, c] = conv_out[p0+l, 2*j+ph, c].
# ----------------------------------------------------------------------------
def _upconv_band_kernel(x_ref, w_ref, b_ref, o_ref, simg, *, H, W, Cin, Cout, TH):
    f32 = jnp.float32
    bf16 = jnp.bfloat16
    THI = TH // 2                                  # input rows per band

    band = pl.program_id(1)
    nb = pl.num_programs(1)
    i0 = pl.multiple_of(band * THI, THI)           # first "centre" input row

    # ---- input rows x[i-1], x[i] for i = i0 .. i0+THI (clamped halo) --------
    base = x_ref[pl.ds(i0, THI)]                               # x[i0 .. i0+THI-1]
    top = x_ref[pl.ds(jnp.maximum(i0 - 1, 0), 1)]              # x[i0-1]   (clamped)
    bot = x_ref[pl.ds(jnp.minimum(i0 + THI, H - 1), 1)]        # x[i0+THI] (clamped)
    xm = jnp.concatenate([top, base], axis=0).astype(f32)      # x[i-1]
    xc = jnp.concatenate([base, bot], axis=0).astype(f32)      # x[i]

    # ---- bilinear x2 along H (align_corners=False) ---------------------------
    # band needs upsampled rows q = p0-1 .. p0+TH  ==  (u[2i-1], u[2i]) pairs
    odd = 0.75 * xm + 0.25 * xc                                # u[2i-1]
    even = 0.25 * xm + 0.75 * xc                               # u[2i]
    v = jnp.stack([odd, even], axis=1).reshape(TH + 2, W, Cin)

    # ---- bilinear x2 along W, phase separated --------------------------------
    v_lf = jnp.concatenate([v[:, :1], v[:, :-1]], axis=1)      # v[:, j-1] (clamped)
    v_rt = jnp.concatenate([v[:, 1:], v[:, -1:]], axis=1)      # v[:, j+1] (clamped)
    e_img = 0.25 * v_lf + 0.75 * v                             # u[:, 2j]
    o_img = 0.75 * v + 0.25 * v_rt                             # u[:, 2j+1]

    # shifted copies with the conv's zero-pad column folded in (no mask muls)
    zcol = jnp.zeros((TH + 2, 1, Cin), f32)
    l_img = jnp.concatenate([zcol, o_img[:, :-1]], axis=1)     # u[:, 2j-1]; 0 at j=0
    r2_img = jnp.concatenate([e_img[:, 1:], zcol], axis=1)     # u[:, 2j+2]; 0 at j=W-1

    # ---- stage to bf16 scratch: 4 phase slots interleaved along lanes --------
    simg[...] = jnp.concatenate([l_img, e_img, o_img, r2_img], axis=-1).astype(bf16)

    # conv zero-pad rows: only the image's first / last upsampled row
    @pl.when(band == 0)
    def _():
        simg[0] = jnp.zeros((W, 4 * Cin), bf16)

    @pl.when(band == nb - 1)
    def _():
        simg[TH + 1] = jnp.zeros((W, 4 * Cin), bf16)

    # ---- 3x3 conv: 2 phases x 3 accumulated K=3*Cin MXU matmuls --------------
    bias = b_ref[...].astype(f32)                              # (1, Cout)
    y_e = bias
    y_o = bias
    for dy in range(3):                                        # static unroll
        w_dy = w_ref[dy]                                       # (3*Cin, Cout) bf16
        lhs_e = simg[dy:dy + TH, :, 0:3 * Cin].reshape(TH * W, 3 * Cin)
        lhs_o = simg[dy:dy + TH, :, Cin:4 * Cin].reshape(TH * W, 3 * Cin)
        y_e = y_e + jnp.dot(lhs_e, w_dy, preferred_element_type=f32)
        y_o = y_o + jnp.dot(lhs_o, w_dy, preferred_element_type=f32)

    o_ref[0] = y_e.reshape(TH, W, Cout).astype(o_ref.dtype)    # output cols 2j
    o_ref[1] = y_o.reshape(TH, W, Cout).astype(o_ref.dtype)    # output cols 2j+1


def _choose_band_rows(H2, W, Cin, Cout, budget_bytes=12 * 1024 * 1024):
    """Largest even divisor of H2 whose per-band working set fits the budget."""
    best = 2
    th = 2
    while th <= min(H2, 256):
        if H2 % th == 0:
            est = ((th + 2) * W * 4 * Cin * 2              # bf16 scratch
                   + 2 * (2 * th * W * Cout * 2)           # double-buffered out block
                   + (th + 2) * W * Cin * 4 * 6            # f32 blend temporaries
                   + 2 * th * W * Cout * 4                 # f32 accumulators
                   + 2 * th * W * 3 * Cin * 2)             # bf16 matmul LHS values
            if est <= budget_bytes:
                best = th
        th += 2
    return best


# ----------------------------------------------------------------------------
# Wrapper: NCHW in, NCHW out (PyTorch convention).
#   w_hwio : (3, 3, Cin, Cout) conv weight, bias : (Cout,)
# ----------------------------------------------------------------------------
def up_conv(x_nchw, w_hwio, bias, band_rows=None):
    N, Cin, H, W = x_nchw.shape
    Cout = w_hwio.shape[-1]
    H2, W2 = 2 * H, 2 * W

    TH = band_rows if band_rows is not None else _choose_band_rows(H2, W, Cin, Cout)
    assert TH % 2 == 0 and H2 % TH == 0, (TH, H2)
    nb = H2 // TH

    x_nhwc = jnp.transpose(x_nchw, (0, 2, 3, 1))                   # keep f32
    w3 = w_hwio.reshape(3, 3 * Cin, Cout).astype(jnp.bfloat16)     # rows = (dx, ci)
    brow = bias.reshape(1, Cout).astype(jnp.float32)

    kernel = functools.partial(_upconv_band_kernel,
                               H=H, W=W, Cin=Cin, Cout=Cout, TH=TH)

    out_ph = pl.pallas_call(
        kernel,
        out_shape=jax.ShapeDtypeStruct((N, 2, H2, W, Cout), jnp.bfloat16),
        grid=(N, nb),
        in_specs=[
            # full image per sample; band-invariant index_map => DMA'd once per n
            pl.BlockSpec((None, H, W, Cin), lambda n, b: (n, 0, 0, 0)),
            pl.BlockSpec((3, 3 * Cin, Cout), lambda n, b: (0, 0, 0)),
            pl.BlockSpec((1, Cout), lambda n, b: (0, 0)),
        ],
        out_specs=pl.BlockSpec((None, 2, TH, W, Cout), lambda n, b: (n, 0, b, 0, 0)),
        scratch_shapes=[pltpu.VMEM((TH + 2, W, 4 * Cin), jnp.bfloat16)],
        compiler_params=pltpu.CompilerParams(
            dimension_semantics=("parallel", "parallel"),
            vmem_limit_bytes=64 * 1024 * 1024),
    )(x_nhwc, w3, brow)

    # out_ph[n, ph, p, j, c] == conv_out[n, p, 2*j + ph, c]; fold the column
    # un-interleave into the single NHWC->NCHW layout conversion (bf16 read).
    out = jnp.transpose(out_ph, (0, 4, 2, 3, 1)).reshape(N, Cout, H2, W2)
    return out.astype(jnp.float32)


# ----------------------------------------------------------------------------
# Pure-JAX reference (PyTorch semantics) for the self-check.
# ----------------------------------------------------------------------------
def _ref_upconv(x_nchw, w_hwio, bias):
    x = jnp.transpose(x_nchw, (0, 2, 3, 1)).astype(jnp.float32)    # NHWC

    def up2x(a, axis):
        n = a.shape[axis]
        o = jnp.arange(2 * n, dtype=jnp.float32)
        src = jnp.clip((o + 0.5) / 2.0 - 0.5, 0.0, float(n - 1))
        lo = jnp.floor(src).astype(jnp.int32)
        hi = jnp.minimum(lo + 1, n - 1)
        frac = src - lo.astype(jnp.float32)
        a_lo = jnp.take(a, lo, axis=axis)
        a_hi = jnp.take(a, hi, axis=axis)
        shape = [1] * a.ndim
        shape[axis] = 2 * n
        frac = frac.reshape(shape)
        return a_lo * (1.0 - frac) + a_hi * frac

    u = up2x(up2x(x, 1), 2)                                        # bilinear x2
    y = jax.lax.conv_general_dilated(
        u, w_hwio, window_strides=(1, 1), padding="SAME",
        dimension_numbers=("NHWC", "HWIO", "NHWC"))
    y = y + bias.reshape(1, 1, 1, -1)
    return jnp.transpose(y, (0, 3, 1, 2))                          # NCHW


if __name__ == "__main__":
    N, C_IN, C_OUT, H, W = 2, 8, 4, 16, 16

    key = jax.random.PRNGKey(0)
    kx, kw, kb = jax.random.split(key, 3)
    x = jax.random.normal(kx, (N, C_IN, H, W), jnp.float32)          # NCHW input
    w = jax.random.normal(kw, (3, 3, C_IN, C_OUT), jnp.float32) / jnp.sqrt(9.0 * C_IN)
    b = 0.1 * jax.random.normal(kb, (C_OUT,), jnp.float32)

    ref = jax.block_until_ready(_ref_upconv(x, w, b))

    # auto band size (single band at this tiny shape) and forced 4-band run
    # (exercises first / interior / last band halo + conv-pad logic).
    out_auto = jax.block_until_ready(up_conv(x, w, b))
    out_band = jax.block_until_ready(up_conv(x, w, b, band_rows=8))

    for out in (out_auto, out_band):
        assert out.shape == (N, C_OUT, 2 * H, 2 * W), out.shape
        max_err = float(jnp.max(jnp.abs(out - ref)))
        assert max_err < 5e-2, f"mismatch vs reference, max abs err = {max_err}"

    print("KERNEL_OK")
</pallas_src>

<mosaic_0001>
module attributes {stable_mosaic.version = 11 : i64} {
  func.func @_upconv_band_kernel(%arg0: i32, %arg1: i32, %arg2: memref<1x16x16x8xf32, #tpu.memory_space<vmem>>, %arg3: memref<3x24x4xbf16, #tpu.memory_space<vmem>>, %arg4: memref<1x4xf32, #tpu.memory_space<vmem>>, %arg5: memref<1x2x32x16x4xbf16, #tpu.memory_space<vmem>>, %arg6: memref<34x16x32xbf16, #tpu.memory_space<vmem>>) attributes {dimension_semantics = [#tpu.dimension_semantics<parallel>, #tpu.dimension_semantics<parallel>], iteration_bounds = array<i64: 2, 1>, scalar_prefetch = 0 : i64, scratch_operands = 1 : i64, tpu.core_type = #tpu.core_type<tc>, window_params = [{transform_indices = @transform_0, window_bounds = array<i64: 1, 16, 16, 8>}, {pipeline_mode = #tpu.pipeline_mode<synchronous>, transform_indices = @transform_1, window_bounds = array<i64: 3, 24, 4>}, {pipeline_mode = #tpu.pipeline_mode<synchronous>, transform_indices = @transform_2, window_bounds = array<i64: 1, 4>}, {transform_indices = @transform_3, window_bounds = array<i64: 1, 2, 32, 16, 4>}]} {
    %c16_i32 = arith.constant 16 : i32
    %0 = arith.muli %arg1, %c16_i32 : i32
    %1 = tpu.assume_multiple %0, 16 : i32
    %c0 = arith.constant 0 : index
    %2 = arith.index_cast %1 : i32 to index
    %c0_0 = arith.constant 0 : index
    %c0_1 = arith.constant 0 : index
    %3 = vector.load %arg2[%c0, %2, %c0_0, %c0_1] : memref<1x16x16x8xf32, #tpu.memory_space<vmem>>, vector<1x16x16x8xf32>
    %4 = vector.shape_cast %3 : vector<1x16x16x8xf32> to vector<16x16x8xf32>
    %c1_i32 = arith.constant 1 : i32
    %5 = arith.subi %1, %c1_i32 : i32
    %c0_i32 = arith.constant 0 : i32
    %6 = arith.maxsi %5, %c0_i32 : i32
    %c0_2 = arith.constant 0 : index
    %7 = arith.index_cast %6 : i32 to index
    %c0_3 = arith.constant 0 : index
    %c0_4 = arith.constant 0 : index
    %8 = vector.load %arg2[%c0_2, %7, %c0_3, %c0_4] : memref<1x16x16x8xf32, #tpu.memory_space<vmem>>, vector<1x1x16x8xf32>
    %9 = vector.shape_cast %8 : vector<1x1x16x8xf32> to vector<1x16x8xf32>
    %c16_i32_5 = arith.constant 16 : i32
    %10 = arith.addi %1, %c16_i32_5 : i32
    %c15_i32 = arith.constant 15 : i32
    %11 = arith.minsi %10, %c15_i32 : i32
    %c0_6 = arith.constant 0 : index
    %12 = arith.index_cast %11 : i32 to index
    %c0_7 = arith.constant 0 : index
    %c0_8 = arith.constant 0 : index
    %13 = vector.load %arg2[%c0_6, %12, %c0_7, %c0_8] : memref<1x16x16x8xf32, #tpu.memory_space<vmem>>, vector<1x1x16x8xf32>
    %14 = vector.shape_cast %13 : vector<1x1x16x8xf32> to vector<1x16x8xf32>
    %15 = tpu.concatenate %9, %4 in 0 : vector<1x16x8xf32>, vector<16x16x8xf32> -> vector<17x16x8xf32>
    %16 = tpu.concatenate %4, %14 in 0 : vector<16x16x8xf32>, vector<1x16x8xf32> -> vector<17x16x8xf32>
    %cst = arith.constant 7.500000e-01 : f32
    %17 = vector.broadcast %cst : f32 to vector<17x16x8xf32>
    %18 = arith.mulf %17, %15 : vector<17x16x8xf32>
    %cst_9 = arith.constant 2.500000e-01 : f32
    %19 = vector.broadcast %cst_9 : f32 to vector<17x16x8xf32>
    %20 = arith.mulf %19, %16 : vector<17x16x8xf32>
    %21 = arith.addf %18, %20 : vector<17x16x8xf32>
    %cst_10 = arith.constant 2.500000e-01 : f32
    %22 = vector.broadcast %cst_10 : f32 to vector<17x16x8xf32>
    %23 = arith.mulf %22, %15 : vector<17x16x8xf32>
    %cst_11 = arith.constant 7.500000e-01 : f32
    %24 = vector.broadcast %cst_11 : f32 to vector<17x16x8xf32>
    %25 = arith.mulf %24, %16 : vector<17x16x8xf32>
    %26 = arith.addf %23, %25 : vector<17x16x8xf32>
    %27 = vector.shape_cast %21 : vector<17x16x8xf32> to vector<17x1x16x8xf32>
    %28 = vector.shape_cast %26 : vector<17x16x8xf32> to vector<17x1x16x8xf32>
    %29 = tpu.concatenate %27, %28 in 1 : vector<17x1x16x8xf32>, vector<17x1x16x8xf32> -> vector<17x2x16x8xf32>
    %30 = vector.shape_cast %29 : vector<17x2x16x8xf32> to vector<34x16x8xf32>
    %31 = vector.extract_strided_slice %30 {offsets = [0, 0, 0], sizes = [34, 1, 8], strides = [1, 1, 1]} : vector<34x16x8xf32> to vector<34x1x8xf32>
    %32 = vector.extract_strided_slice %30 {offsets = [0, 0, 0], sizes = [34, 15, 8], strides = [1, 1, 1]} : vector<34x16x8xf32> to vector<34x15x8xf32>
    %33 = tpu.concatenate %31, %32 in 1 : vector<34x1x8xf32>, vector<34x15x8xf32> -> vector<34x16x8xf32>
    %34 = vector.extract_strided_slice %30 {offsets = [0, 1, 0], sizes = [34, 15, 8], strides = [1, 1, 1]} : vector<34x16x8xf32> to vector<34x15x8xf32>
    %35 = vector.extract_strided_slice %30 {offsets = [0, 15, 0], sizes = [34, 1, 8], strides = [1, 1, 1]} : vector<34x16x8xf32> to vector<34x1x8xf32>
    %36 = tpu.concatenate %34, %35 in 1 : vector<34x15x8xf32>, vector<34x1x8xf32> -> vector<34x16x8xf32>
    %cst_12 = arith.constant 2.500000e-01 : f32
    %37 = vector.broadcast %cst_12 : f32 to vector<34x16x8xf32>
    %38 = arith.mulf %37, %33 : vector<34x16x8xf32>
    %cst_13 = arith.constant 7.500000e-01 : f32
    %39 = vector.broadcast %cst_13 : f32 to vector<34x16x8xf32>
    %40 = arith.mulf %39, %30 : vector<34x16x8xf32>
    %41 = arith.addf %38, %40 : vector<34x16x8xf32>
    %cst_14 = arith.constant 7.500000e-01 : f32
    %42 = vector.broadcast %cst_14 : f32 to vector<34x16x8xf32>
    %43 = arith.mulf %42, %30 : vector<34x16x8xf32>
    %cst_15 = arith.constant 2.500000e-01 : f32
    %44 = vector.broadcast %cst_15 : f32 to vector<34x16x8xf32>
    %45 = arith.mulf %44, %36 : vector<34x16x8xf32>
    %46 = arith.addf %43, %45 : vector<34x16x8xf32>
    %cst_16 = arith.constant 0.000000e+00 : f32
    %47 = vector.broadcast %cst_16 : f32 to vector<34x1x8xf32>
    %48 = vector.extract_strided_slice %46 {offsets = [0, 0, 0], sizes = [34, 15, 8], strides = [1, 1, 1]} : vector<34x16x8xf32> to vector<34x15x8xf32>
    %49 = tpu.concatenate %47, %48 in 1 : vector<34x1x8xf32>, vector<34x15x8xf32> -> vector<34x16x8xf32>
    %50 = vector.extract_strided_slice %41 {offsets = [0, 1, 0], sizes = [34, 15, 8], strides = [1, 1, 1]} : vector<34x16x8xf32> to vector<34x15x8xf32>
    %51 = tpu.concatenate %50, %47 in 1 : vector<34x15x8xf32>, vector<34x1x8xf32> -> vector<34x16x8xf32>
    %52 = tpu.concatenate %49, %41, %46, %51 in 2 : vector<34x16x8xf32>, vector<34x16x8xf32>, vector<34x16x8xf32>, vector<34x16x8xf32> -> vector<34x16x32xf32>
    %53 = arith.truncf %52 : vector<34x16x32xf32> to vector<34x16x32xbf16>
    %c0_17 = arith.constant 0 : index
    %c0_18 = arith.constant 0 : index
    %c0_19 = arith.constant 0 : index
    %54 = vector.load %arg6[%c0_17, %c0_18, %c0_19] : memref<34x16x32xbf16, #tpu.memory_space<vmem>>, vector<34x16x32xbf16>
    tpu.vector_store %arg6[%c0_17, %c0_18, %c0_19], %53 {strides = array<i32>} : memref<34x16x32xbf16, #tpu.memory_space<vmem>>, vector<34x16x32xbf16>,
    %c0_i32_20 = arith.constant 0 : i32
    %55 = arith.cmpi eq, %arg1, %c0_i32_20 : i32
    %56 = arith.extui %55 : i1 to i32
    %c0_i32_21 = arith.constant 0 : i32
    %57 = arith.cmpi ne, %56, %c0_i32_21 : i32
    scf.if %57 {
      %cst_66 = arith.constant 0.000000e+00 : bf16
      %104 = vector.broadcast %cst_66 : bf16 to vector<16x32xbf16>
      %c0_67 = arith.constant 0 : index
      %c0_68 = arith.constant 0 : index
      %c0_69 = arith.constant 0 : index
      %105 = vector.load %arg6[%c0_67, %c0_68, %c0_69] : memref<34x16x32xbf16, #tpu.memory_space<vmem>>, vector<1x16x32xbf16>
      %106 = vector.shape_cast %105 : vector<1x16x32xbf16> to vector<16x32xbf16>
      %107 = vector.shape_cast %104 : vector<16x32xbf16> to vector<1x16x32xbf16>
      tpu.vector_store %arg6[%c0_67, %c0_68, %c0_69], %107 {strides = array<i32>} : memref<34x16x32xbf16, #tpu.memory_space<vmem>>, vector<1x16x32xbf16>,
    } else {
    }
    %c0_i32_22 = arith.constant 0 : i32
    %58 = arith.cmpi eq, %arg1, %c0_i32_22 : i32
    %59 = arith.extui %58 : i1 to i32
    %c0_i32_23 = arith.constant 0 : i32
    %60 = arith.cmpi ne, %59, %c0_i32_23 : i32
    scf.if %60 {
      %cst_66 = arith.constant 0.000000e+00 : bf16
      %104 = vector.broadcast %cst_66 : bf16 to vector<16x32xbf16>
      %c33 = arith.constant 33 : index
      %c0_67 = arith.constant 0 : index
      %c0_68 = arith.constant 0 : index
      %105 = vector.load %arg6[%c33, %c0_67, %c0_68] : memref<34x16x32xbf16, #tpu.memory_space<vmem>>, vector<1x16x32xbf16>
      %106 = vector.shape_cast %105 : vector<1x16x32xbf16> to vector<16x32xbf16>
      %107 = vector.shape_cast %104 : vector<16x32xbf16> to vector<1x16x32xbf16>
      tpu.vector_store %arg6[%c33, %c0_67, %c0_68], %107 {strides = array<i32>} : memref<34x16x32xbf16, #tpu.memory_space<vmem>>, vector<1x16x32xbf16>,
    } else {
    }
    %c0_24 = arith.constant 0 : index
    %c0_25 = arith.constant 0 : index
    %61 = vector.load %arg4[%c0_24, %c0_25] : memref<1x4xf32, #tpu.memory_space<vmem>>, vector<1x4xf32>
    %c0_26 = arith.constant 0 : index
    %c0_27 = arith.constant 0 : index
    %c0_28 = arith.constant 0 : index
    %62 = vector.load %arg3[%c0_26, %c0_27, %c0_28] : memref<3x24x4xbf16, #tpu.memory_space<vmem>>, vector<1x24x4xbf16>
    %63 = vector.shape_cast %62 : vector<1x24x4xbf16> to vector<24x4xbf16>
    %c0_29 = arith.constant 0 : index
    %c0_30 = arith.constant 0 : index
    %c0_31 = arith.constant 0 : index
    %64 = vector.load %arg6[%c0_29, %c0_30, %c0_31] : memref<34x16x32xbf16, #tpu.memory_space<vmem>>, vector<32x16x24xbf16>
    %65 = vector.shape_cast %64 : vector<32x16x24xbf16> to vector<512x24xbf16>
    %c0_32 = arith.constant 0 : index
    %c0_33 = arith.constant 0 : index
    %c8 = arith.constant 8 : index
    %66 = vector.load %arg6[%c0_32, %c0_33, %c8] : memref<34x16x32xbf16, #tpu.memory_space<vmem>>, vector<32x16x24xbf16>
    %67 = vector.shape_cast %66 : vector<32x16x24xbf16> to vector<512x24xbf16>
    %cst_34 = arith.constant dense<0.000000e+00> : vector<512x4xf32>
    %68 = tpu.matmul %65, %63, %cst_34 {dimension_numbers = #tpu.dot_dimension_numbers<[1], [0], [0], [1], [0, 0, 1, 1], [], []>} : vector<512x24xbf16>, vector<24x4xbf16>, vector<512x4xf32> -> vector<512x4xf32>
    %69 = vector.broadcast %61 : vector<1x4xf32> to vector<512x4xf32>
    %70 = arith.addf %69, %68 : vector<512x4xf32>
    %cst_35 = arith.constant dense<0.000000e+00> : vector<512x4xf32>
    %71 = tpu.matmul %67, %63, %cst_35 {dimension_numbers = #tpu.dot_dimension_numbers<[1], [0], [0], [1], [0, 0, 1, 1], [], []>} : vector<512x24xbf16>, vector<24x4xbf16>, vector<512x4xf32> -> vector<512x4xf32>
    %72 = vector.broadcast %61 : vector<1x4xf32> to vector<512x4xf32>
    %73 = arith.addf %72, %71 : vector<512x4xf32>
    %c1 = arith.constant 1 : index
    %c0_36 = arith.constant 0 : index
    %c0_37 = arith.constant 0 : index
    %74 = vector.load %arg3[%c1, %c0_36, %c0_37] : memref<3x24x4xbf16, #tpu.memory_space<vmem>>, vector<1x24x4xbf16>
    %75 = vector.shape_cast %74 : vector<1x24x4xbf16> to vector<24x4xbf16>
    %c1_38 = arith.constant 1 : index
    %c0_39 = arith.constant 0 : index
    %c0_40 = arith.constant 0 : index
    %76 = vector.load %arg6[%c1_38, %c0_39, %c0_40] : memref<34x16x32xbf16, #tpu.memory_space<vmem>>, vector<32x16x24xbf16>
    %77 = vector.shape_cast %76 : vector<32x16x24xbf16> to vector<512x24xbf16>
    %c1_41 = arith.constant 1 : index
    %c0_42 = arith.constant 0 : index
    %c8_43 = arith.constant 8 : index
    %78 = vector.load %arg6[%c1_41, %c0_42, %c8_43] : memref<34x16x32xbf16, #tpu.memory_space<vmem>>, vector<32x16x24xbf16>
    %79 = vector.shape_cast %78 : vector<32x16x24xbf16> to vector<512x24xbf16>
    %cst_44 = arith.constant dense<0.000000e+00> : vector<512x4xf32>
    %80 = tpu.matmul %77, %75, %cst_44 {dimension_numbers = #tpu.dot_dimension_numbers<[1], [0], [0], [1], [0, 0, 1, 1], [], []>} : vector<512x24xbf16>, vector<24x4xbf16>, vector<512x4xf32> -> vector<512x4xf32>
    %81 = arith.addf %70, %80 : vector<512x4xf32>
    %cst_45 = arith.constant dense<0.000000e+00> : vector<512x4xf32>
    %82 = tpu.matmul %79, %75, %cst_45 {dimension_numbers = #tpu.dot_dimension_numbers<[1], [0], [0], [1], [0, 0, 1, 1], [], []>} : vector<512x24xbf16>, vector<24x4xbf16>, vector<512x4xf32> -> vector<512x4xf32>
    %83 = arith.addf %73, %82 : vector<512x4xf32>
    %c2 = arith.constant 2 : index
    %c0_46 = arith.constant 0 : index
    %c0_47 = arith.constant 0 : index
    %84 = vector.load %arg3[%c2, %c0_46, %c0_47] : memref<3x24x4xbf16, #tpu.memory_space<vmem>>, vector<1x24x4xbf16>
    %85 = vector.shape_cast %84 : vector<1x24x4xbf16> to vector<24x4xbf16>
    %c2_48 = arith.constant 2 : index
    %c0_49 = arith.constant 0 : index
    %c0_50 = arith.constant 0 : index
    %86 = vector.load %arg6[%c2_48, %c0_49, %c0_50] : memref<34x16x32xbf16, #tpu.memory_space<vmem>>, vector<32x16x24xbf16>
    %87 = vector.shape_cast %86 : vector<32x16x24xbf16> to vector<512x24xbf16>
    %c2_51 = arith.constant 2 : index
    %c0_52 = arith.constant 0 : index
    %c8_53 = arith.constant 8 : index
    %88 = vector.load %arg6[%c2_51, %c0_52, %c8_53] : memref<34x16x32xbf16, #tpu.memory_space<vmem>>, vector<32x16x24xbf16>
    %89 = vector.shape_cast %88 : vector<32x16x24xbf16> to vector<512x24xbf16>
    %cst_54 = arith.constant dense<0.000000e+00> : vector<512x4xf32>
    %90 = tpu.matmul %87, %85, %cst_54 {dimension_numbers = #tpu.dot_dimension_numbers<[1], [0], [0], [1], [0, 0, 1, 1], [], []>} : vector<512x24xbf16>, vector<24x4xbf16>, vector<512x4xf32> -> vector<512x4xf32>
    %91 = arith.addf %81, %90 : vector<512x4xf32>
    %cst_55 = arith.constant dense<0.000000e+00> : vector<512x4xf32>
    %92 = tpu.matmul %89, %85, %cst_55 {dimension_numbers = #tpu.dot_dimension_numbers<[1], [0], [0], [1], [0, 0, 1, 1], [], []>} : vector<512x24xbf16>, vector<24x4xbf16>, vector<512x4xf32> -> vector<512x4xf32>
    %93 = arith.addf %83, %92 : vector<512x4xf32>
    %94 = vector.shape_cast %91 : vector<512x4xf32> to vector<32x16x4xf32>
    %95 = arith.truncf %94 : vector<32x16x4xf32> to vector<32x16x4xbf16>
    %c0_56 = arith.constant 0 : index
    %c0_57 = arith.constant 0 : index
    %c0_58 = arith.constant 0 : index
    %c0_59 = arith.constant 0 : index
    %c0_60 = arith.constant 0 : index
    %96 = vector.load %arg5[%c0_56, %c0_57, %c0_58, %c0_59, %c0_60] : memref<1x2x32x16x4xbf16, #tpu.memory_space<vmem>>, vector<1x1x32x16x4xbf16>
    %97 = vector.shape_cast %96 : vector<1x1x32x16x4xbf16> to vector<32x16x4xbf16>
    %98 = vector.shape_cast %95 : vector<32x16x4xbf16> to vector<1x1x32x16x4xbf16>
    tpu.vector_store %arg5[%c0_56, %c0_57, %c0_58, %c0_59, %c0_60], %98 {strides = array<i32>} : memref<1x2x32x16x4xbf16, #tpu.memory_space<vmem>>, vector<1x1x32x16x4xbf16>,
    %99 = vector.shape_cast %93 : vector<512x4xf32> to vector<32x16x4xf32>
    %100 = arith.truncf %99 : vector<32x16x4xf32> to vector<32x16x4xbf16>
    %c0_61 = arith.constant 0 : index
    %c1_62 = arith.constant 1 : index
    %c0_63 = arith.constant 0 : index
    %c0_64 = arith.constant 0 : index
    %c0_65 = arith.constant 0 : index
    %101 = vector.load %arg5[%c0_61, %c1_62, %c0_63, %c0_64, %c0_65] : memref<1x2x32x16x4xbf16, #tpu.memory_space<vmem>>, vector<1x1x32x16x4xbf16>
    %102 = vector.shape_cast %101 : vector<1x1x32x16x4xbf16> to vector<32x16x4xbf16>
    %103 = vector.shape_cast %100 : vector<32x16x4xbf16> to vector<1x1x32x16x4xbf16>
    tpu.vector_store %arg5[%c0_61, %c1_62, %c0_63, %c0_64, %c0_65], %103 {strides = array<i32>} : memref<1x2x32x16x4xbf16, #tpu.memory_space<vmem>>, vector<1x1x32x16x4xbf16>,
    return
  }
  func.func @transform_0(%arg0: i32, %arg1: i32) -> (i32, i32, i32, i32) {
    %c0_i32 = arith.constant 0 : i32
    %c0_i32_0 = arith.constant 0 : i32
    %c0_i32_1 = arith.constant 0 : i32
    %c0_i32_2 = arith.constant 0 : i32
    return %arg0, %c0_i32, %c0_i32_0, %c0_i32_1 : i32, i32, i32, i32
  }
  func.func @transform_1(%arg0: i32, %arg1: i32) -> (i32, i32, i32) {
    %c0_i32 = arith.constant 0 : i32
    %c0_i32_0 = arith.constant 0 : i32
    %c0_i32_1 = arith.constant 0 : i32
    %c0_i32_2 = arith.constant 0 : i32
    return %c0_i32, %c0_i32_0, %c0_i32_1 : i32, i32, i32
  }
  func.func @transform_2(%arg0: i32, %arg1: i32) -> (i32, i32) {
    %c0_i32 = arith.constant 0 : i32
    %c0_i32_0 = arith.constant 0 : i32
    %c0_i32_1 = arith.constant 0 : i32
    return %c0_i32, %c0_i32_0 : i32, i32
  }
  func.func @transform_3(%arg0: i32, %arg1: i32) -> (i32, i32, i32, i32, i32) {
    %c0_i32 = arith.constant 0 : i32
    %c0_i32_0 = arith.constant 0 : i32
    %c0_i32_1 = arith.constant 0 : i32
    %c0_i32_2 = arith.constant 0 : i32
    return %arg0, %c0_i32, %arg1, %c0_i32_0, %c0_i32_1 : i32, i32, i32, i32, i32
  }
}

</mosaic_0001>

<llo_original>
// kernel: tpu_custom_call.1
$region0: #{tpu_custom_call.1}
  #allocation0 [shape = 'u32[]', space=smem, size = 0x4, offset = 0x4, fixed_abs, tag = 'smem constant byte address 0x4 - core index']
  #allocation1 [shape = 'u32[144,128]{1,0:T(1,128)}', space=vmem, size = 0x12000, scoped, tag = 'internal scratch']
  #allocation2 [shape = 'bf16[34,16,32]{2,1,0:T(16,128)(2,1)}', space=vmem, size = 0x22000, scoped, tag = 'scratch operand']
  %s0 = inlined_call_operand.hbm [shape: f32[2,16,16,8], index: 0, kind: input, shape index: {}]
  %s1 = inlined_call_operand.hbm [shape: bf16[3,24,4], index: 1, kind: input, shape index: {}]
  %s2 = inlined_call_operand.hbm [shape: f32[1,4], index: 2, kind: input, shape index: {}]
  %s3 = inlined_call_operand.hbm [shape: bf16[2,2,32,16,4], index: 3, kind: output, shape index: {}]
  %s4 = sld [smem:[#allocation0]]
  $region61: #{tpu_custom_call.1} parent=0
    _
  %s6 = ssub.s32 1, %s4
  %s7 = scalar_select 0, %s6, %s4
  $region1: #{tpu_custom_call.1} parent=0
    #allocation3 [shape = 'u8[262144]{0}', space=vmem, size = 0x40000, scoped, tag = 'input window, operand 0']
    #allocation4 [shape = 's32[2]{0}', space=sflag, size = 0x8, scoped, tag = 'scoped memory for tpu_custom_call.1']
    #allocation5 [shape = 's32[2]{0}', space=sflag, size = 0x8, scoped, tag = 'scoped memory for tpu_custom_call.1']
    #allocation6 [shape = 'u8[18432]{0}', space=vmem, size = 0x4800, scoped, tag = 'input window, operand 1, single buffered']
    #allocation7 [shape = 's32[1]{0}', space=sflag, size = 0x4, scoped, tag = 'scoped memory for tpu_custom_call.1']
    #allocation8 [shape = 'u8[512]{0}', space=vmem, size = 0x400, scoped, tag = 'input window, operand 2, single buffered']
    #allocation9 [shape = 'u8[524288]{0}', space=vmem, size = 0x80000, scoped, tag = 'output window, operand 0']
    %8 = vsyncpa [#allocation4], 0
    %s9 = scalar_lea.sflag [#allocation4], 1
    %10 = vsyncpa %s9, 0
    %11 = vsyncpa [#allocation7], 0
    %12 = vsyncpa [#allocation5], 0
    %s13 = scalar_lea.sflag [#allocation5], 1
    %14 = vsyncpa %s13, 0
    loop: start=0, step=1, limit=4
    $region2: #{tpu_custom_call.1} parent=1 // loop_pre_header
      _
    $region3: #{tpu_custom_call.1} parent=1 // loop_header
      %s16 = sphi 0, %s20
      %p17 = scmp.ge.s32.totalorder %s16, 4
      %s23 = sphi 0, %s35
      %s24 = sphi 0, %s31
      %s25 = sphi 0, %s23
      %s26 = sphi 0, %s24
      %s27 = sphi 0, %s25
      %s28 = sphi 0, %s26
      %s38 = sphi 0, %s40
      %s41 = sphi 0, %s38
      %s42 = sphi 0, %s41
      %s58 = sphi 0, %s42
      %s62 = sphi 0, %s62
      %s64 = sphi 0, %s62
      %s65 = sphi 0, %s64
      %s79 = sphi 0, %s65
      %s83 = sphi 0, %s83
      %s85 = sphi 0, %s83
      %s86 = sphi 0, %s85
      %s100 = sphi 0, %s86
      %s108 = sphi 0, %s110
      %s111 = sphi 0, %s108
      %s112 = sphi 0, %s111
      %s128 = sphi 0, %s112
    $region4: #{tpu_custom_call.1} parent=1 // loop_header_branch
      %19 = sbr.rel (%p17) target = $region8
    $region5: #{tpu_custom_call.1} parent=1 // loop_body
      %s21 = ssub.s32 %s16, 1
      %s22 = ssub.s32 %s16, 2
      %s29 = sadd.s32 1, %s24
      %p30 = scmp.ge.s32.totalorder %s29, 1
      %s31 = scalar_select %p30, 0, %s29
      %s32 = sadd.s32 1, %s23
      %s33 = scalar_select %p30, %s32, %s23
      %p34 = scmp.ge.s32.totalorder %s33, 2
      %s35 = scalar_select %p34, 0, %s33
      %s36 = ssub.s32 %s23, %s35
      %p37 = scmp.eq.s32.totalorder %s36, 0
      %s39 = sadd.s32 %s38, 1
      %s40 = scalar_select %p37, %s38, %s39
      %p43 = pneg %p37
      %p44 = scmp.eq.s32.totalorder %s16, 1
      %p45 = por %p43, %p44
      %p46 = scmp.ne.s32.totalorder %s38, %s41
      %p47 = scmp.eq.s32.totalorder %s16, 0
      %p48 = por %p46, %p47
      %p49 = scmp.ne.s32.totalorder %s38, %s41
      %p50 = scmp.eq.s32.totalorder %s21, 1
      %p51 = por %p49, %p50
      %p52 = scmp.ne.s32.totalorder %s41, %s42
      %p53 = scmp.eq.s32.totalorder %s21, 0
      %p54 = por %p52, %p53
      %p55 = scmp.ne.s32.totalorder %s41, %s42
      %p56 = scmp.eq.s32.totalorder %s22, 1
      %p57 = por %p55, %p56
      %p59 = scmp.ne.s32.totalorder %s42, %s58
      %p60 = scmp.eq.s32.totalorder %s22, 0
      %p61 = por %p59, %p60
      %s63 = sadd.s32 %s62, 1
      %p66 = scmp.eq.s32.totalorder %s16, 1
      %p67 = scmp.ne.s32.totalorder %s62, %s64
      %p68 = scmp.eq.s32.totalorder %s16, 0
      %p69 = por %p67, %p68
      %p70 = scmp.ne.s32.totalorder %s62, %s64
      %p71 = scmp.eq.s32.totalorder %s21, 1
      %p72 = por %p70, %p71
      %p73 = scmp.ne.s32.totalorder %s64, %s65
      %p74 = scmp.eq.s32.totalorder %s21, 0
      %p75 = por %p73, %p74
      %p76 = scmp.ne.s32.totalorder %s64, %s65
      %p77 = scmp.eq.s32.totalorder %s22, 1
      %p78 = por %p76, %p77
      %p80 = scmp.ne.s32.totalorder %s65, %s79
      %p81 = scmp.eq.s32.totalorder %s22, 0
      %p82 = por %p80, %p81
      %s84 = sadd.s32 %s83, 1
      %p87 = scmp.eq.s32.totalorder %s16, 1
      %p88 = scmp.ne.s32.totalorder %s83, %s85
      %p89 = scmp.eq.s32.totalorder %s16, 0
      %p90 = por %p88, %p89
      %p91 = scmp.ne.s32.totalorder %s83, %s85
      %p92 = scmp.eq.s32.totalorder %s21, 1
      %p93 = por %p91, %p92
      %p94 = scmp.ne.s32.totalorder %s85, %s86
      %p95 = scmp.eq.s32.totalorder %s21, 0
      %p96 = por %p94, %p95
      %p97 = scmp.ne.s32.totalorder %s85, %s86
      %p98 = scmp.eq.s32.totalorder %s22, 1
      %p99 = por %p97, %p98
      %p101 = scmp.ne.s32.totalorder %s86, %s100
      %p102 = scmp.eq.s32.totalorder %s22, 0
      %p103 = por %p101, %p102
      %s104 = ssub.s32 %s23, %s35
      %s105 = ssub.s32 %s24, %s31
      %s106 = sor.u32 %s104, %s105
      %p107 = scmp.eq.s32.totalorder %s106, 0
      %s109 = sadd.s32 %s108, 1
      %s110 = scalar_select %p107, %s108, %s109
      %p113 = pneg %p107
      %p114 = scmp.eq.s32.totalorder %s16, 1
      %p115 = por %p113, %p114
      %p116 = scmp.ne.s32.totalorder %s108, %s111
      %p117 = scmp.eq.s32.totalorder %s16, 0
      %p118 = por %p116, %p117
      %p119 = scmp.ne.s32.totalorder %s108, %s111
      %p120 = scmp.eq.s32.totalorder %s21, 1
      %p121 = por %p119, %p120
      %p122 = scmp.ne.s32.totalorder %s111, %s112
      %p123 = scmp.eq.s32.totalorder %s21, 0
      %p124 = por %p122, %p123
      %p125 = scmp.ne.s32.totalorder %s111, %s112
      %p126 = scmp.eq.s32.totalorder %s22, 1
      %p127 = por %p125, %p126
      %p129 = scmp.ne.s32.totalorder %s112, %s128
      %p130 = scmp.eq.s32.totalorder %s22, 0
      %p131 = por %p129, %p130
      %p132 = scmp.le.s32.totalorder 1, %s16
      %p133 = scmp.lt.s32.totalorder %s16, 3
      %p134 = pnand %p132, %p133
      %p135 = pneg %p134
      // Predicated region
      $region9: #{tpu_custom_call.1} parent=5 // pred_check
        _
      $region10: #{tpu_custom_call.1} parent=5 // pred_check_branch
        %137 = sbr.rel (%p134) target = $region12
      $region11: #{tpu_custom_call.1} parent=5 // pred_region
        %s138 = ssub.s32 %s16, 1
        // Predicated region
        $region13: #{tpu_custom_call.1} parent=11 // pred_check
          %p139 = pneg %p75
        $region14: #{tpu_custom_call.1} parent=11 // pred_check_branch
          %141 = sbr.rel (%p139) target = $region16
        $region15: #{tpu_custom_call.1} parent=11 // pred_region
          %s143 = ssub.s32 576, 576
          %144 = vsyncadd [#allocation7], %s143
          %s145 = sshll.u32 [#allocation6], 4
          %s146 = int_to_ptr.vmem [resolvable:$true] %s145
          %151 = dma.hbm_to_vmem [thread:$0]  %s1, 576, %s146, [#allocation7], 64, 64, 4
        $region16: #{tpu_custom_call.1} parent=11 // pred_fallthru
          _
        // Predicated region
        $region17: #{tpu_custom_call.1} parent=11 // pred_check
          %p152 = pneg %p96
        $region18: #{tpu_custom_call.1} parent=11 // pred_check_branch
          %154 = sbr.rel (%p152) target = $region20
        $region19: #{tpu_custom_call.1} parent=11 // pred_region
          %s156 = ssub.s32 16, 16
          %157 = vsyncadd [#allocation7], %s156
          %s159 = sshll.u32 [#allocation8], 4
          %s160 = int_to_ptr.vmem [resolvable:$true] %s159
          %162 = dma.hbm_to_vmem [thread:$0]  %s2, 16, %s160, [#allocation7]
        $region20: #{tpu_custom_call.1} parent=11 // pred_fallthru
          _
      $region12: #{tpu_custom_call.1} parent=5 // pred_fallthru
        _
      %p163 = scmp.lt.s32.totalorder %s16, 2
      // Predicated region
      $region21: #{tpu_custom_call.1} parent=5 // pred_check
        %p164 = pneg %p163
      $region22: #{tpu_custom_call.1} parent=5 // pred_check_branch
        %166 = sbr.rel (%p164) target = $region24
      $region23: #{tpu_custom_call.1} parent=5 // pred_region
        // Predicated region
        $region25: #{tpu_custom_call.1} parent=23 // pred_check
          %p167 = pneg %p48
        $region26: #{tpu_custom_call.1} parent=23 // pred_check_branch
          %169 = sbr.rel (%p167) target = $region28
        $region27: #{tpu_custom_call.1} parent=23 // pred_region
          %s170 = sand.u32 %s38, 1
          %s171 = scalar_lea.sflag [#allocation4], %s170
          %s172 = sand.u32 %s38, 1
          %s173 = smul.addr %s172, 256
          %s174 = scalar_lea.vmem [#allocation3], %s173
          %s176 = ssub.s32 4096, 4096
          %177 = vsyncadd %s171, %s176
          %s178 = smul.addr %s23, 32
          %s179 = smul.addr %s178, 128
          %s180 = scalar_lea.hbm %s0, %s179
          %s181 = sshll.u32 %s174, 4
          %s182 = int_to_ptr.vmem [resolvable:$true] %s181
          %187 = dma.hbm_to_vmem [thread:$0]  %s180, 4096, %s182, %s171, 128, 128, 8
        $region28: #{tpu_custom_call.1} parent=23 // pred_fallthru
          _
      $region24: #{tpu_custom_call.1} parent=5 // pred_fallthru
        _
      %p188 = scmp.le.s32.totalorder 1, %s16
      %p189 = scmp.lt.s32.totalorder %s16, 3
      %p190 = pnand %p188, %p189
      %p191 = pneg %p190
      // Predicated region
      $region29: #{tpu_custom_call.1} parent=5 // pred_check
        _
      $region30: #{tpu_custom_call.1} parent=5 // pred_check_branch
        %193 = sbr.rel (%p190) target = $region32
      $region31: #{tpu_custom_call.1} parent=5 // pred_region
        %s194 = ssub.s32 %s16, 1
        %s195 = sand.u32 %s41, 1
        %s196 = scalar_lea.sflag [#allocation4], %s195
        %s197 = sand.u32 %s41, 1
        %s198 = smul.addr %s197, 256
        %s199 = scalar_lea.vmem [#allocation3], %s198
        // Predicated region
        $region33: #{tpu_custom_call.1} parent=31 // pred_check
          %p200 = pneg %p54
        $region34: #{tpu_custom_call.1} parent=31 // pred_check_branch
          %202 = sbr.rel (%p200) target = $region36
        $region35: #{tpu_custom_call.1} parent=31 // pred_region
          %203 = dma.done %s196, 4096
        $region36: #{tpu_custom_call.1} parent=31 // pred_fallthru
          _
        // Predicated region
        $region37: #{tpu_custom_call.1} parent=31 // pred_check
          %p204 = pneg %p75
        $region38: #{tpu_custom_call.1} parent=31 // pred_check_branch
          %206 = sbr.rel (%p204) target = $region40
        $region39: #{tpu_custom_call.1} parent=31 // pred_region
          %207 = dma.done [#allocation7], 576
        $region40: #{tpu_custom_call.1} parent=31 // pred_fallthru
          _
        // Predicated region
        $region41: #{tpu_custom_call.1} parent=31 // pred_check
          %p208 = pneg %p96
        $region42: #{tpu_custom_call.1} parent=31 // pred_check_branch
          %210 = sbr.rel (%p208) target = $region44
        $region43: #{tpu_custom_call.1} parent=31 // pred_region
          %211 = dma.done [#allocation7], 16
        $region44: #{tpu_custom_call.1} parent=31 // pred_fallthru
          _
        %s212 = sand.u32 %s41, 1
        %s213 = scalar_lea.sflag [#allocation4], %s212
        %s214 = sand.u32 %s41, 1
        %s215 = smul.addr %s214, 256
        %s216 = scalar_lea.vmem [#allocation3], %s215
        %p217 = pneg %p54
        %p218 = pneg %p51
        %p219 = pneg %p75
        %p220 = pneg %p72
        %p221 = pneg %p96
        %p222 = pneg %p93
        %p223 = pneg %p124
        %p224 = pneg %p121
        %s225 = sand.u32 %s111, 1
        %s226 = scalar_lea.sflag [#allocation5], %s225
        %s227 = sand.u32 %s111, 1
        %s228 = smul.addr %s227, 512
        %s229 = scalar_lea.vmem [#allocation9], %s228
        %s230 = smul.u32 32, %s26
        %s232 = smul.u32 %s26, 16
        %s233 = smul.u32 %s232, 16
        %s234 = scalar_lea.vmem %s199, %s233 [#allocation3]
        %v235 = vld [vmem:[%s234] sm:$0xff]
        %v236 = vld [vmem:[%s234 + $0x8] sm:$0xff]
        %v237 = vld [vmem:[%s234 + $0x10] sm:$0xff]
        %v238 = vld [vmem:[%s234 + $0x18] sm:$0xff]
        %v239 = vld [vmem:[%s234 + $0x20] sm:$0xff]
        %v240 = vld [vmem:[%s234 + $0x28] sm:$0xff]
        %v241 = vld [vmem:[%s234 + $0x30] sm:$0xff]
        %v242 = vld [vmem:[%s234 + $0x38] sm:$0xff]
        %v243 = vld [vmem:[%s234 + $0x40] sm:$0xff]
        %v244 = vld [vmem:[%s234 + $0x48] sm:$0xff]
        %v245 = vld [vmem:[%s234 + $0x50] sm:$0xff]
        %v246 = vld [vmem:[%s234 + $0x58] sm:$0xff]
        %v247 = vld [vmem:[%s234 + $0x60] sm:$0xff]
        %v248 = vld [vmem:[%s234 + $0x68] sm:$0xff]
        %v249 = vld [vmem:[%s234 + $0x70] sm:$0xff]
        %v250 = vld [vmem:[%s234 + $0x78] sm:$0xff]
        %v251 = vld [vmem:[%s234 + $0x80] sm:$0xff]
        %v252 = vld [vmem:[%s234 + $0x88] sm:$0xff]
        %v253 = vld [vmem:[%s234 + $0x90] sm:$0xff]
        %v254 = vld [vmem:[%s234 + $0x98] sm:$0xff]
        %v255 = vld [vmem:[%s234 + $0xa0] sm:$0xff]
        %v256 = vld [vmem:[%s234 + $0xa8] sm:$0xff]
        %v257 = vld [vmem:[%s234 + $0xb0] sm:$0xff]
        %v258 = vld [vmem:[%s234 + $0xb8] sm:$0xff]
        %v259 = vld [vmem:[%s234 + $0xc0] sm:$0xff]
        %v260 = vld [vmem:[%s234 + $0xc8] sm:$0xff]
        %v261 = vld [vmem:[%s234 + $0xd0] sm:$0xff]
        %v262 = vld [vmem:[%s234 + $0xd8] sm:$0xff]
        %v263 = vld [vmem:[%s234 + $0xe0] sm:$0xff]
        %v264 = vld [vmem:[%s234 + $0xe8] sm:$0xff]
        %v265 = vld [vmem:[%s234 + $0xf0] sm:$0xff]
        %v266 = vld [vmem:[%s234 + $0xf8] sm:$0xff]
        %s267 = ssub.s32 %s232, 1
        %p268 = scmp.gt.s32.totalorder %s267, 0
        %s269 = scalar_select %p268, %s267, 0
        %s270 = smul.u32 %s269, 16
        %s271 = scalar_lea.vmem %s199, %s270 [#allocation3]
        %v272 = vld [vmem:[%s271] sm:$0xff]
        %v273 = vld [vmem:[%s271 + $0x8] sm:$0xff]
        %s274 = sadd.s32 %s232, 16
        %p275 = scmp.lt.s32.totalorder %s274, 15
        %s276 = scalar_select %p275, %s274, 15
        %s277 = smul.u32 %s276, 16
        %s278 = scalar_lea.vmem %s199, %s277 [#allocation3]
        %v279 = vld [vmem:[%s278] sm:$0xff]
        %v280 = vld [vmem:[%s278 + $0x8] sm:$0xff]
        %v281 = vmul.f32 %v272, 0.75
        %v282 = vmul.f32 %v273, 0.75
        %v283 = vmul.f32 %v235, 0.75
        %v284 = vmul.f32 %v236, 0.75
        %v285 = vmul.f32 %v237, 0.75
        %v286 = vmul.f32 %v238, 0.75
        %v287 = vmul.f32 %v239, 0.75
        %v288 = vmul.f32 %v240, 0.75
        %v289 = vmul.f32 %v241, 0.75
        %v290 = vmul.f32 %v242, 0.75
        %v291 = vmul.f32 %v243, 0.75
        %v292 = vmul.f32 %v244, 0.75
        %v293 = vmul.f32 %v245, 0.75
        %v294 = vmul.f32 %v246, 0.75
        %v295 = vmul.f32 %v247, 0.75
        %v296 = vmul.f32 %v248, 0.75
        %v297 = vmul.f32 %v249, 0.75
        %v298 = vmul.f32 %v250, 0.75
        %v299 = vmul.f32 %v251, 0.75
        %v300 = vmul.f32 %v252, 0.75
        %v301 = vmul.f32 %v253, 0.75
        %v302 = vmul.f32 %v254, 0.75
        %v303 = vmul.f32 %v255, 0.75
        %v304 = vmul.f32 %v256, 0.75
        %v305 = vmul.f32 %v257, 0.75
        %v306 = vmul.f32 %v258, 0.75
        %v307 = vmul.f32 %v259, 0.75
        %v308 = vmul.f32 %v260, 0.75
        %v309 = vmul.f32 %v261, 0.75
        %v310 = vmul.f32 %v262, 0.75
        %v311 = vmul.f32 %v263, 0.75
        %v312 = vmul.f32 %v264, 0.75
        %v313 = vmul.f32 %v265, 0.75
        %v314 = vmul.f32 %v266, 0.75
        %v315 = vmul.f32 %v235, 0.25
        %v316 = vmul.f32 %v236, 0.25
        %v317 = vmul.f32 %v237, 0.25
        %v318 = vmul.f32 %v238, 0.25
        %v319 = vmul.f32 %v239, 0.25
        %v320 = vmul.f32 %v240, 0.25
        %v321 = vmul.f32 %v241, 0.25
        %v322 = vmul.f32 %v242, 0.25
        %v323 = vmul.f32 %v243, 0.25
        %v324 = vmul.f32 %v244, 0.25
        %v325 = vmul.f32 %v245, 0.25
        %v326 = vmul.f32 %v246, 0.25
        %v327 = vmul.f32 %v247, 0.25
        %v328 = vmul.f32 %v248, 0.25
        %v329 = vmul.f32 %v249, 0.25
        %v330 = vmul.f32 %v250, 0.25
        %v331 = vmul.f32 %v251, 0.25
        %v332 = vmul.f32 %v252, 0.25
        %v333 = vmul.f32 %v253, 0.25
        %v334 = vmul.f32 %v254, 0.25
        %v335 = vmul.f32 %v255, 0.25
        %v336 = vmul.f32 %v256, 0.25
        %v337 = vmul.f32 %v257, 0.25
        %v338 = vmul.f32 %v258, 0.25
        %v339 = vmul.f32 %v259, 0.25
        %v340 = vmul.f32 %v260, 0.25
        %v341 = vmul.f32 %v261, 0.25
        %v342 = vmul.f32 %v262, 0.25
        %v343 = vmul.f32 %v263, 0.25
        %v344 = vmul.f32 %v264, 0.25
        %v345 = vmul.f32 %v265, 0.25
        %v346 = vmul.f32 %v266, 0.25
        %v347 = vmul.f32 %v279, 0.25
        %v348 = vmul.f32 %v280, 0.25
        %v349 = vadd.f32 %v281, %v315
        %v350 = vadd.f32 %v282, %v316
        %v351 = vadd.f32 %v283, %v317
        %v352 = vadd.f32 %v284, %v318
        %v353 = vadd.f32 %v285, %v319
        %v354 = vadd.f32 %v286, %v320
        %v355 = vadd.f32 %v287, %v321
        %v356 = vadd.f32 %v288, %v322
        %v357 = vadd.f32 %v289, %v323
        %v358 = vadd.f32 %v290, %v324
        %v359 = vadd.f32 %v291, %v325
        %v360 = vadd.f32 %v292, %v326
        %v361 = vadd.f32 %v293, %v327
        %v362 = vadd.f32 %v294, %v328
        %v363 = vadd.f32 %v295, %v329
        %v364 = vadd.f32 %v296, %v330
        %v365 = vadd.f32 %v297, %v331
        %v366 = vadd.f32 %v298, %v332
        %v367 = vadd.f32 %v299, %v333
        %v368 = vadd.f32 %v300, %v334
        %v369 = vadd.f32 %v301, %v335
        %v370 = vadd.f32 %v302, %v336
        %v371 = vadd.f32 %v303, %v337
        %v372 = vadd.f32 %v304, %v338
        %v373 = vadd.f32 %v305, %v339
        %v374 = vadd.f32 %v306, %v340
        %v375 = vadd.f32 %v307, %v341
        %v376 = vadd.f32 %v308, %v342
        %v377 = vadd.f32 %v309, %v343
        %v378 = vadd.f32 %v310, %v344
        %v379 = vadd.f32 %v311, %v345
        %v380 = vadd.f32 %v312, %v346
        %v381 = vadd.f32 %v313, %v347
        %v382 = vadd.f32 %v314, %v348
        %v383 = vmul.f32 %v272, 0.25
        %v384 = vmul.f32 %v273, 0.25
        %v385 = vmul.f32 %v279, 0.75
        %v386 = vmul.f32 %v280, 0.75
        %v387 = vadd.f32 %v383, %v283
        %v388 = vadd.f32 %v384, %v284
        %v389 = vadd.f32 %v315, %v285
        %v390 = vadd.f32 %v316, %v286
        %v391 = vadd.f32 %v317, %v287
        %v392 = vadd.f32 %v318, %v288
        %v393 = vadd.f32 %v319, %v289
        %v394 = vadd.f32 %v320, %v290
        %v395 = vadd.f32 %v321, %v291
        %v396 = vadd.f32 %v322, %v292
        %v397 = vadd.f32 %v323, %v293
        %v398 = vadd.f32 %v324, %v294
        %v399 = vadd.f32 %v325, %v295
        %v400 = vadd.f32 %v326, %v296
        %v401 = vadd.f32 %v327, %v297
        %v402 = vadd.f32 %v328, %v298
        %v403 = vadd.f32 %v329, %v299
        %v404 = vadd.f32 %v330, %v300
        %v405 = vadd.f32 %v331, %v301
        %v406 = vadd.f32 %v332, %v302
        %v407 = vadd.f32 %v333, %v303
        %v408 = vadd.f32 %v334, %v304
        %v409 = vadd.f32 %v335, %v305
        %v410 = vadd.f32 %v336, %v306
        %v411 = vadd.f32 %v337, %v307
        %v412 = vadd.f32 %v338, %v308
        %v413 = vadd.f32 %v339, %v309
        %v414 = vadd.f32 %v340, %v310
        %v415 = vadd.f32 %v341, %v311
        %v416 = vadd.f32 %v342, %v312
        %v417 = vadd.f32 %v343, %v313
        %v418 = vadd.f32 %v344, %v314
        %v419 = vadd.f32 %v345, %v385
        %v420 = vadd.f32 %v346, %v386
        %vm489 = vcmask 1040384
        %v490 = vrot.slane %v349, 7
        %v491 = vrot.slane %v350, 7
        %v492 = vsel %vm489, %v490, %v491
        %v493 = vrot.slane %v387, 7
        %v494 = vrot.slane %v388, 7
        %v495 = vsel %vm489, %v493, %v494
        %v496 = vrot.slane %v351, 7
        %v497 = vrot.slane %v352, 7
        %v498 = vsel %vm489, %v496, %v497
        %v499 = vrot.slane %v389, 7
        %v500 = vrot.slane %v390, 7
        %v501 = vsel %vm489, %v499, %v500
        %v502 = vrot.slane %v353, 7
        %v503 = vrot.slane %v354, 7
        %v504 = vsel %vm489, %v502, %v503
        %v505 = vrot.slane %v391, 7
        %v506 = vrot.slane %v392, 7
        %v507 = vsel %vm489, %v505, %v506
        %v508 = vrot.slane %v355, 7
        %v509 = vrot.slane %v356, 7
        %v510 = vsel %vm489, %v508, %v509
        %v511 = vrot.slane %v393, 7
        %v512 = vrot.slane %v394, 7
        %v513 = vsel %vm489, %v511, %v512
        %v514 = vrot.slane %v357, 7
        %v515 = vrot.slane %v358, 7
        %v516 = vsel %vm489, %v514, %v515
        %v517 = vrot.slane %v395, 7
        %v518 = vrot.slane %v396, 7
        %v519 = vsel %vm489, %v517, %v518
        %v520 = vrot.slane %v359, 7
        %v521 = vrot.slane %v360, 7
        %v522 = vsel %vm489, %v520, %v521
        %v523 = vrot.slane %v397, 7
        %v524 = vrot.slane %v398, 7
        %v525 = vsel %vm489, %v523, %v524
        %v526 = vrot.slane %v361, 7
        %v527 = vrot.slane %v362, 7
        %v528 = vsel %vm489, %v526, %v527
        %v529 = vrot.slane %v399, 7
        %v530 = vrot.slane %v400, 7
        %v531 = vsel %vm489, %v529, %v530
        %v532 = vrot.slane %v363, 7
        %v533 = vrot.slane %v364, 7
        %v534 = vsel %vm489, %v532, %v533
        %v535 = vrot.slane %v401, 7
        %v536 = vrot.slane %v402, 7
        %v537 = vsel %vm489, %v535, %v536
        %v538 = vrot.slane %v365, 7
        %v539 = vrot.slane %v366, 7
        %v540 = vsel %vm489, %v538, %v539
        %v541 = vrot.slane %v403, 7
        %v542 = vrot.slane %v404, 7
        %v543 = vsel %vm489, %v541, %v542
        %v544 = vrot.slane %v367, 7
        %v545 = vrot.slane %v368, 7
        %v546 = vsel %vm489, %v544, %v545
        %v547 = vrot.slane %v405, 7
        %v548 = vrot.slane %v406, 7
        %v549 = vsel %vm489, %v547, %v548
        %v550 = vrot.slane %v369, 7
        %v551 = vrot.slane %v370, 7
        %v552 = vsel %vm489, %v550, %v551
        %v553 = vrot.slane %v407, 7
        %v554 = vrot.slane %v408, 7
        %v555 = vsel %vm489, %v553, %v554
        %v556 = vrot.slane %v371, 7
        %v557 = vrot.slane %v372, 7
        %v558 = vsel %vm489, %v556, %v557
        %v559 = vrot.slane %v409, 7
        %v560 = vrot.slane %v410, 7
        %v561 = vsel %vm489, %v559, %v560
        %v562 = vrot.slane %v373, 7
        %v563 = vrot.slane %v374, 7
        %v564 = vsel %vm489, %v562, %v563
        %v565 = vrot.slane %v411, 7
        %v566 = vrot.slane %v412, 7
        %v567 = vsel %vm489, %v565, %v566
        %v568 = vrot.slane %v375, 7
        %v569 = vrot.slane %v376, 7
        %v570 = vsel %vm489, %v568, %v569
        %v571 = vrot.slane %v413, 7
        %v572 = vrot.slane %v414, 7
        %v573 = vsel %vm489, %v571, %v572
        %v574 = vrot.slane %v377, 7
        %v575 = vrot.slane %v378, 7
        %v576 = vsel %vm489, %v574, %v575
        %v577 = vrot.slane %v415, 7
        %v578 = vrot.slane %v416, 7
        %v579 = vsel %vm489, %v577, %v578
        %v580 = vrot.slane %v379, 7
        %v581 = vrot.slane %v380, 7
        %v582 = vsel %vm489, %v580, %v581
        %v583 = vrot.slane %v417, 7
        %v584 = vrot.slane %v418, 7
        %v585 = vsel %vm489, %v583, %v584
        %v586 = vrot.slane %v381, 7
        %v587 = vrot.slane %v382, 7
        %v588 = vsel %vm489, %v586, %v587
        %v589 = vrot.slane %v419, 7
        %v590 = vrot.slane %v420, 7
        %v591 = vsel %vm489, %v589, %v590
        %v660 = vsel %vm489, %v349, %v490
        %v661 = vsel %vm489, %v387, %v493
        %v662 = vsel %vm489, %v351, %v496
        %v663 = vsel %vm489, %v389, %v499
        %v664 = vsel %vm489, %v353, %v502
        %v665 = vsel %vm489, %v391, %v505
        %v666 = vsel %vm489, %v355, %v508
        %v667 = vsel %vm489, %v393, %v511
        %v668 = vsel %vm489, %v357, %v514
        %v669 = vsel %vm489, %v395, %v517
        %v670 = vsel %vm489, %v359, %v520
        %v671 = vsel %vm489, %v397, %v523
        %v672 = vsel %vm489, %v361, %v526
        %v673 = vsel %vm489, %v399, %v529
        %v674 = vsel %vm489, %v363, %v532
        %v675 = vsel %vm489, %v401, %v535
        %v676 = vsel %vm489, %v365, %v538
        %v677 = vsel %vm489, %v403, %v541
        %v678 = vsel %vm489, %v367, %v544
        %v679 = vsel %vm489, %v405, %v547
        %v680 = vsel %vm489, %v369, %v550
        %v681 = vsel %vm489, %v407, %v553
        %v682 = vsel %vm489, %v371, %v556
        %v683 = vsel %vm489, %v409, %v559
        %v684 = vsel %vm489, %v373, %v562
        %v685 = vsel %vm489, %v411, %v565
        %v686 = vsel %vm489, %v375, %v568
        %v687 = vsel %vm489, %v413, %v571
        %v688 = vsel %vm489, %v377, %v574
        %v689 = vsel %vm489, %v415, %v577
        %v690 = vsel %vm489, %v379, %v580
        %v691 = vsel %vm489, %v417, %v583
        %v692 = vsel %vm489, %v381, %v586
        %v693 = vsel %vm489, %v419, %v589
        %vm694 = vcmask 1046528
        %v695 = vrot.slane %v349, 1
        %v696 = vrot.slane %v350, 1
        %v697 = vsel %vm694, %v695, %v696
        %v698 = vrot.slane %v387, 1
        %v699 = vrot.slane %v388, 1
        %v700 = vsel %vm694, %v698, %v699
        %v701 = vrot.slane %v351, 1
        %v702 = vrot.slane %v352, 1
        %v703 = vsel %vm694, %v701, %v702
        %v704 = vrot.slane %v389, 1
        %v705 = vrot.slane %v390, 1
        %v706 = vsel %vm694, %v704, %v705
        %v707 = vrot.slane %v353, 1
        %v708 = vrot.slane %v354, 1
        %v709 = vsel %vm694, %v707, %v708
        %v710 = vrot.slane %v391, 1
        %v711 = vrot.slane %v392, 1
        %v712 = vsel %vm694, %v710, %v711
        %v713 = vrot.slane %v355, 1
        %v714 = vrot.slane %v356, 1
        %v715 = vsel %vm694, %v713, %v714
        %v716 = vrot.slane %v393, 1
        %v717 = vrot.slane %v394, 1
        %v718 = vsel %vm694, %v716, %v717
        %v719 = vrot.slane %v357, 1
        %v720 = vrot.slane %v358, 1
        %v721 = vsel %vm694, %v719, %v720
        %v722 = vrot.slane %v395, 1
        %v723 = vrot.slane %v396, 1
        %v724 = vsel %vm694, %v722, %v723
        %v725 = vrot.slane %v359, 1
        %v726 = vrot.slane %v360, 1
        %v727 = vsel %vm694, %v725, %v726
        %v728 = vrot.slane %v397, 1
        %v729 = vrot.slane %v398, 1
        %v730 = vsel %vm694, %v728, %v729
        %v731 = vrot.slane %v361, 1
        %v732 = vrot.slane %v362, 1
        %v733 = vsel %vm694, %v731, %v732
        %v734 = vrot.slane %v399, 1
        %v735 = vrot.slane %v400, 1
        %v736 = vsel %vm694, %v734, %v735
        %v737 = vrot.slane %v363, 1
        %v738 = vrot.slane %v364, 1
        %v739 = vsel %vm694, %v737, %v738
        %v740 = vrot.slane %v401, 1
        %v741 = vrot.slane %v402, 1
        %v742 = vsel %vm694, %v740, %v741
        %v743 = vrot.slane %v365, 1
        %v744 = vrot.slane %v366, 1
        %v745 = vsel %vm694, %v743, %v744
        %v746 = vrot.slane %v403, 1
        %v747 = vrot.slane %v404, 1
        %v748 = vsel %vm694, %v746, %v747
        %v749 = vrot.slane %v367, 1
        %v750 = vrot.slane %v368, 1
        %v751 = vsel %vm694, %v749, %v750
        %v752 = vrot.slane %v405, 1
        %v753 = vrot.slane %v406, 1
        %v754 = vsel %vm694, %v752, %v753
        %v755 = vrot.slane %v369, 1
        %v756 = vrot.slane %v370, 1
        %v757 = vsel %vm694, %v755, %v756
        %v758 = vrot.slane %v407, 1
        %v759 = vrot.slane %v408, 1
        %v760 = vsel %vm694, %v758, %v759
        %v761 = vrot.slane %v371, 1
        %v762 = vrot.slane %v372, 1
        %v763 = vsel %vm694, %v761, %v762
        %v764 = vrot.slane %v409, 1
        %v765 = vrot.slane %v410, 1
        %v766 = vsel %vm694, %v764, %v765
        %v767 = vrot.slane %v373, 1
        %v768 = vrot.slane %v374, 1
        %v769 = vsel %vm694, %v767, %v768
        %v770 = vrot.slane %v411, 1
        %v771 = vrot.slane %v412, 1
        %v772 = vsel %vm694, %v770, %v771
        %v773 = vrot.slane %v375, 1
        %v774 = vrot.slane %v376, 1
        %v775 = vsel %vm694, %v773, %v774
        %v776 = vrot.slane %v413, 1
        %v777 = vrot.slane %v414, 1
        %v778 = vsel %vm694, %v776, %v777
        %v779 = vrot.slane %v377, 1
        %v780 = vrot.slane %v378, 1
        %v781 = vsel %vm694, %v779, %v780
        %v782 = vrot.slane %v415, 1
        %v783 = vrot.slane %v416, 1
        %v784 = vsel %vm694, %v782, %v783
        %v785 = vrot.slane %v379, 1
        %v786 = vrot.slane %v380, 1
        %v787 = vsel %vm694, %v785, %v786
        %v788 = vrot.slane %v417, 1
        %v789 = vrot.slane %v418, 1
        %v790 = vsel %vm694, %v788, %v789
        %v791 = vrot.slane %v381, 1
        %v792 = vrot.slane %v382, 1
        %v793 = vsel %vm694, %v791, %v792
        %v794 = vrot.slane %v419, 1
        %v795 = vrot.slane %v420, 1
        %v796 = vsel %vm694, %v794, %v795
        %v865 = vsel %vm694, %v696, %v350
        %v866 = vsel %vm694, %v699, %v388
        %v867 = vsel %vm694, %v702, %v352
        %v868 = vsel %vm694, %v705, %v390
        %v869 = vsel %vm694, %v708, %v354
        %v870 = vsel %vm694, %v711, %v392
        %v871 = vsel %vm694, %v714, %v356
        %v872 = vsel %vm694, %v717, %v394
        %v873 = vsel %vm694, %v720, %v358
        %v874 = vsel %vm694, %v723, %v396
        %v875 = vsel %vm694, %v726, %v360
        %v876 = vsel %vm694, %v729, %v398
        %v877 = vsel %vm694, %v732, %v362
        %v878 = vsel %vm694, %v735, %v400
        %v879 = vsel %vm694, %v738, %v364
        %v880 = vsel %vm694, %v741, %v402
        %v881 = vsel %vm694, %v744, %v366
        %v882 = vsel %vm694, %v747, %v404
        %v883 = vsel %vm694, %v750, %v368
        %v884 = vsel %vm694, %v753, %v406
        %v885 = vsel %vm694, %v756, %v370
        %v886 = vsel %vm694, %v759, %v408
        %v887 = vsel %vm694, %v762, %v372
        %v888 = vsel %vm694, %v765, %v410
        %v889 = vsel %vm694, %v768, %v374
        %v890 = vsel %vm694, %v771, %v412
        %v891 = vsel %vm694, %v774, %v376
        %v892 = vsel %vm694, %v777, %v414
        %v893 = vsel %vm694, %v780, %v378
        %v894 = vsel %vm694, %v783, %v416
        %v895 = vsel %vm694, %v786, %v380
        %v896 = vsel %vm694, %v789, %v418
        %v897 = vsel %vm694, %v792, %v382
        %v898 = vsel %vm694, %v795, %v420
        %v899 = vmul.f32 %v660, 0.25
        %v900 = vmul.f32 %v492, 0.25
        %v901 = vmul.f32 %v661, 0.25
        %v902 = vmul.f32 %v495, 0.25
        %v903 = vmul.f32 %v662, 0.25
        %v904 = vmul.f32 %v498, 0.25
        %v905 = vmul.f32 %v663, 0.25
        %v906 = vmul.f32 %v501, 0.25
        %v907 = vmul.f32 %v664, 0.25
        %v908 = vmul.f32 %v504, 0.25
        %v909 = vmul.f32 %v665, 0.25
        %v910 = vmul.f32 %v507, 0.25
        %v911 = vmul.f32 %v666, 0.25
        %v912 = vmul.f32 %v510, 0.25
        %v913 = vmul.f32 %v667, 0.25
        %v914 = vmul.f32 %v513, 0.25
        %v915 = vmul.f32 %v668, 0.25
        %v916 = vmul.f32 %v516, 0.25
        %v917 = vmul.f32 %v669, 0.25
        %v918 = vmul.f32 %v519, 0.25
        %v919 = vmul.f32 %v670, 0.25
        %v920 = vmul.f32 %v522, 0.25
        %v921 = vmul.f32 %v671, 0.25
        %v922 = vmul.f32 %v525, 0.25
        %v923 = vmul.f32 %v672, 0.25
        %v924 = vmul.f32 %v528, 0.25
        %v925 = vmul.f32 %v673, 0.25
        %v926 = vmul.f32 %v531, 0.25
        %v927 = vmul.f32 %v674, 0.25
        %v928 = vmul.f32 %v534, 0.25
        %v929 = vmul.f32 %v675, 0.25
        %v930 = vmul.f32 %v537, 0.25
        %v931 = vmul.f32 %v676, 0.25
        %v932 = vmul.f32 %v540, 0.25
        %v933 = vmul.f32 %v677, 0.25
        %v934 = vmul.f32 %v543, 0.25
        %v935 = vmul.f32 %v678, 0.25
        %v936 = vmul.f32 %v546, 0.25
        %v937 = vmul.f32 %v679, 0.25
        %v938 = vmul.f32 %v549, 0.25
        %v939 = vmul.f32 %v680, 0.25
        %v940 = vmul.f32 %v552, 0.25
        %v941 = vmul.f32 %v681, 0.25
        %v942 = vmul.f32 %v555, 0.25
        %v943 = vmul.f32 %v682, 0.25
        %v944 = vmul.f32 %v558, 0.25
        %v945 = vmul.f32 %v683, 0.25
        %v946 = vmul.f32 %v561, 0.25
        %v947 = vmul.f32 %v684, 0.25
        %v948 = vmul.f32 %v564, 0.25
        %v949 = vmul.f32 %v685, 0.25
        %v950 = vmul.f32 %v567, 0.25
        %v951 = vmul.f32 %v686, 0.25
        %v952 = vmul.f32 %v570, 0.25
        %v953 = vmul.f32 %v687, 0.25
        %v954 = vmul.f32 %v573, 0.25
        %v955 = vmul.f32 %v688, 0.25
        %v956 = vmul.f32 %v576, 0.25
        %v957 = vmul.f32 %v689, 0.25
        %v958 = vmul.f32 %v579, 0.25
        %v959 = vmul.f32 %v690, 0.25
        %v960 = vmul.f32 %v582, 0.25
        %v961 = vmul.f32 %v691, 0.25
        %v962 = vmul.f32 %v585, 0.25
        %v963 = vmul.f32 %v692, 0.25
        %v964 = vmul.f32 %v588, 0.25
        %v965 = vmul.f32 %v693, 0.25
        %v966 = vmul.f32 %v591, 0.25
        %v967 = vmul.f32 %v349, 0.75
        %v968 = vmul.f32 %v350, 0.75
        %v969 = vmul.f32 %v387, 0.75
        %v970 = vmul.f32 %v388, 0.75
        %v971 = vmul.f32 %v351, 0.75
        %v972 = vmul.f32 %v352, 0.75
        %v973 = vmul.f32 %v389, 0.75
        %v974 = vmul.f32 %v390, 0.75
        %v975 = vmul.f32 %v353, 0.75
        %v976 = vmul.f32 %v354, 0.75
        %v977 = vmul.f32 %v391, 0.75
        %v978 = vmul.f32 %v392, 0.75
        %v979 = vmul.f32 %v355, 0.75
        %v980 = vmul.f32 %v356, 0.75
        %v981 = vmul.f32 %v393, 0.75
        %v982 = vmul.f32 %v394, 0.75
        %v983 = vmul.f32 %v357, 0.75
        %v984 = vmul.f32 %v358, 0.75
        %v985 = vmul.f32 %v395, 0.75
        %v986 = vmul.f32 %v396, 0.75
        %v987 = vmul.f32 %v359, 0.75
        %v988 = vmul.f32 %v360, 0.75
        %v989 = vmul.f32 %v397, 0.75
        %v990 = vmul.f32 %v398, 0.75
        %v991 = vmul.f32 %v361, 0.75
        %v992 = vmul.f32 %v362, 0.75
        %v993 = vmul.f32 %v399, 0.75
        %v994 = vmul.f32 %v400, 0.75
        %v995 = vmul.f32 %v363, 0.75
        %v996 = vmul.f32 %v364, 0.75
        %v997 = vmul.f32 %v401, 0.75
        %v998 = vmul.f32 %v402, 0.75
        %v999 = vmul.f32 %v365, 0.75
        %v1000 = vmul.f32 %v366, 0.75
        %v1001 = vmul.f32 %v403, 0.75
        %v1002 = vmul.f32 %v404, 0.75
        %v1003 = vmul.f32 %v367, 0.75
        %v1004 = vmul.f32 %v368, 0.75
        %v1005 = vmul.f32 %v405, 0.75
        %v1006 = vmul.f32 %v406, 0.75
        %v1007 = vmul.f32 %v369, 0.75
        %v1008 = vmul.f32 %v370, 0.75
        %v1009 = vmul.f32 %v407, 0.75
        %v1010 = vmul.f32 %v408, 0.75
        %v1011 = vmul.f32 %v371, 0.75
        %v1012 = vmul.f32 %v372, 0.75
        %v1013 = vmul.f32 %v409, 0.75
        %v1014 = vmul.f32 %v410, 0.75
        %v1015 = vmul.f32 %v373, 0.75
        %v1016 = vmul.f32 %v374, 0.75
        %v1017 = vmul.f32 %v411, 0.75
        %v1018 = vmul.f32 %v412, 0.75
        %v1019 = vmul.f32 %v375, 0.75
        %v1020 = vmul.f32 %v376, 0.75
        %v1021 = vmul.f32 %v413, 0.75
        %v1022 = vmul.f32 %v414, 0.75
        %v1023 = vmul.f32 %v377, 0.75
        %v1024 = vmul.f32 %v378, 0.75
        %v1025 = vmul.f32 %v415, 0.75
        %v1026 = vmul.f32 %v416, 0.75
        %v1027 = vmul.f32 %v379, 0.75
        %v1028 = vmul.f32 %v380, 0.75
        %v1029 = vmul.f32 %v417, 0.75
        %v1030 = vmul.f32 %v418, 0.75
        %v1031 = vmul.f32 %v381, 0.75
        %v1032 = vmul.f32 %v382, 0.75
        %v1033 = vmul.f32 %v419, 0.75
        %v1034 = vmul.f32 %v420, 0.75
        %v1035 = vadd.f32 %v899, %v967
        %v1036 = vadd.f32 %v900, %v968
        %v1037 = vadd.f32 %v901, %v969
        %v1038 = vadd.f32 %v902, %v970
        %v1039 = vadd.f32 %v903, %v971
        %v1040 = vadd.f32 %v904, %v972
        %v1041 = vadd.f32 %v905, %v973
        %v1042 = vadd.f32 %v906, %v974
        %v1043 = vadd.f32 %v907, %v975
        %v1044 = vadd.f32 %v908, %v976
        %v1045 = vadd.f32 %v909, %v977
        %v1046 = vadd.f32 %v910, %v978
        %v1047 = vadd.f32 %v911, %v979
        %v1048 = vadd.f32 %v912, %v980
        %v1049 = vadd.f32 %v913, %v981
        %v1050 = vadd.f32 %v914, %v982
        %v1051 = vadd.f32 %v915, %v983
        %v1052 = vadd.f32 %v916, %v984
        %v1053 = vadd.f32 %v917, %v985
        %v1054 = vadd.f32 %v918, %v986
        %v1055 = vadd.f32 %v919, %v987
        %v1056 = vadd.f32 %v920, %v988
        %v1057 = vadd.f32 %v921, %v989
        %v1058 = vadd.f32 %v922, %v990
        %v1059 = vadd.f32 %v923, %v991
        %v1060 = vadd.f32 %v924, %v992
        %v1061 = vadd.f32 %v925, %v993
        %v1062 = vadd.f32 %v926, %v994
        %v1063 = vadd.f32 %v927, %v995
        %v1064 = vadd.f32 %v928, %v996
        %v1065 = vadd.f32 %v929, %v997
        %v1066 = vadd.f32 %v930, %v998
        %v1067 = vadd.f32 %v931, %v999
        %v1068 = vadd.f32 %v932, %v1000
        %v1069 = vadd.f32 %v933, %v1001
        %v1070 = vadd.f32 %v934, %v1002
        %v1071 = vadd.f32 %v935, %v1003
        %v1072 = vadd.f32 %v936, %v1004
        %v1073 = vadd.f32 %v937, %v1005
        %v1074 = vadd.f32 %v938, %v1006
        %v1075 = vadd.f32 %v939, %v1007
        %v1076 = vadd.f32 %v940, %v1008
        %v1077 = vadd.f32 %v941, %v1009
        %v1078 = vadd.f32 %v942, %v1010
        %v1079 = vadd.f32 %v943, %v1011
        %v1080 = vadd.f32 %v944, %v1012
        %v1081 = vadd.f32 %v945, %v1013
        %v1082 = vadd.f32 %v946, %v1014
        %v1083 = vadd.f32 %v947, %v1015
        %v1084 = vadd.f32 %v948, %v1016
        %v1085 = vadd.f32 %v949, %v1017
        %v1086 = vadd.f32 %v950, %v1018
        %v1087 = vadd.f32 %v951, %v1019
        %v1088 = vadd.f32 %v952, %v1020
        %v1089 = vadd.f32 %v953, %v1021
        %v1090 = vadd.f32 %v954, %v1022
        %v1091 = vadd.f32 %v955, %v1023
        %v1092 = vadd.f32 %v956, %v1024
        %v1093 = vadd.f32 %v957, %v1025
        %v1094 = vadd.f32 %v958, %v1026
        %v1095 = vadd.f32 %v959, %v1027
        %v1096 = vadd.f32 %v960, %v1028
        %v1097 = vadd.f32 %v961, %v1029
        %v1098 = vadd.f32 %v962, %v1030
        %v1099 = vadd.f32 %v963, %v1031
        %v1100 = vadd.f32 %v964, %v1032
        %v1101 = vadd.f32 %v965, %v1033
        %v1102 = vadd.f32 %v966, %v1034
        %v1103 = vmul.f32 %v697, 0.25
        %v1104 = vmul.f32 %v865, 0.25
        %v1105 = vmul.f32 %v700, 0.25
        %v1106 = vmul.f32 %v866, 0.25
        %v1107 = vmul.f32 %v703, 0.25
        %v1108 = vmul.f32 %v867, 0.25
        %v1109 = vmul.f32 %v706, 0.25
        %v1110 = vmul.f32 %v868, 0.25
        %v1111 = vmul.f32 %v709, 0.25
        %v1112 = vmul.f32 %v869, 0.25
        %v1113 = vmul.f32 %v712, 0.25
        %v1114 = vmul.f32 %v870, 0.25
        %v1115 = vmul.f32 %v715, 0.25
        %v1116 = vmul.f32 %v871, 0.25
        %v1117 = vmul.f32 %v718, 0.25
        %v1118 = vmul.f32 %v872, 0.25
        %v1119 = vmul.f32 %v721, 0.25
        %v1120 = vmul.f32 %v873, 0.25
        %v1121 = vmul.f32 %v724, 0.25
        %v1122 = vmul.f32 %v874, 0.25
        %v1123 = vmul.f32 %v727, 0.25
        %v1124 = vmul.f32 %v875, 0.25
        %v1125 = vmul.f32 %v730, 0.25
        %v1126 = vmul.f32 %v876, 0.25
        %v1127 = vmul.f32 %v733, 0.25
        %v1128 = vmul.f32 %v877, 0.25
        %v1129 = vmul.f32 %v736, 0.25
        %v1130 = vmul.f32 %v878, 0.25
        %v1131 = vmul.f32 %v739, 0.25
        %v1132 = vmul.f32 %v879, 0.25
        %v1133 = vmul.f32 %v742, 0.25
        %v1134 = vmul.f32 %v880, 0.25
        %v1135 = vmul.f32 %v745, 0.25
        %v1136 = vmul.f32 %v881, 0.25
        %v1137 = vmul.f32 %v748, 0.25
        %v1138 = vmul.f32 %v882, 0.25
        %v1139 = vmul.f32 %v751, 0.25
        %v1140 = vmul.f32 %v883, 0.25
        %v1141 = vmul.f32 %v754, 0.25
        %v1142 = vmul.f32 %v884, 0.25
        %v1143 = vmul.f32 %v757, 0.25
        %v1144 = vmul.f32 %v885, 0.25
        %v1145 = vmul.f32 %v760, 0.25
        %v1146 = vmul.f32 %v886, 0.25
        %v1147 = vmul.f32 %v763, 0.25
        %v1148 = vmul.f32 %v887, 0.25
        %v1149 = vmul.f32 %v766, 0.25
        %v1150 = vmul.f32 %v888, 0.25
        %v1151 = vmul.f32 %v769, 0.25
        %v1152 = vmul.f32 %v889, 0.25
        %v1153 = vmul.f32 %v772, 0.25
        %v1154 = vmul.f32 %v890, 0.25
        %v1155 = vmul.f32 %v775, 0.25
        %v1156 = vmul.f32 %v891, 0.25
        %v1157 = vmul.f32 %v778, 0.25
        %v1158 = vmul.f32 %v892, 0.25
        %v1159 = vmul.f32 %v781, 0.25
        %v1160 = vmul.f32 %v893, 0.25
        %v1161 = vmul.f32 %v784, 0.25
        %v1162 = vmul.f32 %v894, 0.25
        %v1163 = vmul.f32 %v787, 0.25
        %v1164 = vmul.f32 %v895, 0.25
        %v1165 = vmul.f32 %v790, 0.25
        %v1166 = vmul.f32 %v896, 0.25
        %v1167 = vmul.f32 %v793, 0.25
        %v1168 = vmul.f32 %v897, 0.25
        %v1169 = vmul.f32 %v796, 0.25
        %v1170 = vmul.f32 %v898, 0.25
        %v1171 = vadd.f32 %v967, %v1103
        %v1172 = vadd.f32 %v968, %v1104
        %v1173 = vadd.f32 %v969, %v1105
        %v1174 = vadd.f32 %v970, %v1106
        %v1175 = vadd.f32 %v971, %v1107
        %v1176 = vadd.f32 %v972, %v1108
        %v1177 = vadd.f32 %v973, %v1109
        %v1178 = vadd.f32 %v974, %v1110
        %v1179 = vadd.f32 %v975, %v1111
        %v1180 = vadd.f32 %v976, %v1112
        %v1181 = vadd.f32 %v977, %v1113
        %v1182 = vadd.f32 %v978, %v1114
        %v1183 = vadd.f32 %v979, %v1115
        %v1184 = vadd.f32 %v980, %v1116
        %v1185 = vadd.f32 %v981, %v1117
        %v1186 = vadd.f32 %v982, %v1118
        %v1187 = vadd.f32 %v983, %v1119
        %v1188 = vadd.f32 %v984, %v1120
        %v1189 = vadd.f32 %v985, %v1121
        %v1190 = vadd.f32 %v986, %v1122
        %v1191 = vadd.f32 %v987, %v1123
        %v1192 = vadd.f32 %v988, %v1124
        %v1193 = vadd.f32 %v989, %v1125
        %v1194 = vadd.f32 %v990, %v1126
        %v1195 = vadd.f32 %v991, %v1127
        %v1196 = vadd.f32 %v992, %v1128
        %v1197 = vadd.f32 %v993, %v1129
        %v1198 = vadd.f32 %v994, %v1130
        %v1199 = vadd.f32 %v995, %v1131
        %v1200 = vadd.f32 %v996, %v1132
        %v1201 = vadd.f32 %v997, %v1133
        %v1202 = vadd.f32 %v998, %v1134
        %v1203 = vadd.f32 %v999, %v1135
        %v1204 = vadd.f32 %v1000, %v1136
        %v1205 = vadd.f32 %v1001, %v1137
        %v1206 = vadd.f32 %v1002, %v1138
        %v1207 = vadd.f32 %v1003, %v1139
        %v1208 = vadd.f32 %v1004, %v1140
        %v1209 = vadd.f32 %v1005, %v1141
        %v1210 = vadd.f32 %v1006, %v1142
        %v1211 = vadd.f32 %v1007, %v1143
        %v1212 = vadd.f32 %v1008, %v1144
        %v1213 = vadd.f32 %v1009, %v1145
        %v1214 = vadd.f32 %v1010, %v1146
        %v1215 = vadd.f32 %v1011, %v1147
        %v1216 = vadd.f32 %v1012, %v1148
        %v1217 = vadd.f32 %v1013, %v1149
        %v1218 = vadd.f32 %v1014, %v1150
        %v1219 = vadd.f32 %v1015, %v1151
        %v1220 = vadd.f32 %v1016, %v1152
        %v1221 = vadd.f32 %v1017, %v1153
        %v1222 = vadd.f32 %v1018, %v1154
        %v1223 = vadd.f32 %v1019, %v1155
        %v1224 = vadd.f32 %v1020, %v1156
        %v1225 = vadd.f32 %v1021, %v1157
        %v1226 = vadd.f32 %v1022, %v1158
        %v1227 = vadd.f32 %v1023, %v1159
        %v1228 = vadd.f32 %v1024, %v1160
        %v1229 = vadd.f32 %v1025, %v1161
        %v1230 = vadd.f32 %v1026, %v1162
        %v1231 = vadd.f32 %v1027, %v1163
        %v1232 = vadd.f32 %v1028, %v1164
        %v1233 = vadd.f32 %v1029, %v1165
        %v1234 = vadd.f32 %v1030, %v1166
        %v1235 = vadd.f32 %v1031, %v1167
        %v1236 = vadd.f32 %v1032, %v1168
        %v1237 = vadd.f32 %v1033, %v1169
        %v1238 = vadd.f32 %v1034, %v1170
        %v1307 = vrot.slane %v1171, 7
        %v1308 = vrot.slane %v1172, 7
        %v1309 = vsel %vm489, %v1307, %v1308
        %v1310 = vrot.slane %v1173, 7
        %v1311 = vrot.slane %v1174, 7
        %v1312 = vsel %vm489, %v1310, %v1311
        %v1313 = vrot.slane %v1175, 7
        %v1314 = vrot.slane %v1176, 7
        %v1315 = vsel %vm489, %v1313, %v1314
        %v1316 = vrot.slane %v1177, 7
        %v1317 = vrot.slane %v1178, 7
        %v1318 = vsel %vm489, %v1316, %v1317
        %v1319 = vrot.slane %v1179, 7
        %v1320 = vrot.slane %v1180, 7
        %v1321 = vsel %vm489, %v1319, %v1320
        %v1322 = vrot.slane %v1181, 7
        %v1323 = vrot.slane %v1182, 7
        %v1324 = vsel %vm489, %v1322, %v1323
        %v1325 = vrot.slane %v1183, 7
        %v1326 = vrot.slane %v1184, 7
        %v1327 = vsel %vm489, %v1325, %v1326
        %v1328 = vrot.slane %v1185, 7
        %v1329 = vrot.slane %v1186, 7
        %v1330 = vsel %vm489, %v1328, %v1329
        %v1331 = vrot.slane %v1187, 7
        %v1332 = vrot.slane %v1188, 7
        %v1333 = vsel %vm489, %v1331, %v1332
        %v1334 = vrot.slane %v1189, 7
        %v1335 = vrot.slane %v1190, 7
        %v1336 = vsel %vm489, %v1334, %v1335
        %v1337 = vrot.slane %v1191, 7
        %v1338 = vrot.slane %v1192, 7
        %v1339 = vsel %vm489, %v1337, %v1338
        %v1340 = vrot.slane %v1193, 7
        %v1341 = vrot.slane %v1194, 7
        %v1342 = vsel %vm489, %v1340, %v1341
        %v1343 = vrot.slane %v1195, 7
        %v1344 = vrot.slane %v1196, 7
        %v1345 = vsel %vm489, %v1343, %v1344
        %v1346 = vrot.slane %v1197, 7
        %v1347 = vrot.slane %v1198, 7
        %v1348 = vsel %vm489, %v1346, %v1347
        %v1349 = vrot.slane %v1199, 7
        %v1350 = vrot.slane %v1200, 7
        %v1351 = vsel %vm489, %v1349, %v1350
        %v1352 = vrot.slane %v1201, 7
        %v1353 = vrot.slane %v1202, 7
        %v1354 = vsel %vm489, %v1352, %v1353
        %v1355 = vrot.slane %v1203, 7
        %v1356 = vrot.slane %v1204, 7
        %v1357 = vsel %vm489, %v1355, %v1356
        %v1358 = vrot.slane %v1205, 7
        %v1359 = vrot.slane %v1206, 7
        %v1360 = vsel %vm489, %v1358, %v1359
        %v1361 = vrot.slane %v1207, 7
        %v1362 = vrot.slane %v1208, 7
        %v1363 = vsel %vm489, %v1361, %v1362
        %v1364 = vrot.slane %v1209, 7
        %v1365 = vrot.slane %v1210, 7
        %v1366 = vsel %vm489, %v1364, %v1365
        %v1367 = vrot.slane %v1211, 7
        %v1368 = vrot.slane %v1212, 7
        %v1369 = vsel %vm489, %v1367, %v1368
        %v1370 = vrot.slane %v1213, 7
        %v1371 = vrot.slane %v1214, 7
        %v1372 = vsel %vm489, %v1370, %v1371
        %v1373 = vrot.slane %v1215, 7
        %v1374 = vrot.slane %v1216, 7
        %v1375 = vsel %vm489, %v1373, %v1374
        %v1376 = vrot.slane %v1217, 7
        %v1377 = vrot.slane %v1218, 7
        %v1378 = vsel %vm489, %v1376, %v1377
        %v1379 = vrot.slane %v1219, 7
        %v1380 = vrot.slane %v1220, 7
        %v1381 = vsel %vm489, %v1379, %v1380
        %v1382 = vrot.slane %v1221, 7
        %v1383 = vrot.slane %v1222, 7
        %v1384 = vsel %vm489, %v1382, %v1383
        %v1385 = vrot.slane %v1223, 7
        %v1386 = vrot.slane %v1224, 7
        %v1387 = vsel %vm489, %v1385, %v1386
        %v1388 = vrot.slane %v1225, 7
        %v1389 = vrot.slane %v1226, 7
        %v1390 = vsel %vm489, %v1388, %v1389
        %v1391 = vrot.slane %v1227, 7
        %v1392 = vrot.slane %v1228, 7
        %v1393 = vsel %vm489, %v1391, %v1392
        %v1394 = vrot.slane %v1229, 7
        %v1395 = vrot.slane %v1230, 7
        %v1396 = vsel %vm489, %v1394, %v1395
        %v1397 = vrot.slane %v1231, 7
        %v1398 = vrot.slane %v1232, 7
        %v1399 = vsel %vm489, %v1397, %v1398
        %v1400 = vrot.slane %v1233, 7
        %v1401 = vrot.slane %v1234, 7
        %v1402 = vsel %vm489, %v1400, %v1401
        %v1403 = vrot.slane %v1235, 7
        %v1404 = vrot.slane %v1236, 7
        %v1405 = vsel %vm489, %v1403, %v1404
        %v1406 = vrot.slane %v1237, 7
        %v1407 = vrot.slane %v1238, 7
        %v1408 = vsel %vm489, %v1406, %v1407
        %v1477 = vsel %vm489, 0.0, %v1307
        %v1478 = vsel %vm489, 0.0, %v1310
        %v1479 = vsel %vm489, 0.0, %v1313
        %v1480 = vsel %vm489, 0.0, %v1316
        %v1481 = vsel %vm489, 0.0, %v1319
        %v1482 = vsel %vm489, 0.0, %v1322
        %v1483 = vsel %vm489, 0.0, %v1325
        %v1484 = vsel %vm489, 0.0, %v1328
        %v1485 = vsel %vm489, 0.0, %v1331
        %v1486 = vsel %vm489, 0.0, %v1334
        %v1487 = vsel %vm489, 0.0, %v1337
        %v1488 = vsel %vm489, 0.0, %v1340
        %v1489 = vsel %vm489, 0.0, %v1343
        %v1490 = vsel %vm489, 0.0, %v1346
        %v1491 = vsel %vm489, 0.0, %v1349
        %v1492 = vsel %vm489, 0.0, %v1352
        %v1493 = vsel %vm489, 0.0, %v1355
        %v1494 = vsel %vm489, 0.0, %v1358
        %v1495 = vsel %vm489, 0.0, %v1361
        %v1496 = vsel %vm489, 0.0, %v1364
        %v1497 = vsel %vm489, 0.0, %v1367
        %v1498 = vsel %vm489, 0.0, %v1370
        %v1499 = vsel %vm489, 0.0, %v1373
        %v1500 = vsel %vm489, 0.0, %v1376
        %v1501 = vsel %vm489, 0.0, %v1379
        %v1502 = vsel %vm489, 0.0, %v1382
        %v1503 = vsel %vm489, 0.0, %v1385
        %v1504 = vsel %vm489, 0.0, %v1388
        %v1505 = vsel %vm489, 0.0, %v1391
        %v1506 = vsel %vm489, 0.0, %v1394
        %v1507 = vsel %vm489, 0.0, %v1397
        %v1508 = vsel %vm489, 0.0, %v1400
        %v1509 = vsel %vm489, 0.0, %v1403
        %v1510 = vsel %vm489, 0.0, %v1406
        %v1579 = vrot.slane %v1035, 1
        %v1580 = vrot.slane %v1036, 1
        %v1581 = vsel %vm694, %v1579, %v1580
        %v1582 = vrot.slane %v1037, 1
        %v1583 = vrot.slane %v1038, 1
        %v1584 = vsel %vm694, %v1582, %v1583
        %v1585 = vrot.slane %v1039, 1
        %v1586 = vrot.slane %v1040, 1
        %v1587 = vsel %vm694, %v1585, %v1586
        %v1588 = vrot.slane %v1041, 1
        %v1589 = vrot.slane %v1042, 1
        %v1590 = vsel %vm694, %v1588, %v1589
        %v1591 = vrot.slane %v1043, 1
        %v1592 = vrot.slane %v1044, 1
        %v1593 = vsel %vm694, %v1591, %v1592
        %v1594 = vrot.slane %v1045, 1
        %v1595 = vrot.slane %v1046, 1
        %v1596 = vsel %vm694, %v1594, %v1595
        %v1597 = vrot.slane %v1047, 1
        %v1598 = vrot.slane %v1048, 1
        %v1599 = vsel %vm694, %v1597, %v1598
        %v1600 = vrot.slane %v1049, 1
        %v1601 = vrot.slane %v1050, 1
        %v1602 = vsel %vm694, %v1600, %v1601
        %v1603 = vrot.slane %v1051, 1
        %v1604 = vrot.slane %v1052, 1
        %v1605 = vsel %vm694, %v1603, %v1604
        %v1606 = vrot.slane %v1053, 1
        %v1607 = vrot.slane %v1054, 1
        %v1608 = vsel %vm694, %v1606, %v1607
        %v1609 = vrot.slane %v1055, 1
        %v1610 = vrot.slane %v1056, 1
        %v1611 = vsel %vm694, %v1609, %v1610
        %v1612 = vrot.slane %v1057, 1
        %v1613 = vrot.slane %v1058, 1
        %v1614 = vsel %vm694, %v1612, %v1613
        %v1615 = vrot.slane %v1059, 1
        %v1616 = vrot.slane %v1060, 1
        %v1617 = vsel %vm694, %v1615, %v1616
        %v1618 = vrot.slane %v1061, 1
        %v1619 = vrot.slane %v1062, 1
        %v1620 = vsel %vm694, %v1618, %v1619
        %v1621 = vrot.slane %v1063, 1
        %v1622 = vrot.slane %v1064, 1
        %v1623 = vsel %vm694, %v1621, %v1622
        %v1624 = vrot.slane %v1065, 1
        %v1625 = vrot.slane %v1066, 1
        %v1626 = vsel %vm694, %v1624, %v1625
        %v1627 = vrot.slane %v1067, 1
        %v1628 = vrot.slane %v1068, 1
        %v1629 = vsel %vm694, %v1627, %v1628
        %v1630 = vrot.slane %v1069, 1
        %v1631 = vrot.slane %v1070, 1
        %v1632 = vsel %vm694, %v1630, %v1631
        %v1633 = vrot.slane %v1071, 1
        %v1634 = vrot.slane %v1072, 1
        %v1635 = vsel %vm694, %v1633, %v1634
        %v1636 = vrot.slane %v1073, 1
        %v1637 = vrot.slane %v1074, 1
        %v1638 = vsel %vm694, %v1636, %v1637
        %v1639 = vrot.slane %v1075, 1
        %v1640 = vrot.slane %v1076, 1
        %v1641 = vsel %vm694, %v1639, %v1640
        %v1642 = vrot.slane %v1077, 1
        %v1643 = vrot.slane %v1078, 1
        %v1644 = vsel %vm694, %v1642, %v1643
        %v1645 = vrot.slane %v1079, 1
        %v1646 = vrot.slane %v1080, 1
        %v1647 = vsel %vm694, %v1645, %v1646
        %v1648 = vrot.slane %v1081, 1
        %v1649 = vrot.slane %v1082, 1
        %v1650 = vsel %vm694, %v1648, %v1649
        %v1651 = vrot.slane %v1083, 1
        %v1652 = vrot.slane %v1084, 1
        %v1653 = vsel %vm694, %v1651, %v1652
        %v1654 = vrot.slane %v1085, 1
        %v1655 = vrot.slane %v1086, 1
        %v1656 = vsel %vm694, %v1654, %v1655
        %v1657 = vrot.slane %v1087, 1
        %v1658 = vrot.slane %v1088, 1
        %v1659 = vsel %vm694, %v1657, %v1658
        %v1660 = vrot.slane %v1089, 1
        %v1661 = vrot.slane %v1090, 1
        %v1662 = vsel %vm694, %v1660, %v1661
        %v1663 = vrot.slane %v1091, 1
        %v1664 = vrot.slane %v1092, 1
        %v1665 = vsel %vm694, %v1663, %v1664
        %v1666 = vrot.slane %v1093, 1
        %v1667 = vrot.slane %v1094, 1
        %v1668 = vsel %vm694, %v1666, %v1667
        %v1669 = vrot.slane %v1095, 1
        %v1670 = vrot.slane %v1096, 1
        %v1671 = vsel %vm694, %v1669, %v1670
        %v1672 = vrot.slane %v1097, 1
        %v1673 = vrot.slane %v1098, 1
        %v1674 = vsel %vm694, %v1672, %v1673
        %v1675 = vrot.slane %v1099, 1
        %v1676 = vrot.slane %v1100, 1
        %v1677 = vsel %vm694, %v1675, %v1676
        %v1678 = vrot.slane %v1101, 1
        %v1679 = vrot.slane %v1102, 1
        %v1680 = vsel %vm694, %v1678, %v1679
        %v1715 = vsel %vm694, %v1580, 0.0
        %v1716 = vsel %vm694, %v1583, 0.0
        %v1717 = vsel %vm694, %v1586, 0.0
        %v1718 = vsel %vm694, %v1589, 0.0
        %v1719 = vsel %vm694, %v1592, 0.0
        %v1720 = vsel %vm694, %v1595, 0.0
        %v1721 = vsel %vm694, %v1598, 0.0
        %v1722 = vsel %vm694, %v1601, 0.0
        %v1723 = vsel %vm694, %v1604, 0.0
        %v1724 = vsel %vm694, %v1607, 0.0
        %v1725 = vsel %vm694, %v1610, 0.0
        %v1726 = vsel %vm694, %v1613, 0.0
        %v1727 = vsel %vm694, %v1616, 0.0
        %v1728 = vsel %vm694, %v1619, 0.0
        %v1729 = vsel %vm694, %v1622, 0.0
        %v1730 = vsel %vm694, %v1625, 0.0
        %v1731 = vsel %vm694, %v1628, 0.0
        %v1732 = vsel %vm694, %v1631, 0.0
        %v1733 = vsel %vm694, %v1634, 0.0
        %v1734 = vsel %vm694, %v1637, 0.0
        %v1735 = vsel %vm694, %v1640, 0.0
        %v1736 = vsel %vm694, %v1643, 0.0
        %v1737 = vsel %vm694, %v1646, 0.0
        %v1738 = vsel %vm694, %v1649, 0.0
        %v1739 = vsel %vm694, %v1652, 0.0
        %v1740 = vsel %vm694, %v1655, 0.0
        %v1741 = vsel %vm694, %v1658, 0.0
        %v1742 = vsel %vm694, %v1661, 0.0
        %v1743 = vsel %vm694, %v1664, 0.0
        %v1744 = vsel %vm694, %v1667, 0.0
        %v1745 = vsel %vm694, %v1670, 0.0
        %v1746 = vsel %vm694, %v1673, 0.0
        %v1747 = vsel %vm694, %v1676, 0.0
        %v1748 = vsel %vm694, %v1679, 0.0
        %1749 = vrot.lane.b32.xlu0 %v1035, 8
        %v1750 = vpop.permute.xlu0 %1749
        %1751 = vrot.lane.b32.xlu0 %v1036, 8
        %v1752 = vpop.permute.xlu0 %1751
        %1753 = vrot.lane.b32.xlu0 %v1037, 8
        %v1754 = vpop.permute.xlu0 %1753
        %1755 = vrot.lane.b32.xlu0 %v1038, 8
        %v1756 = vpop.permute.xlu0 %1755
        %1757 = vrot.lane.b32.xlu0 %v1039, 8
        %v1758 = vpop.permute.xlu0 %1757
        %1759 = vrot.lane.b32.xlu0 %v1040, 8
        %v1760 = vpop.permute.xlu0 %1759
        %1761 = vrot.lane.b32.xlu0 %v1041, 8
        %v1762 = vpop.permute.xlu0 %1761
        %1763 = vrot.lane.b32.xlu0 %v1042, 8
        %v1764 = vpop.permute.xlu0 %1763
        %1765 = vrot.lane.b32.xlu0 %v1043, 8
        %v1766 = vpop.permute.xlu0 %1765
        %1767 = vrot.lane.b32.xlu0 %v1044, 8
        %v1768 = vpop.permute.xlu0 %1767
        %1769 = vrot.lane.b32.xlu0 %v1045, 8
        %v1770 = vpop.permute.xlu0 %1769
        %1771 = vrot.lane.b32.xlu0 %v1046, 8
        %v1772 = vpop.permute.xlu0 %1771
        %1773 = vrot.lane.b32.xlu0 %v1047, 8
        %v1774 = vpop.permute.xlu0 %1773
        %1775 = vrot.lane.b32.xlu0 %v1048, 8
        %v1776 = vpop.permute.xlu0 %1775
        %1777 = vrot.lane.b32.xlu0 %v1049, 8
        %v1778 = vpop.permute.xlu0 %1777
        %1779 = vrot.lane.b32.xlu0 %v1050, 8
        %v1780 = vpop.permute.xlu0 %1779
        %1781 = vrot.lane.b32.xlu0 %v1051, 8
        %v1782 = vpop.permute.xlu0 %1781
        %1783 = vrot.lane.b32.xlu0 %v1052, 8
        %v1784 = vpop.permute.xlu0 %1783
        %1785 = vrot.lane.b32.xlu0 %v1053, 8
        %v1786 = vpop.permute.xlu0 %1785
        %1787 = vrot.lane.b32.xlu0 %v1054, 8
        %v1788 = vpop.permute.xlu0 %1787
        %1789 = vrot.lane.b32.xlu0 %v1055, 8
        %v1790 = vpop.permute.xlu0 %1789
        %1791 = vrot.lane.b32.xlu0 %v1056, 8
        %v1792 = vpop.permute.xlu0 %1791
        %1793 = vrot.lane.b32.xlu0 %v1057, 8
        %v1794 = vpop.permute.xlu0 %1793
        %1795 = vrot.lane.b32.xlu0 %v1058, 8
        %v1796 = vpop.permute.xlu0 %1795
        %1797 = vrot.lane.b32.xlu0 %v1059, 8
        %v1798 = vpop.permute.xlu0 %1797
        %1799 = vrot.lane.b32.xlu0 %v1060, 8
        %v1800 = vpop.permute.xlu0 %1799
        %1801 = vrot.lane.b32.xlu0 %v1061, 8
        %v1802 = vpop.permute.xlu0 %1801
        %1803 = vrot.lane.b32.xlu0 %v1062, 8
        %v1804 = vpop.permute.xlu0 %1803
        %1805 = vrot.lane.b32.xlu0 %v1063, 8
        %v1806 = vpop.permute.xlu0 %1805
        %1807 = vrot.lane.b32.xlu0 %v1064, 8
        %v1808 = vpop.permute.xlu0 %1807
        %1809 = vrot.lane.b32.xlu0 %v1065, 8
        %v1810 = vpop.permute.xlu0 %1809
        %1811 = vrot.lane.b32.xlu0 %v1066, 8
        %v1812 = vpop.permute.xlu0 %1811
        %1813 = vrot.lane.b32.xlu0 %v1067, 8
        %v1814 = vpop.permute.xlu0 %1813
        %1815 = vrot.lane.b32.xlu0 %v1068, 8
        %v1816 = vpop.permute.xlu0 %1815
        %1817 = vrot.lane.b32.xlu0 %v1069, 8
        %v1818 = vpop.permute.xlu0 %1817
        %1819 = vrot.lane.b32.xlu0 %v1070, 8
        %v1820 = vpop.permute.xlu0 %1819
        %1821 = vrot.lane.b32.xlu0 %v1071, 8
        %v1822 = vpop.permute.xlu0 %1821
        %1823 = vrot.lane.b32.xlu0 %v1072, 8
        %v1824 = vpop.permute.xlu0 %1823
        %1825 = vrot.lane.b32.xlu0 %v1073, 8
        %v1826 = vpop.permute.xlu0 %1825
        %1827 = vrot.lane.b32.xlu0 %v1074, 8
        %v1828 = vpop.permute.xlu0 %1827
        %1829 = vrot.lane.b32.xlu0 %v1075, 8
        %v1830 = vpop.permute.xlu0 %1829
        %1831 = vrot.lane.b32.xlu0 %v1076, 8
        %v1832 = vpop.permute.xlu0 %1831
        %1833 = vrot.lane.b32.xlu0 %v1077, 8
        %v1834 = vpop.permute.xlu0 %1833
        %1835 = vrot.lane.b32.xlu0 %v1078, 8
        %v1836 = vpop.permute.xlu0 %1835
        %1837 = vrot.lane.b32.xlu0 %v1079, 8
        %v1838 = vpop.permute.xlu0 %1837
        %1839 = vrot.lane.b32.xlu0 %v1080, 8
        %v1840 = vpop.permute.xlu0 %1839
        %1841 = vrot.lane.b32.xlu0 %v1081, 8
        %v1842 = vpop.permute.xlu0 %1841
        %1843 = vrot.lane.b32.xlu0 %v1082, 8
        %v1844 = vpop.permute.xlu0 %1843
        %1845 = vrot.lane.b32.xlu0 %v1083, 8
        %v1846 = vpop.permute.xlu0 %1845
        %1847 = vrot.lane.b32.xlu0 %v1084, 8
        %v1848 = vpop.permute.xlu0 %1847
        %1849 = vrot.lane.b32.xlu0 %v1085, 8
        %v1850 = vpop.permute.xlu0 %1849
        %1851 = vrot.lane.b32.xlu0 %v1086, 8
        %v1852 = vpop.permute.xlu0 %1851
        %1853 = vrot.lane.b32.xlu0 %v1087, 8
        %v1854 = vpop.permute.xlu0 %1853
        %1855 = vrot.lane.b32.xlu0 %v1088, 8
        %v1856 = vpop.permute.xlu0 %1855
        %1857 = vrot.lane.b32.xlu0 %v1089, 8
        %v1858 = vpop.permute.xlu0 %1857
        %1859 = vrot.lane.b32.xlu0 %v1090, 8
        %v1860 = vpop.permute.xlu0 %1859
        %1861 = vrot.lane.b32.xlu0 %v1091, 8
        %v1862 = vpop.permute.xlu0 %1861
        %1863 = vrot.lane.b32.xlu0 %v1092, 8
        %v1864 = vpop.permute.xlu0 %1863
        %1865 = vrot.lane.b32.xlu0 %v1093, 8
        %v1866 = vpop.permute.xlu0 %1865
        %1867 = vrot.lane.b32.xlu0 %v1094, 8
        %v1868 = vpop.permute.xlu0 %1867
        %1869 = vrot.lane.b32.xlu0 %v1095, 8
        %v1870 = vpop.permute.xlu0 %1869
        %1871 = vrot.lane.b32.xlu0 %v1096, 8
        %v1872 = vpop.permute.xlu0 %1871
        %1873 = vrot.lane.b32.xlu0 %v1097, 8
        %v1874 = vpop.permute.xlu0 %1873
        %1875 = vrot.lane.b32.xlu0 %v1098, 8
        %v1876 = vpop.permute.xlu0 %1875
        %1877 = vrot.lane.b32.xlu0 %v1099, 8
        %v1878 = vpop.permute.xlu0 %1877
        %1879 = vrot.lane.b32.xlu0 %v1100, 8
        %v1880 = vpop.permute.xlu0 %1879
        %1881 = vrot.lane.b32.xlu0 %v1101, 8
        %v1882 = vpop.permute.xlu0 %1881
        %1883 = vrot.lane.b32.xlu0 %v1102, 8
        %v1884 = vpop.permute.xlu0 %1883
        %1953 = vrot.lane.b32.xlu0 %v1171, 16
        %v1954 = vpop.permute.xlu0 %1953
        %1955 = vrot.lane.b32.xlu0 %v1172, 16
        %v1956 = vpop.permute.xlu0 %1955
        %1957 = vrot.lane.b32.xlu0 %v1173, 16
        %v1958 = vpop.permute.xlu0 %1957
        %1959 = vrot.lane.b32.xlu0 %v1174, 16
        %v1960 = vpop.permute.xlu0 %1959
        %1961 = vrot.lane.b32.xlu0 %v1175, 16
        %v1962 = vpop.permute.xlu0 %1961
        %1963 = vrot.lane.b32.xlu0 %v1176, 16
        %v1964 = vpop.permute.xlu0 %1963
        %1965 = vrot.lane.b32.xlu0 %v1177, 16
        %v1966 = vpop.permute.xlu0 %1965
        %1967 = vrot.lane.b32.xlu0 %v1178, 16
        %v1968 = vpop.permute.xlu0 %1967
        %1969 = vrot.lane.b32.xlu0 %v1179, 16
        %v1970 = vpop.permute.xlu0 %1969
        %1971 = vrot.lane.b32.xlu0 %v1180, 16
        %v1972 = vpop.permute.xlu0 %1971
        %1973 = vrot.lane.b32.xlu0 %v1181, 16
        %v1974 = vpop.permute.xlu0 %1973
        %1975 = vrot.lane.b32.xlu0 %v1182, 16
        %v1976 = vpop.permute.xlu0 %1975
        %1977 = vrot.lane.b32.xlu0 %v1183, 16
        %v1978 = vpop.permute.xlu0 %1977
        %1979 = vrot.lane.b32.xlu0 %v1184, 16
        %v1980 = vpop.permute.xlu0 %1979
        %1981 = vrot.lane.b32.xlu0 %v1185, 16
        %v1982 = vpop.permute.xlu0 %1981
        %1983 = vrot.lane.b32.xlu0 %v1186, 16
        %v1984 = vpop.permute.xlu0 %1983
        %1985 = vrot.lane.b32.xlu0 %v1187, 16
        %v1986 = vpop.permute.xlu0 %1985
        %1987 = vrot.lane.b32.xlu0 %v1188, 16
        %v1988 = vpop.permute.xlu0 %1987
        %1989 = vrot.lane.b32.xlu0 %v1189, 16
        %v1990 = vpop.permute.xlu0 %1989
        %1991 = vrot.lane.b32.xlu0 %v1190, 16
        %v1992 = vpop.permute.xlu0 %1991
        %1993 = vrot.lane.b32.xlu0 %v1191, 16
        %v1994 = vpop.permute.xlu0 %1993
        %1995 = vrot.lane.b32.xlu0 %v1192, 16
        %v1996 = vpop.permute.xlu0 %1995
        %1997 = vrot.lane.b32.xlu0 %v1193, 16
        %v1998 = vpop.permute.xlu0 %1997
        %1999 = vrot.lane.b32.xlu0 %v1194, 16
        %v2000 = vpop.permute.xlu0 %1999
        %2001 = vrot.lane.b32.xlu0 %v1195, 16
        %v2002 = vpop.permute.xlu0 %2001
        %2003 = vrot.lane.b32.xlu0 %v1196, 16
        %v2004 = vpop.permute.xlu0 %2003
        %2005 = vrot.lane.b32.xlu0 %v1197, 16
        %v2006 = vpop.permute.xlu0 %2005
        %2007 = vrot.lane.b32.xlu0 %v1198, 16
        %v2008 = vpop.permute.xlu0 %2007
        %2009 = vrot.lane.b32.xlu0 %v1199, 16
        %v2010 = vpop.permute.xlu0 %2009
        %2011 = vrot.lane.b32.xlu0 %v1200, 16
        %v2012 = vpop.permute.xlu0 %2011
        %2013 = vrot.lane.b32.xlu0 %v1201, 16
        %v2014 = vpop.permute.xlu0 %2013
        %2015 = vrot.lane.b32.xlu0 %v1202, 16
        %v2016 = vpop.permute.xlu0 %2015
        %2017 = vrot.lane.b32.xlu0 %v1203, 16
        %v2018 = vpop.permute.xlu0 %2017
        %2019 = vrot.lane.b32.xlu0 %v1204, 16
        %v2020 = vpop.permute.xlu0 %2019
        %2021 = vrot.lane.b32.xlu0 %v1205, 16
        %v2022 = vpop.permute.xlu0 %2021
        %2023 = vrot.lane.b32.xlu0 %v1206, 16
        %v2024 = vpop.permute.xlu0 %2023
        %2025 = vrot.lane.b32.xlu0 %v1207, 16
        %v2026 = vpop.permute.xlu0 %2025
        %2027 = vrot.lane.b32.xlu0 %v1208, 16
        %v2028 = vpop.permute.xlu0 %2027
        %2029 = vrot.lane.b32.xlu0 %v1209, 16
        %v2030 = vpop.permute.xlu0 %2029
        %2031 = vrot.lane.b32.xlu0 %v1210, 16
        %v2032 = vpop.permute.xlu0 %2031
        %2033 = vrot.lane.b32.xlu0 %v1211, 16
        %v2034 = vpop.permute.xlu0 %2033
        %2035 = vrot.lane.b32.xlu0 %v1212, 16
        %v2036 = vpop.permute.xlu0 %2035
        %2037 = vrot.lane.b32.xlu0 %v1213, 16
        %v2038 = vpop.permute.xlu0 %2037
        %2039 = vrot.lane.b32.xlu0 %v1214, 16
        %v2040 = vpop.permute.xlu0 %2039
        %2041 = vrot.lane.b32.xlu0 %v1215, 16
        %v2042 = vpop.permute.xlu0 %2041
        %2043 = vrot.lane.b32.xlu0 %v1216, 16
        %v2044 = vpop.permute.xlu0 %2043
        %2045 = vrot.lane.b32.xlu0 %v1217, 16
        %v2046 = vpop.permute.xlu0 %2045
        %2047 = vrot.lane.b32.xlu0 %v1218, 16
        %v2048 = vpop.permute.xlu0 %2047
        %2049 = vrot.lane.b32.xlu0 %v1219, 16
        %v2050 = vpop.permute.xlu0 %2049
        %2051 = vrot.lane.b32.xlu0 %v1220, 16
        %v2052 = vpop.permute.xlu0 %2051
        %2053 = vrot.lane.b32.xlu0 %v1221, 16
        %v2054 = vpop.permute.xlu0 %2053
        %2055 = vrot.lane.b32.xlu0 %v1222, 16
        %v2056 = vpop.permute.xlu0 %2055
        %2057 = vrot.lane.b32.xlu0 %v1223, 16
        %v2058 = vpop.permute.xlu0 %2057
        %2059 = vrot.lane.b32.xlu0 %v1224, 16
        %v2060 = vpop.permute.xlu0 %2059
        %2061 = vrot.lane.b32.xlu0 %v1225, 16
        %v2062 = vpop.permute.xlu0 %2061
        %2063 = vrot.lane.b32.xlu0 %v1226, 16
        %v2064 = vpop.permute.xlu0 %2063
        %2065 = vrot.lane.b32.xlu0 %v1227, 16
        %v2066 = vpop.permute.xlu0 %2065
        %2067 = vrot.lane.b32.xlu0 %v1228, 16
        %v2068 = vpop.permute.xlu0 %2067
        %2069 = vrot.lane.b32.xlu0 %v1229, 16
        %v2070 = vpop.permute.xlu0 %2069
        %2071 = vrot.lane.b32.xlu0 %v1230, 16
        %v2072 = vpop.permute.xlu0 %2071
        %2073 = vrot.lane.b32.xlu0 %v1231, 16
        %v2074 = vpop.permute.xlu0 %2073
        %2075 = vrot.lane.b32.xlu0 %v1232, 16
        %v2076 = vpop.permute.xlu0 %2075
        %2077 = vrot.lane.b32.xlu0 %v1233, 16
        %v2078 = vpop.permute.xlu0 %2077
        %2079 = vrot.lane.b32.xlu0 %v1234, 16
        %v2080 = vpop.permute.xlu0 %2079
        %2081 = vrot.lane.b32.xlu0 %v1235, 16
        %v2082 = vpop.permute.xlu0 %2081
        %2083 = vrot.lane.b32.xlu0 %v1236, 16
        %v2084 = vpop.permute.xlu0 %2083
        %2085 = vrot.lane.b32.xlu0 %v1237, 16
        %v2086 = vpop.permute.xlu0 %2085
        %2087 = vrot.lane.b32.xlu0 %v1238, 16
        %v2088 = vpop.permute.xlu0 %2087
        %2191 = vrot.lane.b32.xlu0 %v1581, 24
        %v2192 = vpop.permute.xlu0 %2191
        %2193 = vrot.lane.b32.xlu0 %v1715, 24
        %v2194 = vpop.permute.xlu0 %2193
        %2195 = vrot.lane.b32.xlu0 %v1584, 24
        %v2196 = vpop.permute.xlu0 %2195
        %2197 = vrot.lane.b32.xlu0 %v1716, 24
        %v2198 = vpop.permute.xlu0 %2197
        %2199 = vrot.lane.b32.xlu0 %v1587, 24
        %v2200 = vpop.permute.xlu0 %2199
        %2201 = vrot.lane.b32.xlu0 %v1717, 24
        %v2202 = vpop.permute.xlu0 %2201
        %2203 = vrot.lane.b32.xlu0 %v1590, 24
        %v2204 = vpop.permute.xlu0 %2203
        %2205 = vrot.lane.b32.xlu0 %v1718, 24
        %v2206 = vpop.permute.xlu0 %2205
        %2207 = vrot.lane.b32.xlu0 %v1593, 24
        %v2208 = vpop.permute.xlu0 %2207
        %2209 = vrot.lane.b32.xlu0 %v1719, 24
        %v2210 = vpop.permute.xlu0 %2209
        %2211 = vrot.lane.b32.xlu0 %v1596, 24
        %v2212 = vpop.permute.xlu0 %2211
        %2213 = vrot.lane.b32.xlu0 %v1720, 24
        %v2214 = vpop.permute.xlu0 %2213
        %2215 = vrot.lane.b32.xlu0 %v1599, 24
        %v2216 = vpop.permute.xlu0 %2215
        %2217 = vrot.lane.b32.xlu0 %v1721, 24
        %v2218 = vpop.permute.xlu0 %2217
        %2219 = vrot.lane.b32.xlu0 %v1602, 24
        %v2220 = vpop.permute.xlu0 %2219
        %2221 = vrot.lane.b32.xlu0 %v1722, 24
        %v2222 = vpop.permute.xlu0 %2221
        %2223 = vrot.lane.b32.xlu0 %v1605, 24
        %v2224 = vpop.permute.xlu0 %2223
        %2225 = vrot.lane.b32.xlu0 %v1723, 24
        %v2226 = vpop.permute.xlu0 %2225
        %2227 = vrot.lane.b32.xlu0 %v1608, 24
        %v2228 = vpop.permute.xlu0 %2227
        %2229 = vrot.lane.b32.xlu0 %v1724, 24
        %v2230 = vpop.permute.xlu0 %2229
        %2231 = vrot.lane.b32.xlu0 %v1611, 24
        %v2232 = vpop.permute.xlu0 %2231
        %2233 = vrot.lane.b32.xlu0 %v1725, 24
        %v2234 = vpop.permute.xlu0 %2233
        %2235 = vrot.lane.b32.xlu0 %v1614, 24
        %v2236 = vpop.permute.xlu0 %2235
        %2237 = vrot.lane.b32.xlu0 %v1726, 24
        %v2238 = vpop.permute.xlu0 %2237
        %2239 = vrot.lane.b32.xlu0 %v1617, 24
        %v2240 = vpop.permute.xlu0 %2239
        %2241 = vrot.lane.b32.xlu0 %v1727, 24
        %v2242 = vpop.permute.xlu0 %2241
        %2243 = vrot.lane.b32.xlu0 %v1620, 24
        %v2244 = vpop.permute.xlu0 %2243
        %2245 = vrot.lane.b32.xlu0 %v1728, 24
        %v2246 = vpop.permute.xlu0 %2245
        %2247 = vrot.lane.b32.xlu0 %v1623, 24
        %v2248 = vpop.permute.xlu0 %2247
        %2249 = vrot.lane.b32.xlu0 %v1729, 24
        %v2250 = vpop.permute.xlu0 %2249
        %2251 = vrot.lane.b32.xlu0 %v1626, 24
        %v2252 = vpop.permute.xlu0 %2251
        %2253 = vrot.lane.b32.xlu0 %v1730, 24
        %v2254 = vpop.permute.xlu0 %2253
        %2255 = vrot.lane.b32.xlu0 %v1629, 24
        %v2256 = vpop.permute.xlu0 %2255
        %2257 = vrot.lane.b32.xlu0 %v1731, 24
        %v2258 = vpop.permute.xlu0 %2257
        %2259 = vrot.lane.b32.xlu0 %v1632, 24
        %v2260 = vpop.permute.xlu0 %2259
        %2261 = vrot.lane.b32.xlu0 %v1732, 24
        %v2262 = vpop.permute.xlu0 %2261
        %2263 = vrot.lane.b32.xlu0 %v1635, 24
        %v2264 = vpop.permute.xlu0 %2263
        %2265 = vrot.lane.b32.xlu0 %v1733, 24
        %v2266 = vpop.permute.xlu0 %2265
        %2267 = vrot.lane.b32.xlu0 %v1638, 24
        %v2268 = vpop.permute.xlu0 %2267
        %2269 = vrot.lane.b32.xlu0 %v1734, 24
        %v2270 = vpop.permute.xlu0 %2269
        %2271 = vrot.lane.b32.xlu0 %v1641, 24
        %v2272 = vpop.permute.xlu0 %2271
        %2273 = vrot.lane.b32.xlu0 %v1735, 24
        %v2274 = vpop.permute.xlu0 %2273
        %2275 = vrot.lane.b32.xlu0 %v1644, 24
        %v2276 = vpop.permute.xlu0 %2275
        %2277 = vrot.lane.b32.xlu0 %v1736, 24
        %v2278 = vpop.permute.xlu0 %2277
        %2279 = vrot.lane.b32.xlu0 %v1647, 24
        %v2280 = vpop.permute.xlu0 %2279
        %2281 = vrot.lane.b32.xlu0 %v1737, 24
        %v2282 = vpop.permute.xlu0 %2281
        %2283 = vrot.lane.b32.xlu0 %v1650, 24
        %v2284 = vpop.permute.xlu0 %2283
        %2285 = vrot.lane.b32.xlu0 %v1738, 24
        %v2286 = vpop.permute.xlu0 %2285
        %2287 = vrot.lane.b32.xlu0 %v1653, 24
        %v2288 = vpop.permute.xlu0 %2287
        %2289 = vrot.lane.b32.xlu0 %v1739, 24
        %v2290 = vpop.permute.xlu0 %2289
        %2291 = vrot.lane.b32.xlu0 %v1656, 24
        %v2292 = vpop.permute.xlu0 %2291
        %2293 = vrot.lane.b32.xlu0 %v1740, 24
        %v2294 = vpop.permute.xlu0 %2293
        %2295 = vrot.lane.b32.xlu0 %v1659, 24
        %v2296 = vpop.permute.xlu0 %2295
        %2297 = vrot.lane.b32.xlu0 %v1741, 24
        %v2298 = vpop.permute.xlu0 %2297
        %2299 = vrot.lane.b32.xlu0 %v1662, 24
        %v2300 = vpop.permute.xlu0 %2299
        %2301 = vrot.lane.b32.xlu0 %v1742, 24
        %v2302 = vpop.permute.xlu0 %2301
        %2303 = vrot.lane.b32.xlu0 %v1665, 24
        %v2304 = vpop.permute.xlu0 %2303
        %2305 = vrot.lane.b32.xlu0 %v1743, 24
        %v2306 = vpop.permute.xlu0 %2305
        %2307 = vrot.lane.b32.xlu0 %v1668, 24
        %v2308 = vpop.permute.xlu0 %2307
        %2309 = vrot.lane.b32.xlu0 %v1744, 24
        %v2310 = vpop.permute.xlu0 %2309
        %2311 = vrot.lane.b32.xlu0 %v1671, 24
        %v2312 = vpop.permute.xlu0 %2311
        %2313 = vrot.lane.b32.xlu0 %v1745, 24
        %v2314 = vpop.permute.xlu0 %2313
        %2315 = vrot.lane.b32.xlu0 %v1674, 24
        %v2316 = vpop.permute.xlu0 %2315
        %2317 = vrot.lane.b32.xlu0 %v1746, 24
        %v2318 = vpop.permute.xlu0 %2317
        %2319 = vrot.lane.b32.xlu0 %v1677, 24
        %v2320 = vpop.permute.xlu0 %2319
        %2321 = vrot.lane.b32.xlu0 %v1747, 24
        %v2322 = vpop.permute.xlu0 %2321
        %2323 = vrot.lane.b32.xlu0 %v1680, 24
        %v2324 = vpop.permute.xlu0 %2323
        %2325 = vrot.lane.b32.xlu0 %v1748, 24
        %v2326 = vpop.permute.xlu0 %2325
        %vm2395 = vcmask 64512
        %v2396 = vsel %vm2395, %v1477, %v1750
        %v2397 = vsel %vm2395, %v1309, %v1752
        %v2398 = vsel %vm2395, %v1478, %v1754
        %v2399 = vsel %vm2395, %v1312, %v1756
        %v2400 = vsel %vm2395, %v1479, %v1758
        %v2401 = vsel %vm2395, %v1315, %v1760
        %v2402 = vsel %vm2395, %v1480, %v1762
        %v2403 = vsel %vm2395, %v1318, %v1764
        %v2404 = vsel %vm2395, %v1481, %v1766
        %v2405 = vsel %vm2395, %v1321, %v1768
        %v2406 = vsel %vm2395, %v1482, %v1770
        %v2407 = vsel %vm2395, %v1324, %v1772
        %v2408 = vsel %vm2395, %v1483, %v1774
        %v2409 = vsel %vm2395, %v1327, %v1776
        %v2410 = vsel %vm2395, %v1484, %v1778
        %v2411 = vsel %vm2395, %v1330, %v1780
        %v2412 = vsel %vm2395, %v1485, %v1782
        %v2413 = vsel %vm2395, %v1333, %v1784
        %v2414 = vsel %vm2395, %v1486, %v1786
        %v2415 = vsel %vm2395, %v1336, %v1788
        %v2416 = vsel %vm2395, %v1487, %v1790
        %v2417 = vsel %vm2395, %v1339, %v1792
        %v2418 = vsel %vm2395, %v1488, %v1794
        %v2419 = vsel %vm2395, %v1342, %v1796
        %v2420 = vsel %vm2395, %v1489, %v1798
        %v2421 = vsel %vm2395, %v1345, %v1800
        %v2422 = vsel %vm2395, %v1490, %v1802
        %v2423 = vsel %vm2395, %v1348, %v1804
        %v2424 = vsel %vm2395, %v1491, %v1806
        %v2425 = vsel %vm2395, %v1351, %v1808
        %v2426 = vsel %vm2395, %v1492, %v1810
        %v2427 = vsel %vm2395, %v1354, %v1812
        %v2428 = vsel %vm2395, %v1493, %v1814
        %v2429 = vsel %vm2395, %v1357, %v1816
        %v2430 = vsel %vm2395, %v1494, %v1818
        %v2431 = vsel %vm2395, %v1360, %v1820
        %v2432 = vsel %vm2395, %v1495, %v1822
        %v2433 = vsel %vm2395, %v1363, %v1824
        %v2434 = vsel %vm2395, %v1496, %v1826
        %v2435 = vsel %vm2395, %v1366, %v1828
        %v2436 = vsel %vm2395, %v1497, %v1830
        %v2437 = vsel %vm2395, %v1369, %v1832
        %v2438 = vsel %vm2395, %v1498, %v1834
        %v2439 = vsel %vm2395, %v1372, %v1836
        %v2440 = vsel %vm2395, %v1499, %v1838
        %v2441 = vsel %vm2395, %v1375, %v1840
        %v2442 = vsel %vm2395, %v1500, %v1842
        %v2443 = vsel %vm2395, %v1378, %v1844
        %v2444 = vsel %vm2395, %v1501, %v1846
        %v2445 = vsel %vm2395, %v1381, %v1848
        %v2446 = vsel %vm2395, %v1502, %v1850
        %v2447 = vsel %vm2395, %v1384, %v1852
        %v2448 = vsel %vm2395, %v1503, %v1854
        %v2449 = vsel %vm2395, %v1387, %v1856
        %v2450 = vsel %vm2395, %v1504, %v1858
        %v2451 = vsel %vm2395, %v1390, %v1860
        %v2452 = vsel %vm2395, %v1505, %v1862
        %v2453 = vsel %vm2395, %v1393, %v1864
        %v2454 = vsel %vm2395, %v1506, %v1866
        %v2455 = vsel %vm2395, %v1396, %v1868
        %v2456 = vsel %vm2395, %v1507, %v1870
        %v2457 = vsel %vm2395, %v1399, %v1872
        %v2458 = vsel %vm2395, %v1508, %v1874
        %v2459 = vsel %vm2395, %v1402, %v1876
        %v2460 = vsel %vm2395, %v1509, %v1878
        %v2461 = vsel %vm2395, %v1405, %v1880
        %v2462 = vsel %vm2395, %v1510, %v1882
        %v2463 = vsel %vm2395, %v1408, %v1884
        %vm2464 = vcmask 130048
        %v2465 = vsel %vm2464, %v2396, %v1954
        %v2466 = vsel %vm2464, %v2397, %v1956
        %v2467 = vsel %vm2464, %v2398, %v1958
        %v2468 = vsel %vm2464, %v2399, %v1960
        %v2469 = vsel %vm2464, %v2400, %v1962
        %v2470 = vsel %vm2464, %v2401, %v1964
        %v2471 = vsel %vm2464, %v2402, %v1966
        %v2472 = vsel %vm2464, %v2403, %v1968
        %v2473 = vsel %vm2464, %v2404, %v1970
        %v2474 = vsel %vm2464, %v2405, %v1972
        %v2475 = vsel %vm2464, %v2406, %v1974
        %v2476 = vsel %vm2464, %v2407, %v1976
        %v2477 = vsel %vm2464, %v2408, %v1978
        %v2478 = vsel %vm2464, %v2409, %v1980
        %v2479 = vsel %vm2464, %v2410, %v1982
        %v2480 = vsel %vm2464, %v2411, %v1984
        %v2481 = vsel %vm2464, %v2412, %v1986
        %v2482 = vsel %vm2464, %v2413, %v1988
        %v2483 = vsel %vm2464, %v2414, %v1990
        %v2484 = vsel %vm2464, %v2415, %v1992
        %v2485 = vsel %vm2464, %v2416, %v1994
        %v2486 = vsel %vm2464, %v2417, %v1996
        %v2487 = vsel %vm2464, %v2418, %v1998
        %v2488 = vsel %vm2464, %v2419, %v2000
        %v2489 = vsel %vm2464, %v2420, %v2002
        %v2490 = vsel %vm2464, %v2421, %v2004
        %v2491 = vsel %vm2464, %v2422, %v2006
        %v2492 = vsel %vm2464, %v2423, %v2008
        %v2493 = vsel %vm2464, %v2424, %v2010
        %v2494 = vsel %vm2464, %v2425, %v2012
        %v2495 = vsel %vm2464, %v2426, %v2014
        %v2496 = vsel %vm2464, %v2427, %v2016
        %v2497 = vsel %vm2464, %v2428, %v2018
        %v2498 = vsel %vm2464, %v2429, %v2020
        %v2499 = vsel %vm2464, %v2430, %v2022
        %v2500 = vsel %vm2464, %v2431, %v2024
        %v2501 = vsel %vm2464, %v2432, %v2026
        %v2502 = vsel %vm2464, %v2433, %v2028
        %v2503 = vsel %vm2464, %v2434, %v2030
        %v2504 = vsel %vm2464, %v2435, %v2032
        %v2505 = vsel %vm2464, %v2436, %v2034
        %v2506 = vsel %vm2464, %v2437, %v2036
        %v2507 = vsel %vm2464, %v2438, %v2038
        %v2508 = vsel %vm2464, %v2439, %v2040
        %v2509 = vsel %vm2464, %v2440, %v2042
        %v2510 = vsel %vm2464, %v2441, %v2044
        %v2511 = vsel %vm2464, %v2442, %v2046
        %v2512 = vsel %vm2464, %v2443, %v2048
        %v2513 = vsel %vm2464, %v2444, %v2050
        %v2514 = vsel %vm2464, %v2445, %v2052
        %v2515 = vsel %vm2464, %v2446, %v2054
        %v2516 = vsel %vm2464, %v2447, %v2056
        %v2517 = vsel %vm2464, %v2448, %v2058
        %v2518 = vsel %vm2464, %v2449, %v2060
        %v2519 = vsel %vm2464, %v2450, %v2062
        %v2520 = vsel %vm2464, %v2451, %v2064
        %v2521 = vsel %vm2464, %v2452, %v2066
        %v2522 = vsel %vm2464, %v2453, %v2068
        %v2523 = vsel %vm2464, %v2454, %v2070
        %v2524 = vsel %vm2464, %v2455, %v2072
        %v2525 = vsel %vm2464, %v2456, %v2074
        %v2526 = vsel %vm2464, %v2457, %v2076
        %v2527 = vsel %vm2464, %v2458, %v2078
        %v2528 = vsel %vm2464, %v2459, %v2080
        %v2529 = vsel %vm2464, %v2460, %v2082
        %v2530 = vsel %vm2464, %v2461, %v2084
        %v2531 = vsel %vm2464, %v2462, %v2086
        %v2532 = vsel %vm2464, %v2463, %v2088
        %vm2533 = vcmask 195584
        %v2534 = vsel %vm2533, %v2465, %v2192
        %v2535 = vsel %vm2533, %v2466, %v2194
        %v2536 = vsel %vm2533, %v2467, %v2196
        %v2537 = vsel %vm2533, %v2468, %v2198
        %v2538 = vsel %vm2533, %v2469, %v2200
        %v2539 = vsel %vm2533, %v2470, %v2202
        %v2540 = vsel %vm2533, %v2471, %v2204
        %v2541 = vsel %vm2533, %v2472, %v2206
        %v2542 = vsel %vm2533, %v2473, %v2208
        %v2543 = vsel %vm2533, %v2474, %v2210
        %v2544 = vsel %vm2533, %v2475, %v2212
        %v2545 = vsel %vm2533, %v2476, %v2214
        %v2546 = vsel %vm2533, %v2477, %v2216
        %v2547 = vsel %vm2533, %v2478, %v2218
        %v2548 = vsel %vm2533, %v2479, %v2220
        %v2549 = vsel %vm2533, %v2480, %v2222
        %v2550 = vsel %vm2533, %v2481, %v2224
        %v2551 = vsel %vm2533, %v2482, %v2226
        %v2552 = vsel %vm2533, %v2483, %v2228
        %v2553 = vsel %vm2533, %v2484, %v2230
        %v2554 = vsel %vm2533, %v2485, %v2232
        %v2555 = vsel %vm2533, %v2486, %v2234
        %v2556 = vsel %vm2533, %v2487, %v2236
        %v2557 = vsel %vm2533, %v2488, %v2238
        %v2558 = vsel %vm2533, %v2489, %v2240
        %v2559 = vsel %vm2533, %v2490, %v2242
        %v2560 = vsel %vm2533, %v2491, %v2244
        %v2561 = vsel %vm2533, %v2492, %v2246
        %v2562 = vsel %vm2533, %v2493, %v2248
        %v2563 = vsel %vm2533, %v2494, %v2250
        %v2564 = vsel %vm2533, %v2495, %v2252
        %v2565 = vsel %vm2533, %v2496, %v2254
        %v2566 = vsel %vm2533, %v2497, %v2256
        %v2567 = vsel %vm2533, %v2498, %v2258
        %v2568 = vsel %vm2533, %v2499, %v2260
        %v2569 = vsel %vm2533, %v2500, %v2262
        %v2570 = vsel %vm2533, %v2501, %v2264
        %v2571 = vsel %vm2533, %v2502, %v2266
        %v2572 = vsel %vm2533, %v2503, %v2268
        %v2573 = vsel %vm2533, %v2504, %v2270
        %v2574 = vsel %vm2533, %v2505, %v2272
        %v2575 = vsel %vm2533, %v2506, %v2274
        %v2576 = vsel %vm2533, %v2507, %v2276
        %v2577 = vsel %vm2533, %v2508, %v2278
        %v2578 = vsel %vm2533, %v2509, %v2280
        %v2579 = vsel %vm2533, %v2510, %v2282
        %v2580 = vsel %vm2533, %v2511, %v2284
        %v2581 = vsel %vm2533, %v2512, %v2286
        %v2582 = vsel %vm2533, %v2513, %v2288
        %v2583 = vsel %vm2533, %v2514, %v2290
        %v2584 = vsel %vm2533, %v2515, %v2292
        %v2585 = vsel %vm2533, %v2516, %v2294
        %v2586 = vsel %vm2533, %v2517, %v2296
        %v2587 = vsel %vm2533, %v2518, %v2298
        %v2588 = vsel %vm2533, %v2519, %v2300
        %v2589 = vsel %vm2533, %v2520, %v2302
        %v2590 = vsel %vm2533, %v2521, %v2304
        %v2591 = vsel %vm2533, %v2522, %v2306
        %v2592 = vsel %vm2533, %v2523, %v2308
        %v2593 = vsel %vm2533, %v2524, %v2310
        %v2594 = vsel %vm2533, %v2525, %v2312
        %v2595 = vsel %vm2533, %v2526, %v2314
        %v2596 = vsel %vm2533, %v2527, %v2316
        %v2597 = vsel %vm2533, %v2528, %v2318
        %v2598 = vsel %vm2533, %v2529, %v2320
        %v2599 = vsel %vm2533, %v2530, %v2322
        %v2600 = vsel %vm2533, %v2531, %v2324
        %v2601 = vsel %vm2533, %v2532, %v2326
        %v2602 = vpack.c.bf16 %v2535, %v2534
        %v2603 = vpack.c.bf16 %v2537, %v2536
        %v2604 = vpack.c.bf16 %v2539, %v2538
        %v2605 = vpack.c.bf16 %v2541, %v2540
        %v2606 = vpack.c.bf16 %v2543, %v2542
        %v2607 = vpack.c.bf16 %v2545, %v2544
        %v2608 = vpack.c.bf16 %v2547, %v2546
        %v2609 = vpack.c.bf16 %v2549, %v2548
        %v2610 = vpack.c.bf16 %v2551, %v2550
        %v2611 = vpack.c.bf16 %v2553, %v2552
        %v2612 = vpack.c.bf16 %v2555, %v2554
        %v2613 = vpack.c.bf16 %v2557, %v2556
        %v2614 = vpack.c.bf16 %v2559, %v2558
        %v2615 = vpack.c.bf16 %v2561, %v2560
        %v2616 = vpack.c.bf16 %v2563, %v2562
        %v2617 = vpack.c.bf16 %v2565, %v2564
        %v2618 = vpack.c.bf16 %v2567, %v2566
        %v2619 = vpack.c.bf16 %v2569, %v2568
        %v2620 = vpack.c.bf16 %v2571, %v2570
        %v2621 = vpack.c.bf16 %v2573, %v2572
        %v2622 = vpack.c.bf16 %v2575, %v2574
        %v2623 = vpack.c.bf16 %v2577, %v2576
        %v2624 = vpack.c.bf16 %v2579, %v2578
        %v2625 = vpack.c.bf16 %v2581, %v2580
        %v2626 = vpack.c.bf16 %v2583, %v2582
        %v2627 = vpack.c.bf16 %v2585, %v2584
        %v2628 = vpack.c.bf16 %v2587, %v2586
        %v2629 = vpack.c.bf16 %v2589, %v2588
        %v2630 = vpack.c.bf16 %v2591, %v2590
        %v2631 = vpack.c.bf16 %v2593, %v2592
        %v2632 = vpack.c.bf16 %v2595, %v2594
        %v2633 = vpack.c.bf16 %v2597, %v2596
        %v2634 = vpack.c.bf16 %v2599, %v2598
        %v2635 = vpack.c.bf16 %v2601, %v2600
        %vm2636 = vcmask 261120
        %2637 = vst.msk [vmem:[#allocation2] sm:$0xff] %vm2636, %v2602
        %2638 = vst.msk [vmem:[#allocation2 + $0x8] sm:$0xff] %vm2636, %v2603
        %2639 = vst.msk [vmem:[#allocation2 + $0x10] sm:$0xff] %vm2636, %v2604
        %2640 = vst.msk [vmem:[#allocation2 + $0x18] sm:$0xff] %vm2636, %v2605
        %2641 = vst.msk [vmem:[#allocation2 + $0x20] sm:$0xff] %vm2636, %v2606
        %2642 = vst.msk [vmem:[#allocation2 + $0x28] sm:$0xff] %vm2636, %v2607
        %2643 = vst.msk [vmem:[#allocation2 + $0x30] sm:$0xff] %vm2636, %v2608
        %2644 = vst.msk [vmem:[#allocation2 + $0x38] sm:$0xff] %vm2636, %v2609
        %2645 = vst.msk [vmem:[#allocation2 + $0x40] sm:$0xff] %vm2636, %v2610
        %2646 = vst.msk [vmem:[#allocation2 + $0x48] sm:$0xff] %vm2636, %v2611
        %2647 = vst.msk [vmem:[#allocation2 + $0x50] sm:$0xff] %vm2636, %v2612
        %2648 = vst.msk [vmem:[#allocation2 + $0x58] sm:$0xff] %vm2636, %v2613
        %2649 = vst.msk [vmem:[#allocation2 + $0x60] sm:$0xff] %vm2636, %v2614
        %2650 = vst.msk [vmem:[#allocation2 + $0x68] sm:$0xff] %vm2636, %v2615
        %2651 = vst.msk [vmem:[#allocation2 + $0x70] sm:$0xff] %vm2636, %v2616
        %2652 = vst.msk [vmem:[#allocation2 + $0x78] sm:$0xff] %vm2636, %v2617
        %2653 = vst.msk [vmem:[#allocation2 + $0x80] sm:$0xff] %vm2636, %v2618
        %2654 = vst.msk [vmem:[#allocation2 + $0x88] sm:$0xff] %vm2636, %v2619
        %2655 = vst.msk [vmem:[#allocation2 + $0x90] sm:$0xff] %vm2636, %v2620
        %2656 = vst.msk [vmem:[#allocation2 + $0x98] sm:$0xff] %vm2636, %v2621
        %2657 = vst.msk [vmem:[#allocation2 + $0xa0] sm:$0xff] %vm2636, %v2622
        %2658 = vst.msk [vmem:[#allocation2 + $0xa8] sm:$0xff] %vm2636, %v2623
        %2659 = vst.msk [vmem:[#allocation2 + $0xb0] sm:$0xff] %vm2636, %v2624
        %2660 = vst.msk [vmem:[#allocation2 + $0xb8] sm:$0xff] %vm2636, %v2625
        %2661 = vst.msk [vmem:[#allocation2 + $0xc0] sm:$0xff] %vm2636, %v2626
        %2662 = vst.msk [vmem:[#allocation2 + $0xc8] sm:$0xff] %vm2636, %v2627
        %2663 = vst.msk [vmem:[#allocation2 + $0xd0] sm:$0xff] %vm2636, %v2628
        %2664 = vst.msk [vmem:[#allocation2 + $0xd8] sm:$0xff] %vm2636, %v2629
        %2665 = vst.msk [vmem:[#allocation2 + $0xe0] sm:$0xff] %vm2636, %v2630
        %2666 = vst.msk [vmem:[#allocation2 + $0xe8] sm:$0xff] %vm2636, %v2631
        %2667 = vst.msk [vmem:[#allocation2 + $0xf0] sm:$0xff] %vm2636, %v2632
        %2668 = vst.msk [vmem:[#allocation2 + $0xf8] sm:$0xff] %vm2636, %v2633
        %2669 = vst.msk [vmem:[#allocation2 + $0x100] sm:$0xff] %vm2636, %v2634
        %2670 = vst.msk [vmem:[#allocation2 + $0x108] sm:$0xff] %vm2636, %v2635
        %p2671 = scmp.eq.s32.totalorder %s26, 0
        // Predicated region
        $region45: #{tpu_custom_call.1} parent=31 // pred_check
          %p2672 = pneg %p2671
        $region46: #{tpu_custom_call.1} parent=31 // pred_check_branch
          %2674 = sbr.rel (%p2672) target = $region48
        $region47: #{tpu_custom_call.1} parent=31 // pred_region
          %2675 = vst.msk [vmem:[#allocation2] sm:$0xff] %vm2636, 0
          %s2676 = scalar_lea.vmem [#allocation2], 264
          %2677 = vst.msk [vmem:[%s2676] sm:$0xff] %vm2636, 0
        $region48: #{tpu_custom_call.1} parent=31 // pred_fallthru
          _
        %v2678 = vld [vmem:[#allocation8] sm:$0x1]
        %v2679 = vld [vmem:[#allocation6] sm:$0xf]
        %v2680 = vld [vmem:[#allocation6 + $0x4] sm:$0xf]
        %v2681 = vld [vmem:[#allocation6 + $0x8] sm:$0xf]
        %v2682 = vld [vmem:[#allocation2] sm:$0xff]
        %v2683 = vld [vmem:[#allocation2 + $0x8] sm:$0xff]
        %v2684 = vld [vmem:[#allocation2 + $0x10] sm:$0xff]
        %v2685 = vld [vmem:[#allocation2 + $0x18] sm:$0xff]
        %v2686 = vld [vmem:[#allocation2 + $0x20] sm:$0xff]
        %v2687 = vld [vmem:[#allocation2 + $0x28] sm:$0xff]
        %v2688 = vld [vmem:[#allocation2 + $0x30] sm:$0xff]
        %v2689 = vld [vmem:[#allocation2 + $0x38] sm:$0xff]
        %v2690 = vld [vmem:[#allocation2 + $0x40] sm:$0xff]
        %v2691 = vld [vmem:[#allocation2 + $0x48] sm:$0xff]
        %v2692 = vld [vmem:[#allocation2 + $0x50] sm:$0xff]
        %v2693 = vld [vmem:[#allocation2 + $0x58] sm:$0xff]
        %v2694 = vld [vmem:[#allocation2 + $0x60] sm:$0xff]
        %v2695 = vld [vmem:[#allocation2 + $0x68] sm:$0xff]
        %v2696 = vld [vmem:[#allocation2 + $0x70] sm:$0xff]
        %v2697 = vld [vmem:[#allocation2 + $0x78] sm:$0xff]
        %v2698 = vld [vmem:[#allocation2 + $0x80] sm:$0xff]
        %v2699 = vld [vmem:[#allocation2 + $0x88] sm:$0xff]
        %v2700 = vld [vmem:[#allocation2 + $0x90] sm:$0xff]
        %v2701 = vld [vmem:[#allocation2 + $0x98] sm:$0xff]
        %v2702 = vld [vmem:[#allocation2 + $0xa0] sm:$0xff]
        %v2703 = vld [vmem:[#allocation2 + $0xa8] sm:$0xff]
        %v2704 = vld [vmem:[#allocation2 + $0xb0] sm:$0xff]
        %v2705 = vld [vmem:[#allocation2 + $0xb8] sm:$0xff]
        %v2706 = vld [vmem:[#allocation2 + $0xc0] sm:$0xff]
        %v2707 = vld [vmem:[#allocation2 + $0xc8] sm:$0xff]
        %v2708 = vld [vmem:[#allocation2 + $0xd0] sm:$0xff]
        %v2709 = vld [vmem:[#allocation2 + $0xd8] sm:$0xff]
        %v2710 = vld [vmem:[#allocation2 + $0xe0] sm:$0xff]
        %v2711 = vld [vmem:[#allocation2 + $0xe8] sm:$0xff]
        %v2712 = vld [vmem:[#allocation2 + $0xf0] sm:$0xff]
        %v2713 = vld [vmem:[#allocation2 + $0xf8] sm:$0xff]
        %v2717 = vunpack.c.l.b16 %v2679
        %v2718 = vunpack.c.l.b16 %v2680
        %v2719 = vunpack.c.l.b16 %v2681
        %v2720 = vpack.c.b16 %v2718, %v2717
        %v2721 = vpack.c.b16 %v2719, %v2719
        %v2724 = vsel %vm2533, %v2682, 0
        %v2727 = vsel %vm2533, %v2683, 0
        %v2730 = vsel %vm2533, %v2684, 0
        %v2733 = vsel %vm2533, %v2685, 0
        %v2736 = vsel %vm2533, %v2686, 0
        %v2739 = vsel %vm2533, %v2687, 0
        %v2742 = vsel %vm2533, %v2688, 0
        %v2745 = vsel %vm2533, %v2689, 0
        %v2748 = vsel %vm2533, %v2690, 0
        %v2751 = vsel %vm2533, %v2691, 0
        %v2754 = vsel %vm2533, %v2692, 0
        %v2757 = vsel %vm2533, %v2693, 0
        %v2760 = vsel %vm2533, %v2694, 0
        %v2763 = vsel %vm2533, %v2695, 0
        %v2766 = vsel %vm2533, %v2696, 0
        %v2769 = vsel %vm2533, %v2697, 0
        %v2772 = vsel %vm2533, %v2698, 0
        %v2775 = vsel %vm2533, %v2699, 0
        %v2778 = vsel %vm2533, %v2700, 0
        %v2781 = vsel %vm2533, %v2701, 0
        %v2784 = vsel %vm2533, %v2702, 0
        %v2787 = vsel %vm2533, %v2703, 0
        %v2790 = vsel %vm2533, %v2704, 0
        %v2793 = vsel %vm2533, %v2705, 0
        %v2796 = vsel %vm2533, %v2706, 0
        %v2799 = vsel %vm2533, %v2707, 0
        %v2802 = vsel %vm2533, %v2708, 0
        %v2805 = vsel %vm2533, %v2709, 0
        %v2808 = vsel %vm2533, %v2710, 0
        %v2811 = vsel %vm2533, %v2711, 0
        %v2814 = vsel %vm2533, %v2712, 0
        %v2817 = vsel %vm2533, %v2713, 0
        %vm2819 = vcmask 1043456
        %v2821 = vsel %vm2819, %v2721, 0
        %2823 = vmatprep.subr.bf16.mxu0 0
        %2824 = vmatpush1.bf16.msra.mxu0 %v2720
        %2825 = vmatprep.subr.bf16.mxu0 0
        %2826 = vmatpush1.bf16.msra.mxu0 %v2821
        %2827 = vmatprep.subr.bf16.mxu0 0
        %2828 = vmatpush1.bf16.msra.mxu0 0
        %2829 = vmatprep.subr.bf16.mxu0 0
        %2830 = vmatpush1.bf16.msra.mxu0 0
        %2831 = vmatprep.subr.bf16.mxu0 0
        %2832 = vmatpush1.bf16.msra.mxu0 0
        %2833 = vmatprep.subr.bf16.mxu0 0
        %2834 = vmatpush1.bf16.msra.mxu0 0
        %2835 = vmatprep.subr.bf16.mxu0 0
        %2836 = vmatpush1.bf16.msra.mxu0 0
        %2837 = vmatprep.subr.bf16.mxu0 0
        %2838 = vmatpush1.bf16.msra.mxu0 0
        %2839 = vmatprep.subr.bf16.mxu0 0
        %2840 = vmatpush1.bf16.msra.mxu0 0
        %2841 = vmatprep.subr.bf16.mxu0 0
        %2842 = vmatpush1.bf16.msra.mxu0 0
        %2843 = vmatprep.subr.bf16.mxu0 0
        %2844 = vmatpush1.bf16.msra.mxu0 0
        %2845 = vmatprep.subr.bf16.mxu0 0
        %2846 = vmatpush1.bf16.msra.mxu0 0
        %2847 = vmatprep.subr.bf16.mxu0 0
        %2848 = vmatpush1.bf16.msra.mxu0 0
        %2849 = vmatprep.subr.bf16.mxu0 0
        %2850 = vmatpush1.bf16.msra.mxu0 0
        %2851 = vmatprep.subr.bf16.mxu0 0
        %2852 = vmatpush1.bf16.msra.mxu0 0
        %2853 = vmatprep.subr.bf16.mxu0 0
        %2854 = vmatpush1.bf16.msra.mxu0 0
        %2855 = vmatprep.mubr.bf16.mxu0 0
        %2856 = vmatmul.mubr.bf16.gmra.mrb[0].mxu0 %v2724
        %v2857 = vpop.f32.mrb[0].mxu0
        %v2858 = vadd.f32 0.0, %v2857
        %v2859 = vpop.f32.mrb[0].mxu0
        %v2860 = vpop.f32.mrb[0].mxu0
        %v2861 = vadd.f32 0.0, %v2860
        %v2862 = vpop.f32.mrb[0].mxu0
        %2863 = vmatprep.mubr.bf16.mxu0 0
        %2864 = vmatmul.mubr.bf16.gmra.mrb[0].mxu0 %v2727
        %v2865 = vpop.f32.mrb[0].mxu0
        %v2866 = vadd.f32 0.0, %v2865
        %v2867 = vpop.f32.mrb[0].mxu0
        %v2868 = vpop.f32.mrb[0].mxu0
        %v2869 = vadd.f32 0.0, %v2868
        %v2870 = vpop.f32.mrb[0].mxu0
        %2871 = vmatprep.mubr.bf16.mxu0 0
        %2872 = vmatmul.mubr.bf16.gmra.mrb[0].mxu0 %v2730
        %v2873 = vpop.f32.mrb[0].mxu0
        %v2874 = vadd.f32 0.0, %v2873
        %v2875 = vpop.f32.mrb[0].mxu0
        %v2876 = vpop.f32.mrb[0].mxu0
        %v2877 = vadd.f32 0.0, %v2876
        %v2878 = vpop.f32.mrb[0].mxu0
        %2879 = vmatprep.mubr.bf16.mxu0 0
        %2880 = vmatmul.mubr.bf16.gmra.mrb[0].mxu0 %v2733
        %v2881 = vpop.f32.mrb[0].mxu0
        %v2882 = vadd.f32 0.0, %v2881
        %v2883 = vpop.f32.mrb[0].mxu0
        %v2884 = vpop.f32.mrb[0].mxu0
        %v2885 = vadd.f32 0.0, %v2884
        %v2886 = vpop.f32.mrb[0].mxu0
        %2887 = vmatprep.mubr.bf16.mxu0 0
        %2888 = vmatmul.mubr.bf16.gmra.mrb[0].mxu0 %v2736
        %v2889 = vpop.f32.mrb[0].mxu0
        %v2890 = vadd.f32 0.0, %v2889
        %v2891 = vpop.f32.mrb[0].mxu0
        %v2892 = vpop.f32.mrb[0].mxu0
        %v2893 = vadd.f32 0.0, %v2892
        %v2894 = vpop.f32.mrb[0].mxu0
        %2895 = vmatprep.mubr.bf16.mxu0 0
        %2896 = vmatmul.mubr.bf16.gmra.mrb[0].mxu0 %v2739
        %v2897 = vpop.f32.mrb[0].mxu0
        %v2898 = vadd.f32 0.0, %v2897
        %v2899 = vpop.f32.mrb[0].mxu0
        %v2900 = vpop.f32.mrb[0].mxu0
        %v2901 = vadd.f32 0.0, %v2900
        %v2902 = vpop.f32.mrb[0].mxu0
        %2903 = vmatprep.mubr.bf16.mxu0 0
        %2904 = vmatmul.mubr.bf16.gmra.mrb[0].mxu0 %v2742
        %v2905 = vpop.f32.mrb[0].mxu0
        %v2906 = vadd.f32 0.0, %v2905
        %v2907 = vpop.f32.mrb[0].mxu0
        %v2908 = vpop.f32.mrb[0].mxu0
        %v2909 = vadd.f32 0.0, %v2908
        %v2910 = vpop.f32.mrb[0].mxu0
        %2911 = vmatprep.mubr.bf16.mxu0 0
        %2912 = vmatmul.mubr.bf16.gmra.mrb[0].mxu0 %v2745
        %v2913 = vpop.f32.mrb[0].mxu0
        %v2914 = vadd.f32 0.0, %v2913
        %v2915 = vpop.f32.mrb[0].mxu0
        %v2916 = vpop.f32.mrb[0].mxu0
        %v2917 = vadd.f32 0.0, %v2916
        %v2918 = vpop.f32.mrb[0].mxu0
        %2919 = vmatprep.mubr.bf16.mxu0 0
        %2920 = vmatmul.mubr.bf16.gmra.mrb[0].mxu0 %v2748
        %v2921 = vpop.f32.mrb[0].mxu0
        %v2922 = vadd.f32 0.0, %v2921
        %v2923 = vpop.f32.mrb[0].mxu0
        %v2924 = vpop.f32.mrb[0].mxu0
        %v2925 = vadd.f32 0.0, %v2924
        %v2926 = vpop.f32.mrb[0].mxu0
        %2927 = vmatprep.mubr.bf16.mxu0 0
        %2928 = vmatmul.mubr.bf16.gmra.mrb[0].mxu0 %v2751
        %v2929 = vpop.f32.mrb[0].mxu0
        %v2930 = vadd.f32 0.0, %v2929
        %v2931 = vpop.f32.mrb[0].mxu0
        %v2932 = vpop.f32.mrb[0].mxu0
        %v2933 = vadd.f32 0.0, %v2932
        %v2934 = vpop.f32.mrb[0].mxu0
        %2935 = vmatprep.mubr.bf16.mxu0 0
        %2936 = vmatmul.mubr.bf16.gmra.mrb[0].mxu0 %v2754
        %v2937 = vpop.f32.mrb[0].mxu0
        %v2938 = vadd.f32 0.0, %v2937
        %v2939 = vpop.f32.mrb[0].mxu0
        %v2940 = vpop.f32.mrb[0].mxu0
        %v2941 = vadd.f32 0.0, %v2940
        %v2942 = vpop.f32.mrb[0].mxu0
        %2943 = vmatprep.mubr.bf16.mxu0 0
        %2944 = vmatmul.mubr.bf16.gmra.mrb[0].mxu0 %v2757
        %v2945 = vpop.f32.mrb[0].mxu0
        %v2946 = vadd.f32 0.0, %v2945
        %v2947 = vpop.f32.mrb[0].mxu0
        %v2948 = vpop.f32.mrb[0].mxu0
        %v2949 = vadd.f32 0.0, %v2948
        %v2950 = vpop.f32.mrb[0].mxu0
        %2951 = vmatprep.mubr.bf16.mxu0 0
        %2952 = vmatmul.mubr.bf16.gmra.mrb[0].mxu0 %v2760
        %v2953 = vpop.f32.mrb[0].mxu0
        %v2954 = vadd.f32 0.0, %v2953
        %v2955 = vpop.f32.mrb[0].mxu0
        %v2956 = vpop.f32.mrb[0].mxu0
        %v2957 = vadd.f32 0.0, %v2956
        %v2958 = vpop.f32.mrb[0].mxu0
        %2959 = vmatprep.mubr.bf16.mxu0 0
        %2960 = vmatmul.mubr.bf16.gmra.mrb[0].mxu0 %v2763
        %v2961 = vpop.f32.mrb[0].mxu0
        %v2962 = vadd.f32 0.0, %v2961
        %v2963 = vpop.f32.mrb[0].mxu0
        %v2964 = vpop.f32.mrb[0].mxu0
        %v2965 = vadd.f32 0.0, %v2964
        %v2966 = vpop.f32.mrb[0].mxu0
        %2967 = vmatprep.mubr.bf16.mxu0 0
        %2968 = vmatmul.mubr.bf16.gmra.mrb[0].mxu0 %v2766
        %v2969 = vpop.f32.mrb[0].mxu0
        %v2970 = vadd.f32 0.0, %v2969
        %v2971 = vpop.f32.mrb[0].mxu0
        %v2972 = vpop.f32.mrb[0].mxu0
        %v2973 = vadd.f32 0.0, %v2972
        %v2974 = vpop.f32.mrb[0].mxu0
        %2975 = vmatprep.mubr.bf16.mxu0 0
        %2976 = vmatmul.mubr.bf16.gmra.mrb[0].mxu0 %v2769
        %v2977 = vpop.f32.mrb[0].mxu0
        %v2978 = vadd.f32 0.0, %v2977
        %v2979 = vpop.f32.mrb[0].mxu0
        %v2980 = vpop.f32.mrb[0].mxu0
        %v2981 = vadd.f32 0.0, %v2980
        %v2982 = vpop.f32.mrb[0].mxu0
        %2983 = vmatprep.mubr.bf16.mxu0 0
        %2984 = vmatmul.mubr.bf16.gmra.mrb[0].mxu0 %v2772
        %v2985 = vpop.f32.mrb[0].mxu0
        %v2986 = vadd.f32 0.0, %v2985
        %v2987 = vpop.f32.mrb[0].mxu0
        %v2988 = vpop.f32.mrb[0].mxu0
        %v2989 = vadd.f32 0.0, %v2988
        %v2990 = vpop.f32.mrb[0].mxu0
        %2991 = vmatprep.mubr.bf16.mxu0 0
        %2992 = vmatmul.mubr.bf16.gmra.mrb[0].mxu0 %v2775
        %v2993 = vpop.f32.mrb[0].mxu0
        %v2994 = vadd.f32 0.0, %v2993
        %v2995 = vpop.f32.mrb[0].mxu0
        %v2996 = vpop.f32.mrb[0].mxu0
        %v2997 = vadd.f32 0.0, %v2996
        %v2998 = vpop.f32.mrb[0].mxu0
        %2999 = vmatprep.mubr.bf16.mxu0 0
        %3000 = vmatmul.mubr.bf16.gmra.mrb[0].mxu0 %v2778
        %v3001 = vpop.f32.mrb[0].mxu0
        %v3002 = vadd.f32 0.0, %v3001
        %v3003 = vpop.f32.mrb[0].mxu0
        %v3004 = vpop.f32.mrb[0].mxu0
        %v3005 = vadd.f32 0.0, %v3004
        %v3006 = vpop.f32.mrb[0].mxu0
        %3007 = vmatprep.mubr.bf16.mxu0 0
        %3008 = vmatmul.mubr.bf16.gmra.mrb[0].mxu0 %v2781
        %v3009 = vpop.f32.mrb[0].mxu0
        %v3010 = vadd.f32 0.0, %v3009
        %v3011 = vpop.f32.mrb[0].mxu0
        %v3012 = vpop.f32.mrb[0].mxu0
        %v3013 = vadd.f32 0.0, %v3012
        %v3014 = vpop.f32.mrb[0].mxu0
        %3015 = vmatprep.mubr.bf16.mxu0 0
        %3016 = vmatmul.mubr.bf16.gmra.mrb[0].mxu0 %v2784
        %v3017 = vpop.f32.mrb[0].mxu0
        %v3018 = vadd.f32 0.0, %v3017
        %v3019 = vpop.f32.mrb[0].mxu0
        %v3020 = vpop.f32.mrb[0].mxu0
        %v3021 = vadd.f32 0.0, %v3020
        %v3022 = vpop.f32.mrb[0].mxu0
        %3023 = vmatprep.mubr.bf16.mxu0 0
        %3024 = vmatmul.mubr.bf16.gmra.mrb[0].mxu0 %v2787
        %v3025 = vpop.f32.mrb[0].mxu0
        %v3026 = vadd.f32 0.0, %v3025
        %v3027 = vpop.f32.mrb[0].mxu0
        %v3028 = vpop.f32.mrb[0].mxu0
        %v3029 = vadd.f32 0.0, %v3028
        %v3030 = vpop.f32.mrb[0].mxu0
        %3031 = vmatprep.mubr.bf16.mxu0 0
        %3032 = vmatmul.mubr.bf16.gmra.mrb[0].mxu0 %v2790
        %v3033 = vpop.f32.mrb[0].mxu0
        %v3034 = vadd.f32 0.0, %v3033
        %v3035 = vpop.f32.mrb[0].mxu0
        %v3036 = vpop.f32.mrb[0].mxu0
        %v3037 = vadd.f32 0.0, %v3036
        %v3038 = vpop.f32.mrb[0].mxu0
        %3039 = vmatprep.mubr.bf16.mxu0 0
        %3040 = vmatmul.mubr.bf16.gmra.mrb[0].mxu0 %v2793
        %v3041 = vpop.f32.mrb[0].mxu0
        %v3042 = vadd.f32 0.0, %v3041
        %v3043 = vpop.f32.mrb[0].mxu0
        %v3044 = vpop.f32.mrb[0].mxu0
        %v3045 = vadd.f32 0.0, %v3044
        %v3046 = vpop.f32.mrb[0].mxu0
        %3047 = vmatprep.mubr.bf16.mxu0 0
        %3048 = vmatmul.mubr.bf16.gmra.mrb[0].mxu0 %v2796
        %v3049 = vpop.f32.mrb[0].mxu0
        %v3050 = vadd.f32 0.0, %v3049
        %v3051 = vpop.f32.mrb[0].mxu0
        %v3052 = vpop.f32.mrb[0].mxu0
        %v3053 = vadd.f32 0.0, %v3052
        %v3054 = vpop.f32.mrb[0].mxu0
        %3055 = vmatprep.mubr.bf16.mxu0 0
        %3056 = vmatmul.mubr.bf16.gmra.mrb[0].mxu0 %v2799
        %v3057 = vpop.f32.mrb[0].mxu0
        %v3058 = vadd.f32 0.0, %v3057
        %v3059 = vpop.f32.mrb[0].mxu0
        %v3060 = vpop.f32.mrb[0].mxu0
        %v3061 = vadd.f32 0.0, %v3060
        %v3062 = vpop.f32.mrb[0].mxu0
        %3063 = vmatprep.mubr.bf16.mxu0 0
        %3064 = vmatmul.mubr.bf16.gmra.mrb[0].mxu0 %v2802
        %v3065 = vpop.f32.mrb[0].mxu0
        %v3066 = vadd.f32 0.0, %v3065
        %v3067 = vpop.f32.mrb[0].mxu0
        %v3068 = vpop.f32.mrb[0].mxu0
        %v3069 = vadd.f32 0.0, %v3068
        %v3070 = vpop.f32.mrb[0].mxu0
        %3071 = vmatprep.mubr.bf16.mxu0 0
        %3072 = vmatmul.mubr.bf16.gmra.mrb[0].mxu0 %v2805
        %v3073 = vpop.f32.mrb[0].mxu0
        %v3074 = vadd.f32 0.0, %v3073
        %v3075 = vpop.f32.mrb[0].mxu0
        %v3076 = vpop.f32.mrb[0].mxu0
        %v3077 = vadd.f32 0.0, %v3076
        %v3078 = vpop.f32.mrb[0].mxu0
        %3079 = vmatprep.mubr.bf16.mxu0 0
        %3080 = vmatmul.mubr.bf16.gmra.mrb[0].mxu0 %v2808
        %v3081 = vpop.f32.mrb[0].mxu0
        %v3082 = vadd.f32 0.0, %v3081
        %v3083 = vpop.f32.mrb[0].mxu0
        %v3084 = vpop.f32.mrb[0].mxu0
        %v3085 = vadd.f32 0.0, %v3084
        %v3086 = vpop.f32.mrb[0].mxu0
        %3087 = vmatprep.mubr.bf16.mxu0 0
        %3088 = vmatmul.mubr.bf16.gmra.mrb[0].mxu0 %v2811
        %v3089 = vpop.f32.mrb[0].mxu0
        %v3090 = vadd.f32 0.0, %v3089
        %v3091 = vpop.f32.mrb[0].mxu0
        %v3092 = vpop.f32.mrb[0].mxu0
        %v3093 = vadd.f32 0.0, %v3092
        %v3094 = vpop.f32.mrb[0].mxu0
        %3095 = vmatprep.mubr.bf16.mxu0 0
        %3096 = vmatmul.mubr.bf16.gmra.mrb[0].mxu0 %v2814
        %v3097 = vpop.f32.mrb[0].mxu0
        %v3098 = vadd.f32 0.0, %v3097
        %v3099 = vpop.f32.mrb[0].mxu0
        %v3100 = vpop.f32.mrb[0].mxu0
        %v3101 = vadd.f32 0.0, %v3100
        %v3102 = vpop.f32.mrb[0].mxu0
        %3103 = vmatprep.mubr.bf16.mxu0 0
        %3104 = vmatmul.mubr.bf16.gmra.mrb[0].mxu0 %v2817
        %v3105 = vpop.f32.mrb[0].mxu0
        %v3106 = vadd.f32 0.0, %v3105
        %v3107 = vpop.f32.mrb[0].mxu0
        %v3108 = vpop.f32.mrb[0].mxu0
        %v3109 = vadd.f32 0.0, %v3108
        %v3110 = vpop.f32.mrb[0].mxu0
        %3111 = vdwg.mxu0
        %v3113 = vlaneseq
        %v3114 = vshrl.u32 %v3113, 7
        %v3115 = vsub.s32 0, %v3114
        %v3116 = vrot.slane %v2678, %v3115
        %v3118 = vadd.f32 %v3116, %v2858
        %v3119 = vadd.f32 %v3116, %v2861
        %v3120 = vadd.f32 %v3116, %v2866
        %v3121 = vadd.f32 %v3116, %v2869
        %v3122 = vadd.f32 %v3116, %v2874
        %v3123 = vadd.f32 %v3116, %v2877
        %v3124 = vadd.f32 %v3116, %v2882
        %v3125 = vadd.f32 %v3116, %v2885
        %v3126 = vadd.f32 %v3116, %v2890
        %v3127 = vadd.f32 %v3116, %v2893
        %v3128 = vadd.f32 %v3116, %v2898
        %v3129 = vadd.f32 %v3116, %v2901
        %v3130 = vadd.f32 %v3116, %v2906
        %v3131 = vadd.f32 %v3116, %v2909
        %v3132 = vadd.f32 %v3116, %v2914
        %v3133 = vadd.f32 %v3116, %v2917
        %v3134 = vadd.f32 %v3116, %v2922
        %v3135 = vadd.f32 %v3116, %v2925
        %v3136 = vadd.f32 %v3116, %v2930
        %v3137 = vadd.f32 %v3116, %v2933
        %v3138 = vadd.f32 %v3116, %v2938
        %v3139 = vadd.f32 %v3116, %v2941
        %v3140 = vadd.f32 %v3116, %v2946
        %v3141 = vadd.f32 %v3116, %v2949
        %v3142 = vadd.f32 %v3116, %v2954
        %v3143 = vadd.f32 %v3116, %v2957
        %v3144 = vadd.f32 %v3116, %v2962
        %v3145 = vadd.f32 %v3116, %v2965
        %v3146 = vadd.f32 %v3116, %v2970
        %v3147 = vadd.f32 %v3116, %v2973
        %v3148 = vadd.f32 %v3116, %v2978
        %v3149 = vadd.f32 %v3116, %v2981
        %v3150 = vadd.f32 %v3116, %v2986
        %v3151 = vadd.f32 %v3116, %v2989
        %v3152 = vadd.f32 %v3116, %v2994
        %v3153 = vadd.f32 %v3116, %v2997
        %v3154 = vadd.f32 %v3116, %v3002
        %v3155 = vadd.f32 %v3116, %v3005
        %v3156 = vadd.f32 %v3116, %v3010
        %v3157 = vadd.f32 %v3116, %v3013
        %v3158 = vadd.f32 %v3116, %v3018
        %v3159 = vadd.f32 %v3116, %v3021
        %v3160 = vadd.f32 %v3116, %v3026
        %v3161 = vadd.f32 %v3116, %v3029
        %v3162 = vadd.f32 %v3116, %v3034
        %v3163 = vadd.f32 %v3116, %v3037
        %v3164 = vadd.f32 %v3116, %v3042
        %v3165 = vadd.f32 %v3116, %v3045
        %v3166 = vadd.f32 %v3116, %v3050
        %v3167 = vadd.f32 %v3116, %v3053
        %v3168 = vadd.f32 %v3116, %v3058
        %v3169 = vadd.f32 %v3116, %v3061
        %v3170 = vadd.f32 %v3116, %v3066
        %v3171 = vadd.f32 %v3116, %v3069
        %v3172 = vadd.f32 %v3116, %v3074
        %v3173 = vadd.f32 %v3116, %v3077
        %v3174 = vadd.f32 %v3116, %v3082
        %v3175 = vadd.f32 %v3116, %v3085
        %v3176 = vadd.f32 %v3116, %v3090
        %v3177 = vadd.f32 %v3116, %v3093
        %v3178 = vadd.f32 %v3116, %v3098
        %v3179 = vadd.f32 %v3116, %v3101
        %v3180 = vadd.f32 %v3116, %v3106
        %v3181 = vadd.f32 %v3116, %v3109
        %3214 = vrot.lane.b32.xlu0 %v2682, 120
        %v3215 = vpop.permute.xlu0 %3214
        %3216 = vrot.lane.b32.xlu0 %v2683, 120
        %v3217 = vpop.permute.xlu0 %3216
        %3218 = vrot.lane.b32.xlu0 %v2684, 120
        %v3219 = vpop.permute.xlu0 %3218
        %3220 = vrot.lane.b32.xlu0 %v2685, 120
        %v3221 = vpop.permute.xlu0 %3220
        %3222 = vrot.lane.b32.xlu0 %v2686, 120
        %v3223 = vpop.permute.xlu0 %3222
        %3224 = vrot.lane.b32.xlu0 %v2687, 120
        %v3225 = vpop.permute.xlu0 %3224
        %3226 = vrot.lane.b32.xlu0 %v2688, 120
        %v3227 = vpop.permute.xlu0 %3226
        %3228 = vrot.lane.b32.xlu0 %v2689, 120
        %v3229 = vpop.permute.xlu0 %3228
        %3230 = vrot.lane.b32.xlu0 %v2690, 120
        %v3231 = vpop.permute.xlu0 %3230
        %3232 = vrot.lane.b32.xlu0 %v2691, 120
        %v3233 = vpop.permute.xlu0 %3232
        %3234 = vrot.lane.b32.xlu0 %v2692, 120
        %v3235 = vpop.permute.xlu0 %3234
        %3236 = vrot.lane.b32.xlu0 %v2693, 120
        %v3237 = vpop.permute.xlu0 %3236
        %3238 = vrot.lane.b32.xlu0 %v2694, 120
        %v3239 = vpop.permute.xlu0 %3238
        %3240 = vrot.lane.b32.xlu0 %v2695, 120
        %v3241 = vpop.permute.xlu0 %3240
        %3242 = vrot.lane.b32.xlu0 %v2696, 120
        %v3243 = vpop.permute.xlu0 %3242
        %3244 = vrot.lane.b32.xlu0 %v2697, 120
        %v3245 = vpop.permute.xlu0 %3244
        %3246 = vrot.lane.b32.xlu0 %v2698, 120
        %v3247 = vpop.permute.xlu0 %3246
        %3248 = vrot.lane.b32.xlu0 %v2699, 120
        %v3249 = vpop.permute.xlu0 %3248
        %3250 = vrot.lane.b32.xlu0 %v2700, 120
        %v3251 = vpop.permute.xlu0 %3250
        %3252 = vrot.lane.b32.xlu0 %v2701, 120
        %v3253 = vpop.permute.xlu0 %3252
        %3254 = vrot.lane.b32.xlu0 %v2702, 120
        %v3255 = vpop.permute.xlu0 %3254
        %3256 = vrot.lane.b32.xlu0 %v2703, 120
        %v3257 = vpop.permute.xlu0 %3256
        %3258 = vrot.lane.b32.xlu0 %v2704, 120
        %v3259 = vpop.permute.xlu0 %3258
        %3260 = vrot.lane.b32.xlu0 %v2705, 120
        %v3261 = vpop.permute.xlu0 %3260
        %3262 = vrot.lane.b32.xlu0 %v2706, 120
        %v3263 = vpop.permute.xlu0 %3262
        %3264 = vrot.lane.b32.xlu0 %v2707, 120
        %v3265 = vpop.permute.xlu0 %3264
        %3266 = vrot.lane.b32.xlu0 %v2708, 120
        %v3267 = vpop.permute.xlu0 %3266
        %3268 = vrot.lane.b32.xlu0 %v2709, 120
        %v3269 = vpop.permute.xlu0 %3268
        %3270 = vrot.lane.b32.xlu0 %v2710, 120
        %v3271 = vpop.permute.xlu0 %3270
        %3272 = vrot.lane.b32.xlu0 %v2711, 120
        %v3273 = vpop.permute.xlu0 %3272
        %3274 = vrot.lane.b32.xlu0 %v2712, 120
        %v3275 = vpop.permute.xlu0 %3274
        %3276 = vrot.lane.b32.xlu0 %v2713, 120
        %v3277 = vpop.permute.xlu0 %3276
        %v3279 = vsel %vm2533, %v3215, 0
        %v3282 = vsel %vm2533, %v3217, 0
        %v3285 = vsel %vm2533, %v3219, 0
        %v3288 = vsel %vm2533, %v3221, 0
        %v3291 = vsel %vm2533, %v3223, 0
        %v3294 = vsel %vm2533, %v3225, 0
        %v3297 = vsel %vm2533, %v3227, 0
        %v3300 = vsel %vm2533, %v3229, 0
        %v3303 = vsel %vm2533, %v3231, 0
        %v3306 = vsel %vm2533, %v3233, 0
        %v3309 = vsel %vm2533, %v3235, 0
        %v3312 = vsel %vm2533, %v3237, 0
        %v3315 = vsel %vm2533, %v3239, 0
        %v3318 = vsel %vm2533, %v3241, 0
        %v3321 = vsel %vm2533, %v3243, 0
        %v3324 = vsel %vm2533, %v3245, 0
        %v3327 = vsel %vm2533, %v3247, 0
        %v3330 = vsel %vm2533, %v3249, 0
        %v3333 = vsel %vm2533, %v3251, 0
        %v3336 = vsel %vm2533, %v3253, 0
        %v3339 = vsel %vm2533, %v3255, 0
        %v3342 = vsel %vm2533, %v3257, 0
        %v3345 = vsel %vm2533, %v3259, 0
        %v3348 = vsel %vm2533, %v3261, 0
        %v3351 = vsel %vm2533, %v3263, 0
        %v3354 = vsel %vm2533, %v3265, 0
        %v3357 = vsel %vm2533, %v3267, 0
        %v3360 = vsel %vm2533, %v3269, 0
        %v3363 = vsel %vm2533, %v3271, 0
        %v3366 = vsel %vm2533, %v3273, 0
        %v3369 = vsel %vm2533, %v3275, 0
        %v3372 = vsel %vm2533, %v3277, 0
        %3374 = vmatprep.subr.bf16.mxu0 0
        %3375 = vmatpush1.bf16.msra.mxu0 %v2720
        %3376 = vmatprep.subr.bf16.mxu0 0
        %3377 = vmatpush1.bf16.msra.mxu0 %v2821
        %3378 = vmatprep.subr.bf16.mxu0 0
        %3379 = vmatpush1.bf16.msra.mxu0 0
        %3380 = vmatprep.subr.bf16.mxu0 0
        %3381 = vmatpush1.bf16.msra.mxu0 0
        %3382 = vmatprep.subr.bf16.mxu0 0
        %3383 = vmatpush1.bf16.msra.mxu0 0
        %3384 = vmatprep.subr.bf16.mxu0 0
        %3385 = vmatpush1.bf16.msra.mxu0 0
        %3386 = vmatprep.subr.bf16.mxu0 0
        %3387 = vmatpush1.bf16.msra.mxu0 0
        %3388 = vmatprep.subr.bf16.mxu0 0
        %3389 = vmatpush1.bf16.msra.mxu0 0
        %3390 = vmatprep.subr.bf16.mxu0 0
        %3391 = vmatpush1.bf16.msra.mxu0 0
        %3392 = vmatprep.subr.bf16.mxu0 0
        %3393 = vmatpush1.bf16.msra.mxu0 0
        %3394 = vmatprep.subr.bf16.mxu0 0
        %3395 = vmatpush1.bf16.msra.mxu0 0
        %3396 = vmatprep.subr.bf16.mxu0 0
        %3397 = vmatpush1.bf16.msra.mxu0 0
        %3398 = vmatprep.subr.bf16.mxu0 0
        %3399 = vmatpush1.bf16.msra.mxu0 0
        %3400 = vmatprep.subr.bf16.mxu0 0
        %3401 = vmatpush1.bf16.msra.mxu0 0
        %3402 = vmatprep.subr.bf16.mxu0 0
        %3403 = vmatpush1.bf16.msra.mxu0 0
        %3404 = vmatprep.subr.bf16.mxu0 0
        %3405 = vmatpush1.bf16.msra.mxu0 0
        %3406 = vmatprep.mubr.bf16.mxu0 0
        %3407 = vmatmul.mubr.bf16.gmra.mrb[0].mxu0 %v3279
        %v3408 = vpop.f32.mrb[0].mxu0
        %v3409 = vadd.f32 0.0, %v3408
        %v3410 = vpop.f32.mrb[0].mxu0
        %v3411 = vpop.f32.mrb[0].mxu0
        %v3412 = vadd.f32 0.0, %v3411
        %v3413 = vpop.f32.mrb[0].mxu0
        %3414 = vmatprep.mubr.bf16.mxu0 0
        %3415 = vmatmul.mubr.bf16.gmra.mrb[0].mxu0 %v3282
        %v3416 = vpop.f32.mrb[0].mxu0
        %v3417 = vadd.f32 0.0, %v3416
        %v3418 = vpop.f32.mrb[0].mxu0
        %v3419 = vpop.f32.mrb[0].mxu0
        %v3420 = vadd.f32 0.0, %v3419
        %v3421 = vpop.f32.mrb[0].mxu0
        %3422 = vmatprep.mubr.bf16.mxu0 0
        %3423 = vmatmul.mubr.bf16.gmra.mrb[0].mxu0 %v3285
        %v3424 = vpop.f32.mrb[0].mxu0
        %v3425 = vadd.f32 0.0, %v3424
        %v3426 = vpop.f32.mrb[0].mxu0
        %v3427 = vpop.f32.mrb[0].mxu0
        %v3428 = vadd.f32 0.0, %v3427
        %v3429 = vpop.f32.mrb[0].mxu0
        %3430 = vmatprep.mubr.bf16.mxu0 0
        %3431 = vmatmul.mubr.bf16.gmra.mrb[0].mxu0 %v3288
        %v3432 = vpop.f32.mrb[0].mxu0
        %v3433 = vadd.f32 0.0, %v3432
        %v3434 = vpop.f32.mrb[0].mxu0
        %v3435 = vpop.f32.mrb[0].mxu0
        %v3436 = vadd.f32 0.0, %v3435
        %v3437 = vpop.f32.mrb[0].mxu0
        %3438 = vmatprep.mubr.bf16.mxu0 0
        %3439 = vmatmul.mubr.bf16.gmra.mrb[0].mxu0 %v3291
        %v3440 = vpop.f32.mrb[0].mxu0
        %v3441 = vadd.f32 0.0, %v3440
        %v3442 = vpop.f32.mrb[0].mxu0
        %v3443 = vpop.f32.mrb[0].mxu0
        %v3444 = vadd.f32 0.0, %v3443
        %v3445 = vpop.f32.mrb[0].mxu0
        %3446 = vmatprep.mubr.bf16.mxu0 0
        %3447 = vmatmul.mubr.bf16.gmra.mrb[0].mxu0 %v3294
        %v3448 = vpop.f32.mrb[0].mxu0
        %v3449 = vadd.f32 0.0, %v3448
        %v3450 = vpop.f32.mrb[0].mxu0
        %v3451 = vpop.f32.mrb[0].mxu0
        %v3452 = vadd.f32 0.0, %v3451
        %v3453 = vpop.f32.mrb[0].mxu0
        %3454 = vmatprep.mubr.bf16.mxu0 0
        %3455 = vmatmul.mubr.bf16.gmra.mrb[0].mxu0 %v3297
        %v3456 = vpop.f32.mrb[0].mxu0
        %v3457 = vadd.f32 0.0, %v3456
        %v3458 = vpop.f32.mrb[0].mxu0
        %v3459 = vpop.f32.mrb[0].mxu0
        %v3460 = vadd.f32 0.0, %v3459
        %v3461 = vpop.f32.mrb[0].mxu0
        %3462 = vmatprep.mubr.bf16.mxu0 0
        %3463 = vmatmul.mubr.bf16.gmra.mrb[0].mxu0 %v3300
        %v3464 = vpop.f32.mrb[0].mxu0
        %v3465 = vadd.f32 0.0, %v3464
        %v3466 = vpop.f32.mrb[0].mxu0
        %v3467 = vpop.f32.mrb[0].mxu0
        %v3468 = vadd.f32 0.0, %v3467
        %v3469 = vpop.f32.mrb[0].mxu0
        %3470 = vmatprep.mubr.bf16.mxu0 0
        %3471 = vmatmul.mubr.bf16.gmra.mrb[0].mxu0 %v3303
        %v3472 = vpop.f32.mrb[0].mxu0
        %v3473 = vadd.f32 0.0, %v3472
        %v3474 = vpop.f32.mrb[0].mxu0
        %v3475 = vpop.f32.mrb[0].mxu0
        %v3476 = vadd.f32 0.0, %v3475
        %v3477 = vpop.f32.mrb[0].mxu0
        %3478 = vmatprep.mubr.bf16.mxu0 0
        %3479 = vmatmul.mubr.bf16.gmra.mrb[0].mxu0 %v3306
        %v3480 = vpop.f32.mrb[0].mxu0
        %v3481 = vadd.f32 0.0, %v3480
        %v3482 = vpop.f32.mrb[0].mxu0
        %v3483 = vpop.f32.mrb[0].mxu0
        %v3484 = vadd.f32 0.0, %v3483
        %v3485 = vpop.f32.mrb[0].mxu0
        %3486 = vmatprep.mubr.bf16.mxu0 0
        %3487 = vmatmul.mubr.bf16.gmra.mrb[0].mxu0 %v3309
        %v3488 = vpop.f32.mrb[0].mxu0
        %v3489 = vadd.f32 0.0, %v3488
        %v3490 = vpop.f32.mrb[0].mxu0
        %v3491 = vpop.f32.mrb[0].mxu0
        %v3492 = vadd.f32 0.0, %v3491
        %v3493 = vpop.f32.mrb[0].mxu0
        %3494 = vmatprep.mubr.bf16.mxu0 0
        %3495 = vmatmul.mubr.bf16.gmra.mrb[0].mxu0 %v3312
        %v3496 = vpop.f32.mrb[0].mxu0
        %v3497 = vadd.f32 0.0, %v3496
        %v3498 = vpop.f32.mrb[0].mxu0
        %v3499 = vpop.f32.mrb[0].mxu0
        %v3500 = vadd.f32 0.0, %v3499
        %v3501 = vpop.f32.mrb[0].mxu0
        %3502 = vmatprep.mubr.bf16.mxu0 0
        %3503 = vmatmul.mubr.bf16.gmra.mrb[0].mxu0 %v3315
        %v3504 = vpop.f32.mrb[0].mxu0
        %v3505 = vadd.f32 0.0, %v3504
        %v3506 = vpop.f32.mrb[0].mxu0
        %v3507 = vpop.f32.mrb[0].mxu0
        %v3508 = vadd.f32 0.0, %v3507
        %v3509 = vpop.f32.mrb[0].mxu0
        %3510 = vmatprep.mubr.bf16.mxu0 0
        %3511 = vmatmul.mubr.bf16.gmra.mrb[0].mxu0 %v3318
        %v3512 = vpop.f32.mrb[0].mxu0
        %v3513 = vadd.f32 0.0, %v3512
        %v3514 = vpop.f32.mrb[0].mxu0
        %v3515 = vpop.f32.mrb[0].mxu0
        %v3516 = vadd.f32 0.0, %v3515
        %v3517 = vpop.f32.mrb[0].mxu0
        %3518 = vmatprep.mubr.bf16.mxu0 0
        %3519 = vmatmul.mubr.bf16.gmra.mrb[0].mxu0 %v3321
        %v3520 = vpop.f32.mrb[0].mxu0
        %v3521 = vadd.f32 0.0, %v3520
        %v3522 = vpop.f32.mrb[0].mxu0
        %v3523 = vpop.f32.mrb[0].mxu0
        %v3524 = vadd.f32 0.0, %v3523
        %v3525 = vpop.f32.mrb[0].mxu0
        %3526 = vmatprep.mubr.bf16.mxu0 0
        %3527 = vmatmul.mubr.bf16.gmra.mrb[0].mxu0 %v3324
        %v3528 = vpop.f32.mrb[0].mxu0
        %v3529 = vadd.f32 0.0, %v3528
        %v3530 = vpop.f32.mrb[0].mxu0
        %v3531 = vpop.f32.mrb[0].mxu0
        %v3532 = vadd.f32 0.0, %v3531
        %v3533 = vpop.f32.mrb[0].mxu0
        %3534 = vmatprep.mubr.bf16.mxu0 0
        %3535 = vmatmul.mubr.bf16.gmra.mrb[0].mxu0 %v3327
        %v3536 = vpop.f32.mrb[0].mxu0
        %v3537 = vadd.f32 0.0, %v3536
        %v3538 = vpop.f32.mrb[0].mxu0
        %v3539 = vpop.f32.mrb[0].mxu0
        %v3540 = vadd.f32 0.0, %v3539
        %v3541 = vpop.f32.mrb[0].mxu0
        %3542 = vmatprep.mubr.bf16.mxu0 0
        %3543 = vmatmul.mubr.bf16.gmra.mrb[0].mxu0 %v3330
        %v3544 = vpop.f32.mrb[0].mxu0
        %v3545 = vadd.f32 0.0, %v3544
        %v3546 = vpop.f32.mrb[0].mxu0
        %v3547 = vpop.f32.mrb[0].mxu0
        %v3548 = vadd.f32 0.0, %v3547
        %v3549 = vpop.f32.mrb[0].mxu0
        %3550 = vmatprep.mubr.bf16.mxu0 0
        %3551 = vmatmul.mubr.bf16.gmra.mrb[0].mxu0 %v3333
        %v3552 = vpop.f32.mrb[0].mxu0
        %v3553 = vadd.f32 0.0, %v3552
        %v3554 = vpop.f32.mrb[0].mxu0
        %v3555 = vpop.f32.mrb[0].mxu0
        %v3556 = vadd.f32 0.0, %v3555
        %v3557 = vpop.f32.mrb[0].mxu0
        %3558 = vmatprep.mubr.bf16.mxu0 0
        %3559 = vmatmul.mubr.bf16.gmra.mrb[0].mxu0 %v3336
        %v3560 = vpop.f32.mrb[0].mxu0
        %v3561 = vadd.f32 0.0, %v3560
        %v3562 = vpop.f32.mrb[0].mxu0
        %v3563 = vpop.f32.mrb[0].mxu0
        %v3564 = vadd.f32 0.0, %v3563
        %v3565 = vpop.f32.mrb[0].mxu0
        %3566 = vmatprep.mubr.bf16.mxu0 0
        %3567 = vmatmul.mubr.bf16.gmra.mrb[0].mxu0 %v3339
        %v3568 = vpop.f32.mrb[0].mxu0
        %v3569 = vadd.f32 0.0, %v3568
        %v3570 = vpop.f32.mrb[0].mxu0
        %v3571 = vpop.f32.mrb[0].mxu0
        %v3572 = vadd.f32 0.0, %v3571
        %v3573 = vpop.f32.mrb[0].mxu0
        %3574 = vmatprep.mubr.bf16.mxu0 0
        %3575 = vmatmul.mubr.bf16.gmra.mrb[0].mxu0 %v3342
        %v3576 = vpop.f32.mrb[0].mxu0
        %v3577 = vadd.f32 0.0, %v3576
        %v3578 = vpop.f32.mrb[0].mxu0
        %v3579 = vpop.f32.mrb[0].mxu0
        %v3580 = vadd.f32 0.0, %v3579
        %v3581 = vpop.f32.mrb[0].mxu0
        %3582 = vmatprep.mubr.bf16.mxu0 0
        %3583 = vmatmul.mubr.bf16.gmra.mrb[0].mxu0 %v3345
        %v3584 = vpop.f32.mrb[0].mxu0
        %v3585 = vadd.f32 0.0, %v3584
        %v3586 = vpop.f32.mrb[0].mxu0
        %v3587 = vpop.f32.mrb[0].mxu0
        %v3588 = vadd.f32 0.0, %v3587
        %v3589 = vpop.f32.mrb[0].mxu0
        %3590 = vmatprep.mubr.bf16.mxu0 0
        %3591 = vmatmul.mubr.bf16.gmra.mrb[0].mxu0 %v3348
        %v3592 = vpop.f32.mrb[0].mxu0
        %v3593 = vadd.f32 0.0, %v3592
        %v3594 = vpop.f32.mrb[0].mxu0
        %v3595 = vpop.f32.mrb[0].mxu0
        %v3596 = vadd.f32 0.0, %v3595
        %v3597 = vpop.f32.mrb[0].mxu0
        %3598 = vmatprep.mubr.bf16.mxu0 0
        %3599 = vmatmul.mubr.bf16.gmra.mrb[0].mxu0 %v3351
        %v3600 = vpop.f32.mrb[0].mxu0
        %v3601 = vadd.f32 0.0, %v3600
        %v3602 = vpop.f32.mrb[0].mxu0
        %v3603 = vpop.f32.mrb[0].mxu0
        %v3604 = vadd.f32 0.0, %v3603
        %v3605 = vpop.f32.mrb[0].mxu0
        %3606 = vmatprep.mubr.bf16.mxu0 0
        %3607 = vmatmul.mubr.bf16.gmra.mrb[0].mxu0 %v3354
        %v3608 = vpop.f32.mrb[0].mxu0
        %v3609 = vadd.f32 0.0, %v3608
        %v3610 = vpop.f32.mrb[0].mxu0
        %v3611 = vpop.f32.mrb[0].mxu0
        %v3612 = vadd.f32 0.0, %v3611
        %v3613 = vpop.f32.mrb[0].mxu0
        %3614 = vmatprep.mubr.bf16.mxu0 0
        %3615 = vmatmul.mubr.bf16.gmra.mrb[0].mxu0 %v3357
        %v3616 = vpop.f32.mrb[0].mxu0
        %v3617 = vadd.f32 0.0, %v3616
        %v3618 = vpop.f32.mrb[0].mxu0
        %v3619 = vpop.f32.mrb[0].mxu0
        %v3620 = vadd.f32 0.0, %v3619
        %v3621 = vpop.f32.mrb[0].mxu0
        %3622 = vmatprep.mubr.bf16.mxu0 0
        %3623 = vmatmul.mubr.bf16.gmra.mrb[0].mxu0 %v3360
        %v3624 = vpop.f32.mrb[0].mxu0
        %v3625 = vadd.f32 0.0, %v3624
        %v3626 = vpop.f32.mrb[0].mxu0
        %v3627 = vpop.f32.mrb[0].mxu0
        %v3628 = vadd.f32 0.0, %v3627
        %v3629 = vpop.f32.mrb[0].mxu0
        %3630 = vmatprep.mubr.bf16.mxu0 0
        %3631 = vmatmul.mubr.bf16.gmra.mrb[0].mxu0 %v3363
        %v3632 = vpop.f32.mrb[0].mxu0
        %v3633 = vadd.f32 0.0, %v3632
        %v3634 = vpop.f32.mrb[0].mxu0
        %v3635 = vpop.f32.mrb[0].mxu0
        %v3636 = vadd.f32 0.0, %v3635
        %v3637 = vpop.f32.mrb[0].mxu0
        %3638 = vmatprep.mubr.bf16.mxu0 0
        %3639 = vmatmul.mubr.bf16.gmra.mrb[0].mxu0 %v3366
        %v3640 = vpop.f32.mrb[0].mxu0
        %v3641 = vadd.f32 0.0, %v3640
        %v3642 = vpop.f32.mrb[0].mxu0
        %v3643 = vpop.f32.mrb[0].mxu0
        %v3644 = vadd.f32 0.0, %v3643
        %v3645 = vpop.f32.mrb[0].mxu0
        %3646 = vmatprep.mubr.bf16.mxu0 0
        %3647 = vmatmul.mubr.bf16.gmra.mrb[0].mxu0 %v3369
        %v3648 = vpop.f32.mrb[0].mxu0
        %v3649 = vadd.f32 0.0, %v3648
        %v3650 = vpop.f32.mrb[0].mxu0
        %v3651 = vpop.f32.mrb[0].mxu0
        %v3652 = vadd.f32 0.0, %v3651
        %v3653 = vpop.f32.mrb[0].mxu0
        %3654 = vmatprep.mubr.bf16.mxu0 0
        %3655 = vmatmul.mubr.bf16.gmra.mrb[0].mxu0 %v3372
        %v3656 = vpop.f32.mrb[0].mxu0
        %v3657 = vadd.f32 0.0, %v3656
        %v3658 = vpop.f32.mrb[0].mxu0
        %v3659 = vpop.f32.mrb[0].mxu0
        %v3660 = vadd.f32 0.0, %v3659
        %v3661 = vpop.f32.mrb[0].mxu0
        %3662 = vdwg.mxu0
        %v3663 = vadd.f32 %v3116, %v3409
        %v3664 = vadd.f32 %v3116, %v3412
        %v3665 = vadd.f32 %v3116, %v3417
        %v3666 = vadd.f32 %v3116, %v3420
        %v3667 = vadd.f32 %v3116, %v3425
        %v3668 = vadd.f32 %v3116, %v3428
        %v3669 = vadd.f32 %v3116, %v3433
        %v3670 = vadd.f32 %v3116, %v3436
        %v3671 = vadd.f32 %v3116, %v3441
        %v3672 = vadd.f32 %v3116, %v3444
        %v3673 = vadd.f32 %v3116, %v3449
        %v3674 = vadd.f32 %v3116, %v3452
        %v3675 = vadd.f32 %v3116, %v3457
        %v3676 = vadd.f32 %v3116, %v3460
        %v3677 = vadd.f32 %v3116, %v3465
        %v3678 = vadd.f32 %v3116, %v3468
        %v3679 = vadd.f32 %v3116, %v3473
        %v3680 = vadd.f32 %v3116, %v3476
        %v3681 = vadd.f32 %v3116, %v3481
        %v3682 = vadd.f32 %v3116, %v3484
        %v3683 = vadd.f32 %v3116, %v3489
        %v3684 = vadd.f32 %v3116, %v3492
        %v3685 = vadd.f32 %v3116, %v3497
        %v3686 = vadd.f32 %v3116, %v3500
        %v3687 = vadd.f32 %v3116, %v3505
        %v3688 = vadd.f32 %v3116, %v3508
        %v3689 = vadd.f32 %v3116, %v3513
        %v3690 = vadd.f32 %v3116, %v3516
        %v3691 = vadd.f32 %v3116, %v3521
        %v3692 = vadd.f32 %v3116, %v3524
        %v3693 = vadd.f32 %v3116, %v3529
        %v3694 = vadd.f32 %v3116, %v3532
        %v3695 = vadd.f32 %v3116, %v3537
        %v3696 = vadd.f32 %v3116, %v3540
        %v3697 = vadd.f32 %v3116, %v3545
        %v3698 = vadd.f32 %v3116, %v3548
        %v3699 = vadd.f32 %v3116, %v3553
        %v3700 = vadd.f32 %v3116, %v3556
        %v3701 = vadd.f32 %v3116, %v3561
        %v3702 = vadd.f32 %v3116, %v3564
        %v3703 = vadd.f32 %v3116, %v3569
        %v3704 = vadd.f32 %v3116, %v3572
        %v3705 = vadd.f32 %v3116, %v3577
        %v3706 = vadd.f32 %v3116, %v3580
        %v3707 = vadd.f32 %v3116, %v3585
        %v3708 = vadd.f32 %v3116, %v3588
        %v3709 = vadd.f32 %v3116, %v3593
        %v3710 = vadd.f32 %v3116, %v3596
        %v3711 = vadd.f32 %v3116, %v3601
        %v3712 = vadd.f32 %v3116, %v3604
        %v3713 = vadd.f32 %v3116, %v3609
        %v3714 = vadd.f32 %v3116, %v3612
        %v3715 = vadd.f32 %v3116, %v3617
        %v3716 = vadd.f32 %v3116, %v3620
        %v3717 = vadd.f32 %v3116, %v3625
        %v3718 = vadd.f32 %v3116, %v3628
        %v3719 = vadd.f32 %v3116, %v3633
        %v3720 = vadd.f32 %v3116, %v3636
        %v3721 = vadd.f32 %v3116, %v3641
        %v3722 = vadd.f32 %v3116, %v3644
        %v3723 = vadd.f32 %v3116, %v3649
        %v3724 = vadd.f32 %v3116, %v3652
        %v3725 = vadd.f32 %v3116, %v3657
        %v3726 = vadd.f32 %v3116, %v3660
        %s3727 = scalar_lea.vmem [#allocation6], 12
        %v3728 = vld [vmem:[%s3727] sm:$0xf]
        %v3729 = vld [vmem:[%s3727 + $0x4] sm:$0xf]
        %v3730 = vld [vmem:[%s3727 + $0x8] sm:$0xf]
        %s3731 = scalar_lea.vmem [#allocation2], 8
        %v3732 = vld [vmem:[%s3731] sm:$0xff]
        %v3733 = vld [vmem:[%s3731 + $0x8] sm:$0xff]
        %v3734 = vld [vmem:[%s3731 + $0x10] sm:$0xff]
        %v3735 = vld [vmem:[%s3731 + $0x18] sm:$0xff]
        %v3736 = vld [vmem:[%s3731 + $0x20] sm:$0xff]
        %v3737 = vld [vmem:[%s3731 + $0x28] sm:$0xff]
        %v3738 = vld [vmem:[%s3731 + $0x30] sm:$0xff]
        %v3739 = vld [vmem:[%s3731 + $0x38] sm:$0xff]
        %v3740 = vld [vmem:[%s3731 + $0x40] sm:$0xff]
        %v3741 = vld [vmem:[%s3731 + $0x48] sm:$0xff]
        %v3742 = vld [vmem:[%s3731 + $0x50] sm:$0xff]
        %v3743 = vld [vmem:[%s3731 + $0x58] sm:$0xff]
        %v3744 = vld [vmem:[%s3731 + $0x60] sm:$0xff]
        %v3745 = vld [vmem:[%s3731 + $0x68] sm:$0xff]
        %v3746 = vld [vmem:[%s3731 + $0x70] sm:$0xff]
        %v3747 = vld [vmem:[%s3731 + $0x78] sm:$0xff]
        %v3748 = vld [vmem:[%s3731 + $0x80] sm:$0xff]
        %v3749 = vld [vmem:[%s3731 + $0x88] sm:$0xff]
        %v3750 = vld [vmem:[%s3731 + $0x90] sm:$0xff]
        %v3751 = vld [vmem:[%s3731 + $0x98] sm:$0xff]
        %v3752 = vld [vmem:[%s3731 + $0xa0] sm:$0xff]
        %v3753 = vld [vmem:[%s3731 + $0xa8] sm:$0xff]
        %v3754 = vld [vmem:[%s3731 + $0xb0] sm:$0xff]
        %v3755 = vld [vmem:[%s3731 + $0xb8] sm:$0xff]
        %v3756 = vld [vmem:[%s3731 + $0xc0] sm:$0xff]
        %v3757 = vld [vmem:[%s3731 + $0xc8] sm:$0xff]
        %v3758 = vld [vmem:[%s3731 + $0xd0] sm:$0xff]
        %v3759 = vld [vmem:[%s3731 + $0xd8] sm:$0xff]
        %v3760 = vld [vmem:[%s3731 + $0xe0] sm:$0xff]
        %v3761 = vld [vmem:[%s3731 + $0xe8] sm:$0xff]
        %v3762 = vld [vmem:[%s3731 + $0xf0] sm:$0xff]
        %v3763 = vld [vmem:[%s3731 + $0xf8] sm:$0xff]
        %v3767 = vunpack.c.l.b16 %v3728
        %v3768 = vunpack.c.l.b16 %v3729
        %v3769 = vunpack.c.l.b16 %v3730
        %v3770 = vpack.c.b16 %v3768, %v3767
        %v3771 = vpack.c.b16 %v3769, %v3769
        %v3774 = vsel %vm2533, %v3732, 0
        %v3777 = vsel %vm2533, %v3733, 0
        %v3780 = vsel %vm2533, %v3734, 0
        %v3783 = vsel %vm2533, %v3735, 0
        %v3786 = vsel %vm2533, %v3736, 0
        %v3789 = vsel %vm2533, %v3737, 0
        %v3792 = vsel %vm2533, %v3738, 0
        %v3795 = vsel %vm2533, %v3739, 0
        %v3798 = vsel %vm2533, %v3740, 0
        %v3801 = vsel %vm2533, %v3741, 0
        %v3804 = vsel %vm2533, %v3742, 0
        %v3807 = vsel %vm2533, %v3743, 0
        %v3810 = vsel %vm2533, %v3744, 0
        %v3813 = vsel %vm2533, %v3745, 0
        %v3816 = vsel %vm2533, %v3746, 0
        %v3819 = vsel %vm2533, %v3747, 0
        %v3822 = vsel %vm2533, %v3748, 0
        %v3825 = vsel %vm2533, %v3749, 0
        %v3828 = vsel %vm2533, %v3750, 0
        %v3831 = vsel %vm2533, %v3751, 0
        %v3834 = vsel %vm2533, %v3752, 0
        %v3837 = vsel %vm2533, %v3753, 0
        %v3840 = vsel %vm2533, %v3754, 0
        %v3843 = vsel %vm2533, %v3755, 0
        %v3846 = vsel %vm2533, %v3756, 0
        %v3849 = vsel %vm2533, %v3757, 0
        %v3852 = vsel %vm2533, %v3758, 0
        %v3855 = vsel %vm2533, %v3759, 0
        %v3858 = vsel %vm2533, %v3760, 0
        %v3861 = vsel %vm2533, %v3761, 0
        %v3864 = vsel %vm2533, %v3762, 0
        %v3867 = vsel %vm2533, %v3763, 0
        %v3870 = vsel %vm2819, %v3771, 0
        %3872 = vmatprep.subr.bf16.mxu0 0
        %3873 = vmatpush1.bf16.msra.mxu0 %v3770
        %3874 = vmatprep.subr.bf16.mxu0 0
        %3875 = vmatpush1.bf16.msra.mxu0 %v3870
        %3876 = vmatprep.subr.bf16.mxu0 0
        %3877 = vmatpush1.bf16.msra.mxu0 0
        %3878 = vmatprep.subr.bf16.mxu0 0
        %3879 = vmatpush1.bf16.msra.mxu0 0
        %3880 = vmatprep.subr.bf16.mxu0 0
        %3881 = vmatpush1.bf16.msra.mxu0 0
        %3882 = vmatprep.subr.bf16.mxu0 0
        %3883 = vmatpush1.bf16.msra.mxu0 0
        %3884 = vmatprep.subr.bf16.mxu0 0
        %3885 = vmatpush1.bf16.msra.mxu0 0
        %3886 = vmatprep.subr.bf16.mxu0 0
        %3887 = vmatpush1.bf16.msra.mxu0 0
        %3888 = vmatprep.subr.bf16.mxu0 0
        %3889 = vmatpush1.bf16.msra.mxu0 0
        %3890 = vmatprep.subr.bf16.mxu0 0
        %3891 = vmatpush1.bf16.msra.mxu0 0
        %3892 = vmatprep.subr.bf16.mxu0 0
        %3893 = vmatpush1.bf16.msra.mxu0 0
        %3894 = vmatprep.subr.bf16.mxu0 0
        %3895 = vmatpush1.bf16.msra.mxu0 0
        %3896 = vmatprep.subr.bf16.mxu0 0
        %3897 = vmatpush1.bf16.msra.mxu0 0
        %3898 = vmatprep.subr.bf16.mxu0 0
        %3899 = vmatpush1.bf16.msra.mxu0 0
        %3900 = vmatprep.subr.bf16.mxu0 0
        %3901 = vmatpush1.bf16.msra.mxu0 0
        %3902 = vmatprep.subr.bf16.mxu0 0
        %3903 = vmatpush1.bf16.msra.mxu0 0
        %3904 = vmatprep.mubr.bf16.mxu0 0
        %3905 = vmatmul.mubr.bf16.gmra.mrb[0].mxu0 %v3774
        %v3906 = vpop.f32.mrb[0].mxu0
        %v3907 = vadd.f32 0.0, %v3906
        %v3908 = vpop.f32.mrb[0].mxu0
        %v3909 = vpop.f32.mrb[0].mxu0
        %v3910 = vadd.f32 0.0, %v3909
        %v3911 = vpop.f32.mrb[0].mxu0
        %3912 = vmatprep.mubr.bf16.mxu0 0
        %3913 = vmatmul.mubr.bf16.gmra.mrb[0].mxu0 %v3777
        %v3914 = vpop.f32.mrb[0].mxu0
        %v3915 = vadd.f32 0.0, %v3914
        %v3916 = vpop.f32.mrb[0].mxu0
        %v3917 = vpop.f32.mrb[0].mxu0
        %v3918 = vadd.f32 0.0, %v3917
        %v3919 = vpop.f32.mrb[0].mxu0
        %3920 = vmatprep.mubr.bf16.mxu0 0
        %3921 = vmatmul.mubr.bf16.gmra.mrb[0].mxu0 %v3780
        %v3922 = vpop.f32.mrb[0].mxu0
        %v3923 = vadd.f32 0.0, %v3922
        %v3924 = vpop.f32.mrb[0].mxu0
        %v3925 = vpop.f32.mrb[0].mxu0
        %v3926 = vadd.f32 0.0, %v3925
        %v3927 = vpop.f32.mrb[0].mxu0
        %3928 = vmatprep.mubr.bf16.mxu0 0
        %3929 = vmatmul.mubr.bf16.gmra.mrb[0].mxu0 %v3783
        %v3930 = vpop.f32.mrb[0].mxu0
        %v3931 = vadd.f32 0.0, %v3930
        %v3932 = vpop.f32.mrb[0].mxu0
        %v3933 = vpop.f32.mrb[0].mxu0
        %v3934 = vadd.f32 0.0, %v3933
        %v3935 = vpop.f32.mrb[0].mxu0
        %3936 = vmatprep.mubr.bf16.mxu0 0
        %3937 = vmatmul.mubr.bf16.gmra.mrb[0].mxu0 %v3786
        %v3938 = vpop.f32.mrb[0].mxu0
        %v3939 = vadd.f32 0.0, %v3938
        %v3940 = vpop.f32.mrb[0].mxu0
        %v3941 = vpop.f32.mrb[0].mxu0
        %v3942 = vadd.f32 0.0, %v3941
        %v3943 = vpop.f32.mrb[0].mxu0
        %3944 = vmatprep.mubr.bf16.mxu0 0
        %3945 = vmatmul.mubr.bf16.gmra.mrb[0].mxu0 %v3789
        %v3946 = vpop.f32.mrb[0].mxu0
        %v3947 = vadd.f32 0.0, %v3946
        %v3948 = vpop.f32.mrb[0].mxu0
        %v3949 = vpop.f32.mrb[0].mxu0
        %v3950 = vadd.f32 0.0, %v3949
        %v3951 = vpop.f32.mrb[0].mxu0
        %3952 = vmatprep.mubr.bf16.mxu0 0
        %3953 = vmatmul.mubr.bf16.gmra.mrb[0].mxu0 %v3792
        %v3954 = vpop.f32.mrb[0].mxu0
        %v3955 = vadd.f32 0.0, %v3954
        %v3956 = vpop.f32.mrb[0].mxu0
        %v3957 = vpop.f32.mrb[0].mxu0
        %v3958 = vadd.f32 0.0, %v3957
        %v3959 = vpop.f32.mrb[0].mxu0
        %3960 = vmatprep.mubr.bf16.mxu0 0
        %3961 = vmatmul.mubr.bf16.gmra.mrb[0].mxu0 %v3795
        %v3962 = vpop.f32.mrb[0].mxu0
        %v3963 = vadd.f32 0.0, %v3962
        %v3964 = vpop.f32.mrb[0].mxu0
        %v3965 = vpop.f32.mrb[0].mxu0
        %v3966 = vadd.f32 0.0, %v3965
        %v3967 = vpop.f32.mrb[0].mxu0
        %3968 = vmatprep.mubr.bf16.mxu0 0
        %3969 = vmatmul.mubr.bf16.gmra.mrb[0].mxu0 %v3798
        %v3970 = vpop.f32.mrb[0].mxu0
        %v3971 = vadd.f32 0.0, %v3970
        %v3972 = vpop.f32.mrb[0].mxu0
        %v3973 = vpop.f32.mrb[0].mxu0
        %v3974 = vadd.f32 0.0, %v3973
        %v3975 = vpop.f32.mrb[0].mxu0
        %3976 = vmatprep.mubr.bf16.mxu0 0
        %3977 = vmatmul.mubr.bf16.gmra.mrb[0].mxu0 %v3801
        %v3978 = vpop.f32.mrb[0].mxu0
        %v3979 = vadd.f32 0.0, %v3978
        %v3980 = vpop.f32.mrb[0].mxu0
        %v3981 = vpop.f32.mrb[0].mxu0
        %v3982 = vadd.f32 0.0, %v3981
        %v3983 = vpop.f32.mrb[0].mxu0
        %3984 = vmatprep.mubr.bf16.mxu0 0
        %3985 = vmatmul.mubr.bf16.gmra.mrb[0].mxu0 %v3804
        %v3986 = vpop.f32.mrb[0].mxu0
        %v3987 = vadd.f32 0.0, %v3986
        %v3988 = vpop.f32.mrb[0].mxu0
        %v3989 = vpop.f32.mrb[0].mxu0
        %v3990 = vadd.f32 0.0, %v3989
        %v3991 = vpop.f32.mrb[0].mxu0
        %3992 = vmatprep.mubr.bf16.mxu0 0
        %3993 = vmatmul.mubr.bf16.gmra.mrb[0].mxu0 %v3807
        %v3994 = vpop.f32.mrb[0].mxu0
        %v3995 = vadd.f32 0.0, %v3994
        %v3996 = vpop.f32.mrb[0].mxu0
        %v3997 = vpop.f32.mrb[0].mxu0
        %v3998 = vadd.f32 0.0, %v3997
        %v3999 = vpop.f32.mrb[0].mxu0
        %4000 = vmatprep.mubr.bf16.mxu0 0
        %4001 = vmatmul.mubr.bf16.gmra.mrb[0].mxu0 %v3810
        %v4002 = vpop.f32.mrb[0].mxu0
        %v4003 = vadd.f32 0.0, %v4002
        %v4004 = vpop.f32.mrb[0].mxu0
        %v4005 = vpop.f32.mrb[0].mxu0
        %v4006 = vadd.f32 0.0, %v4005
        %v4007 = vpop.f32.mrb[0].mxu0
        %4008 = vmatprep.mubr.bf16.mxu0 0
        %4009 = vmatmul.mubr.bf16.gmra.mrb[0].mxu0 %v3813
        %v4010 = vpop.f32.mrb[0].mxu0
        %v4011 = vadd.f32 0.0, %v4010
        %v4012 = vpop.f32.mrb[0].mxu0
        %v4013 = vpop.f32.mrb[0].mxu0
        %v4014 = vadd.f32 0.0, %v4013
        %v4015 = vpop.f32.mrb[0].mxu0
        %4016 = vmatprep.mubr.bf16.mxu0 0
        %4017 = vmatmul.mubr.bf16.gmra.mrb[0].mxu0 %v3816
        %v4018 = vpop.f32.mrb[0].mxu0
        %v4019 = vadd.f32 0.0, %v4018
        %v4020 = vpop.f32.mrb[0].mxu0
        %v4021 = vpop.f32.mrb[0].mxu0
        %v4022 = vadd.f32 0.0, %v4021
        %v4023 = vpop.f32.mrb[0].mxu0
        %4024 = vmatprep.mubr.bf16.mxu0 0
        %4025 = vmatmul.mubr.bf16.gmra.mrb[0].mxu0 %v3819
        %v4026 = vpop.f32.mrb[0].mxu0
        %v4027 = vadd.f32 0.0, %v4026
        %v4028 = vpop.f32.mrb[0].mxu0
        %v4029 = vpop.f32.mrb[0].mxu0
        %v4030 = vadd.f32 0.0, %v4029
        %v4031 = vpop.f32.mrb[0].mxu0
        %4032 = vmatprep.mubr.bf16.mxu0 0
        %4033 = vmatmul.mubr.bf16.gmra.mrb[0].mxu0 %v3822
        %v4034 = vpop.f32.mrb[0].mxu0
        %v4035 = vadd.f32 0.0, %v4034
        %v4036 = vpop.f32.mrb[0].mxu0
        %v4037 = vpop.f32.mrb[0].mxu0
        %v4038 = vadd.f32 0.0, %v4037
        %v4039 = vpop.f32.mrb[0].mxu0
        %4040 = vmatprep.mubr.bf16.mxu0 0
        %4041 = vmatmul.mubr.bf16.gmra.mrb[0].mxu0 %v3825
        %v4042 = vpop.f32.mrb[0].mxu0
        %v4043 = vadd.f32 0.0, %v4042
        %v4044 = vpop.f32.mrb[0].mxu0
        %v4045 = vpop.f32.mrb[0].mxu0
        %v4046 = vadd.f32 0.0, %v4045
        %v4047 = vpop.f32.mrb[0].mxu0
        %4048 = vmatprep.mubr.bf16.mxu0 0
        %4049 = vmatmul.mubr.bf16.gmra.mrb[0].mxu0 %v3828
        %v4050 = vpop.f32.mrb[0].mxu0
        %v4051 = vadd.f32 0.0, %v4050
        %v4052 = vpop.f32.mrb[0].mxu0
        %v4053 = vpop.f32.mrb[0].mxu0
        %v4054 = vadd.f32 0.0, %v4053
        %v4055 = vpop.f32.mrb[0].mxu0
        %4056 = vmatprep.mubr.bf16.mxu0 0
        %4057 = vmatmul.mubr.bf16.gmra.mrb[0].mxu0 %v3831
        %v4058 = vpop.f32.mrb[0].mxu0
        %v4059 = vadd.f32 0.0, %v4058
        %v4060 = vpop.f32.mrb[0].mxu0
        %v4061 = vpop.f32.mrb[0].mxu0
        %v4062 = vadd.f32 0.0, %v4061
        %v4063 = vpop.f32.mrb[0].mxu0
        %4064 = vmatprep.mubr.bf16.mxu0 0
        %4065 = vmatmul.mubr.bf16.gmra.mrb[0].mxu0 %v3834
        %v4066 = vpop.f32.mrb[0].mxu0
        %v4067 = vadd.f32 0.0, %v4066
        %v4068 = vpop.f32.mrb[0].mxu0
        %v4069 = vpop.f32.mrb[0].mxu0
        %v4070 = vadd.f32 0.0, %v4069
        %v4071 = vpop.f32.mrb[0].mxu0
        %4072 = vmatprep.mubr.bf16.mxu0 0
        %4073 = vmatmul.mubr.bf16.gmra.mrb[0].mxu0 %v3837
        %v4074 = vpop.f32.mrb[0].mxu0
        %v4075 = vadd.f32 0.0, %v4074
        %v4076 = vpop.f32.mrb[0].mxu0
        %v4077 = vpop.f32.mrb[0].mxu0
        %v4078 = vadd.f32 0.0, %v4077
        %v4079 = vpop.f32.mrb[0].mxu0
        %4080 = vmatprep.mubr.bf16.mxu0 0
        %4081 = vmatmul.mubr.bf16.gmra.mrb[0].mxu0 %v3840
        %v4082 = vpop.f32.mrb[0].mxu0
        %v4083 = vadd.f32 0.0, %v4082
        %v4084 = vpop.f32.mrb[0].mxu0
        %v4085 = vpop.f32.mrb[0].mxu0
        %v4086 = vadd.f32 0.0, %v4085
        %v4087 = vpop.f32.mrb[0].mxu0
        %4088 = vmatprep.mubr.bf16.mxu0 0
        %4089 = vmatmul.mubr.bf16.gmra.mrb[0].mxu0 %v3843
        %v4090 = vpop.f32.mrb[0].mxu0
        %v4091 = vadd.f32 0.0, %v4090
        %v4092 = vpop.f32.mrb[0].mxu0
        %v4093 = vpop.f32.mrb[0].mxu0
        %v4094 = vadd.f32 0.0, %v4093
        %v4095 = vpop.f32.mrb[0].mxu0
        %4096 = vmatprep.mubr.bf16.mxu0 0
        %4097 = vmatmul.mubr.bf16.gmra.mrb[0].mxu0 %v3846
        %v4098 = vpop.f32.mrb[0].mxu0
        %v4099 = vadd.f32 0.0, %v4098
        %v4100 = vpop.f32.mrb[0].mxu0
        %v4101 = vpop.f32.mrb[0].mxu0
        %v4102 = vadd.f32 0.0, %v4101
        %v4103 = vpop.f32.mrb[0].mxu0
        %4104 = vmatprep.mubr.bf16.mxu0 0
        %4105 = vmatmul.mubr.bf16.gmra.mrb[0].mxu0 %v3849
        %v4106 = vpop.f32.mrb[0].mxu0
        %v4107 = vadd.f32 0.0, %v4106
        %v4108 = vpop.f32.mrb[0].mxu0
        %v4109 = vpop.f32.mrb[0].mxu0
        %v4110 = vadd.f32 0.0, %v4109
        %v4111 = vpop.f32.mrb[0].mxu0
        %4112 = vmatprep.mubr.bf16.mxu0 0
        %4113 = vmatmul.mubr.bf16.gmra.mrb[0].mxu0 %v3852
        %v4114 = vpop.f32.mrb[0].mxu0
        %v4115 = vadd.f32 0.0, %v4114
        %v4116 = vpop.f32.mrb[0].mxu0
        %v4117 = vpop.f32.mrb[0].mxu0
        %v4118 = vadd.f32 0.0, %v4117
        %v4119 = vpop.f32.mrb[0].mxu0
        %4120 = vmatprep.mubr.bf16.mxu0 0
        %4121 = vmatmul.mubr.bf16.gmra.mrb[0].mxu0 %v3855
        %v4122 = vpop.f32.mrb[0].mxu0
        %v4123 = vadd.f32 0.0, %v4122
        %v4124 = vpop.f32.mrb[0].mxu0
        %v4125 = vpop.f32.mrb[0].mxu0
        %v4126 = vadd.f32 0.0, %v4125
        %v4127 = vpop.f32.mrb[0].mxu0
        %4128 = vmatprep.mubr.bf16.mxu0 0
        %4129 = vmatmul.mubr.bf16.gmra.mrb[0].mxu0 %v3858
        %v4130 = vpop.f32.mrb[0].mxu0
        %v4131 = vadd.f32 0.0, %v4130
        %v4132 = vpop.f32.mrb[0].mxu0
        %v4133 = vpop.f32.mrb[0].mxu0
        %v4134 = vadd.f32 0.0, %v4133
        %v4135 = vpop.f32.mrb[0].mxu0
        %4136 = vmatprep.mubr.bf16.mxu0 0
        %4137 = vmatmul.mubr.bf16.gmra.mrb[0].mxu0 %v3861
        %v4138 = vpop.f32.mrb[0].mxu0
        %v4139 = vadd.f32 0.0, %v4138
        %v4140 = vpop.f32.mrb[0].mxu0
        %v4141 = vpop.f32.mrb[0].mxu0
        %v4142 = vadd.f32 0.0, %v4141
        %v4143 = vpop.f32.mrb[0].mxu0
        %4144 = vmatprep.mubr.bf16.mxu0 0
        %4145 = vmatmul.mubr.bf16.gmra.mrb[0].mxu0 %v3864
        %v4146 = vpop.f32.mrb[0].mxu0
        %v4147 = vadd.f32 0.0, %v4146
        %v4148 = vpop.f32.mrb[0].mxu0
        %v4149 = vpop.f32.mrb[0].mxu0
        %v4150 = vadd.f32 0.0, %v4149
        %v4151 = vpop.f32.mrb[0].mxu0
        %4152 = vmatprep.mubr.bf16.mxu0 0
        %4153 = vmatmul.mubr.bf16.gmra.mrb[0].mxu0 %v3867
        %v4154 = vpop.f32.mrb[0].mxu0
        %v4155 = vadd.f32 0.0, %v4154
        %v4156 = vpop.f32.mrb[0].mxu0
        %v4157 = vpop.f32.mrb[0].mxu0
        %v4158 = vadd.f32 0.0, %v4157
        %v4159 = vpop.f32.mrb[0].mxu0
        %4160 = vdwg.mxu0
        %v4161 = vadd.f32 %v3118, %v3907
        %v4162 = vadd.f32 %v3119, %v3910
        %v4163 = vadd.f32 %v3120, %v3915
        %v4164 = vadd.f32 %v3121, %v3918
        %v4165 = vadd.f32 %v3122, %v3923
        %v4166 = vadd.f32 %v3123, %v3926
        %v4167 = vadd.f32 %v3124, %v3931
        %v4168 = vadd.f32 %v3125, %v3934
        %v4169 = vadd.f32 %v3126, %v3939
        %v4170 = vadd.f32 %v3127, %v3942
        %v4171 = vadd.f32 %v3128, %v3947
        %v4172 = vadd.f32 %v3129, %v3950
        %v4173 = vadd.f32 %v3130, %v3955
        %v4174 = vadd.f32 %v3131, %v3958
        %v4175 = vadd.f32 %v3132, %v3963
        %v4176 = vadd.f32 %v3133, %v3966
        %v4177 = vadd.f32 %v3134, %v3971
        %v4178 = vadd.f32 %v3135, %v3974
        %v4179 = vadd.f32 %v3136, %v3979
        %v4180 = vadd.f32 %v3137, %v3982
        %v4181 = vadd.f32 %v3138, %v3987
        %v4182 = vadd.f32 %v3139, %v3990
        %v4183 = vadd.f32 %v3140, %v3995
        %v4184 = vadd.f32 %v3141, %v3998
        %v4185 = vadd.f32 %v3142, %v4003
        %v4186 = vadd.f32 %v3143, %v4006
        %v4187 = vadd.f32 %v3144, %v4011
        %v4188 = vadd.f32 %v3145, %v4014
        %v4189 = vadd.f32 %v3146, %v4019
        %v4190 = vadd.f32 %v3147, %v4022
        %v4191 = vadd.f32 %v3148, %v4027
        %v4192 = vadd.f32 %v3149, %v4030
        %v4193 = vadd.f32 %v3150, %v4035
        %v4194 = vadd.f32 %v3151, %v4038
        %v4195 = vadd.f32 %v3152, %v4043
        %v4196 = vadd.f32 %v3153, %v4046
        %v4197 = vadd.f32 %v3154, %v4051
        %v4198 = vadd.f32 %v3155, %v4054
        %v4199 = vadd.f32 %v3156, %v4059
        %v4200 = vadd.f32 %v3157, %v4062
        %v4201 = vadd.f32 %v3158, %v4067
        %v4202 = vadd.f32 %v3159, %v4070
        %v4203 = vadd.f32 %v3160, %v4075
        %v4204 = vadd.f32 %v3161, %v4078
        %v4205 = vadd.f32 %v3162, %v4083
        %v4206 = vadd.f32 %v3163, %v4086
        %v4207 = vadd.f32 %v3164, %v4091
        %v4208 = vadd.f32 %v3165, %v4094
        %v4209 = vadd.f32 %v3166, %v4099
        %v4210 = vadd.f32 %v3167, %v4102
        %v4211 = vadd.f32 %v3168, %v4107
        %v4212 = vadd.f32 %v3169, %v4110
        %v4213 = vadd.f32 %v3170, %v4115
        %v4214 = vadd.f32 %v3171, %v4118
        %v4215 = vadd.f32 %v3172, %v4123
        %v4216 = vadd.f32 %v3173, %v4126
        %v4217 = vadd.f32 %v3174, %v4131
        %v4218 = vadd.f32 %v3175, %v4134
        %v4219 = vadd.f32 %v3176, %v4139
        %v4220 = vadd.f32 %v3177, %v4142
        %v4221 = vadd.f32 %v3178, %v4147
        %v4222 = vadd.f32 %v3179, %v4150
        %v4223 = vadd.f32 %v3180, %v4155
        %v4224 = vadd.f32 %v3181, %v4158
        %4257 = vrot.lane.b32.xlu0 %v3732, 120
        %v4258 = vpop.permute.xlu0 %4257
        %4259 = vrot.lane.b32.xlu0 %v3733, 120
        %v4260 = vpop.permute.xlu0 %4259
        %4261 = vrot.lane.b32.xlu0 %v3734, 120
        %v4262 = vpop.permute.xlu0 %4261
        %4263 = vrot.lane.b32.xlu0 %v3735, 120
        %v4264 = vpop.permute.xlu0 %4263
        %4265 = vrot.lane.b32.xlu0 %v3736, 120
        %v4266 = vpop.permute.xlu0 %4265
        %4267 = vrot.lane.b32.xlu0 %v3737, 120
        %v4268 = vpop.permute.xlu0 %4267
        %4269 = vrot.lane.b32.xlu0 %v3738, 120
        %v4270 = vpop.permute.xlu0 %4269
        %4271 = vrot.lane.b32.xlu0 %v3739, 120
        %v4272 = vpop.permute.xlu0 %4271
        %4273 = vrot.lane.b32.xlu0 %v3740, 120
        %v4274 = vpop.permute.xlu0 %4273
        %4275 = vrot.lane.b32.xlu0 %v3741, 120
        %v4276 = vpop.permute.xlu0 %4275
        %4277 = vrot.lane.b32.xlu0 %v3742, 120
        %v4278 = vpop.permute.xlu0 %4277
        %4279 = vrot.lane.b32.xlu0 %v3743, 120
        %v4280 = vpop.permute.xlu0 %4279
        %4281 = vrot.lane.b32.xlu0 %v3744, 120
        %v4282 = vpop.permute.xlu0 %4281
        %4283 = vrot.lane.b32.xlu0 %v3745, 120
        %v4284 = vpop.permute.xlu0 %4283
        %4285 = vrot.lane.b32.xlu0 %v3746, 120
        %v4286 = vpop.permute.xlu0 %4285
        %4287 = vrot.lane.b32.xlu0 %v3747, 120
        %v4288 = vpop.permute.xlu0 %4287
        %4289 = vrot.lane.b32.xlu0 %v3748, 120
        %v4290 = vpop.permute.xlu0 %4289
        %4291 = vrot.lane.b32.xlu0 %v3749, 120
        %v4292 = vpop.permute.xlu0 %4291
        %4293 = vrot.lane.b32.xlu0 %v3750, 120
        %v4294 = vpop.permute.xlu0 %4293
        %4295 = vrot.lane.b32.xlu0 %v3751, 120
        %v4296 = vpop.permute.xlu0 %4295
        %4297 = vrot.lane.b32.xlu0 %v3752, 120
        %v4298 = vpop.permute.xlu0 %4297
        %4299 = vrot.lane.b32.xlu0 %v3753, 120
        %v4300 = vpop.permute.xlu0 %4299
        %4301 = vrot.lane.b32.xlu0 %v3754, 120
        %v4302 = vpop.permute.xlu0 %4301
        %4303 = vrot.lane.b32.xlu0 %v3755, 120
        %v4304 = vpop.permute.xlu0 %4303
        %4305 = vrot.lane.b32.xlu0 %v3756, 120
        %v4306 = vpop.permute.xlu0 %4305
        %4307 = vrot.lane.b32.xlu0 %v3757, 120
        %v4308 = vpop.permute.xlu0 %4307
        %4309 = vrot.lane.b32.xlu0 %v3758, 120
        %v4310 = vpop.permute.xlu0 %4309
        %4311 = vrot.lane.b32.xlu0 %v3759, 120
        %v4312 = vpop.permute.xlu0 %4311
        %4313 = vrot.lane.b32.xlu0 %v3760, 120
        %v4314 = vpop.permute.xlu0 %4313
        %4315 = vrot.lane.b32.xlu0 %v3761, 120
        %v4316 = vpop.permute.xlu0 %4315
        %4317 = vrot.lane.b32.xlu0 %v3762, 120
        %v4318 = vpop.permute.xlu0 %4317
        %4319 = vrot.lane.b32.xlu0 %v3763, 120
        %v4320 = vpop.permute.xlu0 %4319
        %v4322 = vsel %vm2533, %v4258, 0
        %v4325 = vsel %vm2533, %v4260, 0
        %v4328 = vsel %vm2533, %v4262, 0
        %v4331 = vsel %vm2533, %v4264, 0
        %v4334 = vsel %vm2533, %v4266, 0
        %v4337 = vsel %vm2533, %v4268, 0
        %v4340 = vsel %vm2533, %v4270, 0
        %v4343 = vsel %vm2533, %v4272, 0
        %v4346 = vsel %vm2533, %v4274, 0
        %v4349 = vsel %vm2533, %v4276, 0
        %v4352 = vsel %vm2533, %v4278, 0
        %v4355 = vsel %vm2533, %v4280, 0
        %v4358 = vsel %vm2533, %v4282, 0
        %v4361 = vsel %vm2533, %v4284, 0
        %v4364 = vsel %vm2533, %v4286, 0
        %v4367 = vsel %vm2533, %v4288, 0
        %v4370 = vsel %vm2533, %v4290, 0
        %v4373 = vsel %vm2533, %v4292, 0
        %v4376 = vsel %vm2533, %v4294, 0
        %v4379 = vsel %vm2533, %v4296, 0
        %v4382 = vsel %vm2533, %v4298, 0
        %v4385 = vsel %vm2533, %v4300, 0
        %v4388 = vsel %vm2533, %v4302, 0
        %v4391 = vsel %vm2533, %v4304, 0
        %v4394 = vsel %vm2533, %v4306, 0
        %v4397 = vsel %vm2533, %v4308, 0
        %v4400 = vsel %vm2533, %v4310, 0
        %v4403 = vsel %vm2533, %v4312, 0
        %v4406 = vsel %vm2533, %v4314, 0
        %v4409 = vsel %vm2533, %v4316, 0
        %v4412 = vsel %vm2533, %v4318, 0
        %v4415 = vsel %vm2533, %v4320, 0
        %4417 = vmatprep.subr.bf16.mxu0 0
        %4418 = vmatpush1.bf16.msra.mxu0 %v3770
        %4419 = vmatprep.subr.bf16.mxu0 0
        %4420 = vmatpush1.bf16.msra.mxu0 %v3870
        %4421 = vmatprep.subr.bf16.mxu0 0
        %4422 = vmatpush1.bf16.msra.mxu0 0
        %4423 = vmatprep.subr.bf16.mxu0 0
        %4424 = vmatpush1.bf16.msra.mxu0 0
        %4425 = vmatprep.subr.bf16.mxu0 0
        %4426 = vmatpush1.bf16.msra.mxu0 0
        %4427 = vmatprep.subr.bf16.mxu0 0
        %4428 = vmatpush1.bf16.msra.mxu0 0
        %4429 = vmatprep.subr.bf16.mxu0 0
        %4430 = vmatpush1.bf16.msra.mxu0 0
        %4431 = vmatprep.subr.bf16.mxu0 0
        %4432 = vmatpush1.bf16.msra.mxu0 0
        %4433 = vmatprep.subr.bf16.mxu0 0
        %4434 = vmatpush1.bf16.msra.mxu0 0
        %4435 = vmatprep.subr.bf16.mxu0 0
        %4436 = vmatpush1.bf16.msra.mxu0 0
        %4437 = vmatprep.subr.bf16.mxu0 0
        %4438 = vmatpush1.bf16.msra.mxu0 0
        %4439 = vmatprep.subr.bf16.mxu0 0
        %4440 = vmatpush1.bf16.msra.mxu0 0
        %4441 = vmatprep.subr.bf16.mxu0 0
        %4442 = vmatpush1.bf16.msra.mxu0 0
        %4443 = vmatprep.subr.bf16.mxu0 0
        %4444 = vmatpush1.bf16.msra.mxu0 0
        %4445 = vmatprep.subr.bf16.mxu0 0
        %4446 = vmatpush1.bf16.msra.mxu0 0
        %4447 = vmatprep.subr.bf16.mxu0 0
        %4448 = vmatpush1.bf16.msra.mxu0 0
        %4449 = vmatprep.mubr.bf16.mxu0 0
        %4450 = vmatmul.mubr.bf16.gmra.mrb[0].mxu0 %v4322
        %v4451 = vpop.f32.mrb[0].mxu0
        %v4452 = vadd.f32 0.0, %v4451
        %v4453 = vpop.f32.mrb[0].mxu0
        %v4454 = vpop.f32.mrb[0].mxu0
        %v4455 = vadd.f32 0.0, %v4454
        %v4456 = vpop.f32.mrb[0].mxu0
        %4457 = vmatprep.mubr.bf16.mxu0 0
        %4458 = vmatmul.mubr.bf16.gmra.mrb[0].mxu0 %v4325
        %v4459 = vpop.f32.mrb[0].mxu0
        %v4460 = vadd.f32 0.0, %v4459
        %v4461 = vpop.f32.mrb[0].mxu0
        %v4462 = vpop.f32.mrb[0].mxu0
        %v4463 = vadd.f32 0.0, %v4462
        %v4464 = vpop.f32.mrb[0].mxu0
        %4465 = vmatprep.mubr.bf16.mxu0 0
        %4466 = vmatmul.mubr.bf16.gmra.mrb[0].mxu0 %v4328
        %v4467 = vpop.f32.mrb[0].mxu0
        %v4468 = vadd.f32 0.0, %v4467
        %v4469 = vpop.f32.mrb[0].mxu0
        %v4470 = vpop.f32.mrb[0].mxu0
        %v4471 = vadd.f32 0.0, %v4470
        %v4472 = vpop.f32.mrb[0].mxu0
        %4473 = vmatprep.mubr.bf16.mxu0 0
        %4474 = vmatmul.mubr.bf16.gmra.mrb[0].mxu0 %v4331
        %v4475 = vpop.f32.mrb[0].mxu0
        %v4476 = vadd.f32 0.0, %v4475
        %v4477 = vpop.f32.mrb[0].mxu0
        %v4478 = vpop.f32.mrb[0].mxu0
        %v4479 = vadd.f32 0.0, %v4478
        %v4480 = vpop.f32.mrb[0].mxu0
        %4481 = vmatprep.mubr.bf16.mxu0 0
        %4482 = vmatmul.mubr.bf16.gmra.mrb[0].mxu0 %v4334
        %v4483 = vpop.f32.mrb[0].mxu0
        %v4484 = vadd.f32 0.0, %v4483
        %v4485 = vpop.f32.mrb[0].mxu0
        %v4486 = vpop.f32.mrb[0].mxu0
        %v4487 = vadd.f32 0.0, %v4486
        %v4488 = vpop.f32.mrb[0].mxu0
        %4489 = vmatprep.mubr.bf16.mxu0 0
        %4490 = vmatmul.mubr.bf16.gmra.mrb[0].mxu0 %v4337
        %v4491 = vpop.f32.mrb[0].mxu0
        %v4492 = vadd.f32 0.0, %v4491
        %v4493 = vpop.f32.mrb[0].mxu0
        %v4494 = vpop.f32.mrb[0].mxu0
        %v4495 = vadd.f32 0.0, %v4494
        %v4496 = vpop.f32.mrb[0].mxu0
        %4497 = vmatprep.mubr.bf16.mxu0 0
        %4498 = vmatmul.mubr.bf16.gmra.mrb[0].mxu0 %v4340
        %v4499 = vpop.f32.mrb[0].mxu0
        %v4500 = vadd.f32 0.0, %v4499
        %v4501 = vpop.f32.mrb[0].mxu0
        %v4502 = vpop.f32.mrb[0].mxu0
        %v4503 = vadd.f32 0.0, %v4502
        %v4504 = vpop.f32.mrb[0].mxu0
        %4505 = vmatprep.mubr.bf16.mxu0 0
        %4506 = vmatmul.mubr.bf16.gmra.mrb[0].mxu0 %v4343
        %v4507 = vpop.f32.mrb[0].mxu0
        %v4508 = vadd.f32 0.0, %v4507
        %v4509 = vpop.f32.mrb[0].mxu0
        %v4510 = vpop.f32.mrb[0].mxu0
        %v4511 = vadd.f32 0.0, %v4510
        %v4512 = vpop.f32.mrb[0].mxu0
        %4513 = vmatprep.mubr.bf16.mxu0 0
        %4514 = vmatmul.mubr.bf16.gmra.mrb[0].mxu0 %v4346
        %v4515 = vpop.f32.mrb[0].mxu0
        %v4516 = vadd.f32 0.0, %v4515
        %v4517 = vpop.f32.mrb[0].mxu0
        %v4518 = vpop.f32.mrb[0].mxu0
        %v4519 = vadd.f32 0.0, %v4518
        %v4520 = vpop.f32.mrb[0].mxu0
        %4521 = vmatprep.mubr.bf16.mxu0 0
        %4522 = vmatmul.mubr.bf16.gmra.mrb[0].mxu0 %v4349
        %v4523 = vpop.f32.mrb[0].mxu0
        %v4524 = vadd.f32 0.0, %v4523
        %v4525 = vpop.f32.mrb[0].mxu0
        %v4526 = vpop.f32.mrb[0].mxu0
        %v4527 = vadd.f32 0.0, %v4526
        %v4528 = vpop.f32.mrb[0].mxu0
        %4529 = vmatprep.mubr.bf16.mxu0 0
        %4530 = vmatmul.mubr.bf16.gmra.mrb[0].mxu0 %v4352
        %v4531 = vpop.f32.mrb[0].mxu0
        %v4532 = vadd.f32 0.0, %v4531
        %v4533 = vpop.f32.mrb[0].mxu0
        %v4534 = vpop.f32.mrb[0].mxu0
        %v4535 = vadd.f32 0.0, %v4534
        %v4536 = vpop.f32.mrb[0].mxu0
        %4537 = vmatprep.mubr.bf16.mxu0 0
        %4538 = vmatmul.mubr.bf16.gmra.mrb[0].mxu0 %v4355
        %v4539 = vpop.f32.mrb[0].mxu0
        %v4540 = vadd.f32 0.0, %v4539
        %v4541 = vpop.f32.mrb[0].mxu0
        %v4542 = vpop.f32.mrb[0].mxu0
        %v4543 = vadd.f32 0.0, %v4542
        %v4544 = vpop.f32.mrb[0].mxu0
        %4545 = vmatprep.mubr.bf16.mxu0 0
        %4546 = vmatmul.mubr.bf16.gmra.mrb[0].mxu0 %v4358
        %v4547 = vpop.f32.mrb[0].mxu0
        %v4548 = vadd.f32 0.0, %v4547
        %v4549 = vpop.f32.mrb[0].mxu0
        %v4550 = vpop.f32.mrb[0].mxu0
        %v4551 = vadd.f32 0.0, %v4550
        %v4552 = vpop.f32.mrb[0].mxu0
        %4553 = vmatprep.mubr.bf16.mxu0 0
        %4554 = vmatmul.mubr.bf16.gmra.mrb[0].mxu0 %v4361
        %v4555 = vpop.f32.mrb[0].mxu0
        %v4556 = vadd.f32 0.0, %v4555
        %v4557 = vpop.f32.mrb[0].mxu0
        %v4558 = vpop.f32.mrb[0].mxu0
        %v4559 = vadd.f32 0.0, %v4558
        %v4560 = vpop.f32.mrb[0].mxu0
        %4561 = vmatprep.mubr.bf16.mxu0 0
        %4562 = vmatmul.mubr.bf16.gmra.mrb[0].mxu0 %v4364
        %v4563 = vpop.f32.mrb[0].mxu0
        %v4564 = vadd.f32 0.0, %v4563
        %v4565 = vpop.f32.mrb[0].mxu0
        %v4566 = vpop.f32.mrb[0].mxu0
        %v4567 = vadd.f32 0.0, %v4566
        %v4568 = vpop.f32.mrb[0].mxu0
        %4569 = vmatprep.mubr.bf16.mxu0 0
        %4570 = vmatmul.mubr.bf16.gmra.mrb[0].mxu0 %v4367
        %v4571 = vpop.f32.mrb[0].mxu0
        %v4572 = vadd.f32 0.0, %v4571
        %v4573 = vpop.f32.mrb[0].mxu0
        %v4574 = vpop.f32.mrb[0].mxu0
        %v4575 = vadd.f32 0.0, %v4574
        %v4576 = vpop.f32.mrb[0].mxu0
        %4577 = vmatprep.mubr.bf16.mxu0 0
        %4578 = vmatmul.mubr.bf16.gmra.mrb[0].mxu0 %v4370
        %v4579 = vpop.f32.mrb[0].mxu0
        %v4580 = vadd.f32 0.0, %v4579
        %v4581 = vpop.f32.mrb[0].mxu0
        %v4582 = vpop.f32.mrb[0].mxu0
        %v4583 = vadd.f32 0.0, %v4582
        %v4584 = vpop.f32.mrb[0].mxu0
        %4585 = vmatprep.mubr.bf16.mxu0 0
        %4586 = vmatmul.mubr.bf16.gmra.mrb[0].mxu0 %v4373
        %v4587 = vpop.f32.mrb[0].mxu0
        %v4588 = vadd.f32 0.0, %v4587
        %v4589 = vpop.f32.mrb[0].mxu0
        %v4590 = vpop.f32.mrb[0].mxu0
        %v4591 = vadd.f32 0.0, %v4590
        %v4592 = vpop.f32.mrb[0].mxu0
        %4593 = vmatprep.mubr.bf16.mxu0 0
        %4594 = vmatmul.mubr.bf16.gmra.mrb[0].mxu0 %v4376
        %v4595 = vpop.f32.mrb[0].mxu0
        %v4596 = vadd.f32 0.0, %v4595
        %v4597 = vpop.f32.mrb[0].mxu0
        %v4598 = vpop.f32.mrb[0].mxu0
        %v4599 = vadd.f32 0.0, %v4598
        %v4600 = vpop.f32.mrb[0].mxu0
        %4601 = vmatprep.mubr.bf16.mxu0 0
        %4602 = vmatmul.mubr.bf16.gmra.mrb[0].mxu0 %v4379
        %v4603 = vpop.f32.mrb[0].mxu0
        %v4604 = vadd.f32 0.0, %v4603
        %v4605 = vpop.f32.mrb[0].mxu0
        %v4606 = vpop.f32.mrb[0].mxu0
        %v4607 = vadd.f32 0.0, %v4606
        %v4608 = vpop.f32.mrb[0].mxu0
        %4609 = vmatprep.mubr.bf16.mxu0 0
        %4610 = vmatmul.mubr.bf16.gmra.mrb[0].mxu0 %v4382
        %v4611 = vpop.f32.mrb[0].mxu0
        %v4612 = vadd.f32 0.0, %v4611
        %v4613 = vpop.f32.mrb[0].mxu0
        %v4614 = vpop.f32.mrb[0].mxu0
        %v4615 = vadd.f32 0.0, %v4614
        %v4616 = vpop.f32.mrb[0].mxu0
        %4617 = vmatprep.mubr.bf16.mxu0 0
        %4618 = vmatmul.mubr.bf16.gmra.mrb[0].mxu0 %v4385
        %v4619 = vpop.f32.mrb[0].mxu0
        %v4620 = vadd.f32 0.0, %v4619
        %v4621 = vpop.f32.mrb[0].mxu0
        %v4622 = vpop.f32.mrb[0].mxu0
        %v4623 = vadd.f32 0.0, %v4622
        %v4624 = vpop.f32.mrb[0].mxu0
        %4625 = vmatprep.mubr.bf16.mxu0 0
        %4626 = vmatmul.mubr.bf16.gmra.mrb[0].mxu0 %v4388
        %v4627 = vpop.f32.mrb[0].mxu0
        %v4628 = vadd.f32 0.0, %v4627
        %v4629 = vpop.f32.mrb[0].mxu0
        %v4630 = vpop.f32.mrb[0].mxu0
        %v4631 = vadd.f32 0.0, %v4630
        %v4632 = vpop.f32.mrb[0].mxu0
        %4633 = vmatprep.mubr.bf16.mxu0 0
        %4634 = vmatmul.mubr.bf16.gmra.mrb[0].mxu0 %v4391
        %v4635 = vpop.f32.mrb[0].mxu0
        %v4636 = vadd.f32 0.0, %v4635
        %v4637 = vpop.f32.mrb[0].mxu0
        %v4638 = vpop.f32.mrb[0].mxu0
        %v4639 = vadd.f32 0.0, %v4638
        %v4640 = vpop.f32.mrb[0].mxu0
        %4641 = vmatprep.mubr.bf16.mxu0 0
        %4642 = vmatmul.mubr.bf16.gmra.mrb[0].mxu0 %v4394
        %v4643 = vpop.f32.mrb[0].mxu0
        %v4644 = vadd.f32 0.0, %v4643
        %v4645 = vpop.f32.mrb[0].mxu0
        %v4646 = vpop.f32.mrb[0].mxu0
        %v4647 = vadd.f32 0.0, %v4646
        %v4648 = vpop.f32.mrb[0].mxu0
        %4649 = vmatprep.mubr.bf16.mxu0 0
        %4650 = vmatmul.mubr.bf16.gmra.mrb[0].mxu0 %v4397
        %v4651 = vpop.f32.mrb[0].mxu0
        %v4652 = vadd.f32 0.0, %v4651
        %v4653 = vpop.f32.mrb[0].mxu0
        %v4654 = vpop.f32.mrb[0].mxu0
        %v4655 = vadd.f32 0.0, %v4654
        %v4656 = vpop.f32.mrb[0].mxu0
        %4657 = vmatprep.mubr.bf16.mxu0 0
        %4658 = vmatmul.mubr.bf16.gmra.mrb[0].mxu0 %v4400
        %v4659 = vpop.f32.mrb[0].mxu0
        %v4660 = vadd.f32 0.0, %v4659
        %v4661 = vpop.f32.mrb[0].mxu0
        %v4662 = vpop.f32.mrb[0].mxu0
        %v4663 = vadd.f32 0.0, %v4662
        %v4664 = vpop.f32.mrb[0].mxu0
        %4665 = vmatprep.mubr.bf16.mxu0 0
        %4666 = vmatmul.mubr.bf16.gmra.mrb[0].mxu0 %v4403
        %v4667 = vpop.f32.mrb[0].mxu0
        %v4668 = vadd.f32 0.0, %v4667
        %v4669 = vpop.f32.mrb[0].mxu0
        %v4670 = vpop.f32.mrb[0].mxu0
        %v4671 = vadd.f32 0.0, %v4670
        %v4672 = vpop.f32.mrb[0].mxu0
        %4673 = vmatprep.mubr.bf16.mxu0 0
        %4674 = vmatmul.mubr.bf16.gmra.mrb[0].mxu0 %v4406
        %v4675 = vpop.f32.mrb[0].mxu0
        %v4676 = vadd.f32 0.0, %v4675
        %v4677 = vpop.f32.mrb[0].mxu0
        %v4678 = vpop.f32.mrb[0].mxu0
        %v4679 = vadd.f32 0.0, %v4678
        %v4680 = vpop.f32.mrb[0].mxu0
        %4681 = vmatprep.mubr.bf16.mxu0 0
        %4682 = vmatmul.mubr.bf16.gmra.mrb[0].mxu0 %v4409
        %v4683 = vpop.f32.mrb[0].mxu0
        %v4684 = vadd.f32 0.0, %v4683
        %v4685 = vpop.f32.mrb[0].mxu0
        %v4686 = vpop.f32.mrb[0].mxu0
        %v4687 = vadd.f32 0.0, %v4686
        %v4688 = vpop.f32.mrb[0].mxu0
        %4689 = vmatprep.mubr.bf16.mxu0 0
        %4690 = vmatmul.mubr.bf16.gmra.mrb[0].mxu0 %v4412
        %v4691 = vpop.f32.mrb[0].mxu0
        %v4692 = vadd.f32 0.0, %v4691
        %v4693 = vpop.f32.mrb[0].mxu0
        %v4694 = vpop.f32.mrb[0].mxu0
        %v4695 = vadd.f32 0.0, %v4694
        %v4696 = vpop.f32.mrb[0].mxu0
        %4697 = vmatprep.mubr.bf16.mxu0 0
        %4698 = vmatmul.mubr.bf16.gmra.mrb[0].mxu0 %v4415
        %v4699 = vpop.f32.mrb[0].mxu0
        %v4700 = vadd.f32 0.0, %v4699
        %v4701 = vpop.f32.mrb[0].mxu0
        %v4702 = vpop.f32.mrb[0].mxu0
        %v4703 = vadd.f32 0.0, %v4702
        %v4704 = vpop.f32.mrb[0].mxu0
        %4705 = vdwg.mxu0
        %v4706 = vadd.f32 %v3663, %v4452
        %v4707 = vadd.f32 %v3664, %v4455
        %v4708 = vadd.f32 %v3665, %v4460
        %v4709 = vadd.f32 %v3666, %v4463
        %v4710 = vadd.f32 %v3667, %v4468
        %v4711 = vadd.f32 %v3668, %v4471
        %v4712 = vadd.f32 %v3669, %v4476
        %v4713 = vadd.f32 %v3670, %v4479
        %v4714 = vadd.f32 %v3671, %v4484
        %v4715 = vadd.f32 %v3672, %v4487
        %v4716 = vadd.f32 %v3673, %v4492
        %v4717 = vadd.f32 %v3674, %v4495
        %v4718 = vadd.f32 %v3675, %v4500
        %v4719 = vadd.f32 %v3676, %v4503
        %v4720 = vadd.f32 %v3677, %v4508
        %v4721 = vadd.f32 %v3678, %v4511
        %v4722 = vadd.f32 %v3679, %v4516
        %v4723 = vadd.f32 %v3680, %v4519
        %v4724 = vadd.f32 %v3681, %v4524
        %v4725 = vadd.f32 %v3682, %v4527
        %v4726 = vadd.f32 %v3683, %v4532
        %v4727 = vadd.f32 %v3684, %v4535
        %v4728 = vadd.f32 %v3685, %v4540
        %v4729 = vadd.f32 %v3686, %v4543
        %v4730 = vadd.f32 %v3687, %v4548
        %v4731 = vadd.f32 %v3688, %v4551
        %v4732 = vadd.f32 %v3689, %v4556
        %v4733 = vadd.f32 %v3690, %v4559
        %v4734 = vadd.f32 %v3691, %v4564
        %v4735 = vadd.f32 %v3692, %v4567
        %v4736 = vadd.f32 %v3693, %v4572
        %v4737 = vadd.f32 %v3694, %v4575
        %v4738 = vadd.f32 %v3695, %v4580
        %v4739 = vadd.f32 %v3696, %v4583
        %v4740 = vadd.f32 %v3697, %v4588
        %v4741 = vadd.f32 %v3698, %v4591
        %v4742 = vadd.f32 %v3699, %v4596
        %v4743 = vadd.f32 %v3700, %v4599
        %v4744 = vadd.f32 %v3701, %v4604
        %v4745 = vadd.f32 %v3702, %v4607
        %v4746 = vadd.f32 %v3703, %v4612
        %v4747 = vadd.f32 %v3704, %v4615
        %v4748 = vadd.f32 %v3705, %v4620
        %v4749 = vadd.f32 %v3706, %v4623
        %v4750 = vadd.f32 %v3707, %v4628
        %v4751 = vadd.f32 %v3708, %v4631
        %v4752 = vadd.f32 %v3709, %v4636
        %v4753 = vadd.f32 %v3710, %v4639
        %v4754 = vadd.f32 %v3711, %v4644
        %v4755 = vadd.f32 %v3712, %v4647
        %v4756 = vadd.f32 %v3713, %v4652
        %v4757 = vadd.f32 %v3714, %v4655
        %v4758 = vadd.f32 %v3715, %v4660
        %v4759 = vadd.f32 %v3716, %v4663
        %v4760 = vadd.f32 %v3717, %v4668
        %v4761 = vadd.f32 %v3718, %v4671
        %v4762 = vadd.f32 %v3719, %v4676
        %v4763 = vadd.f32 %v3720, %v4679
        %v4764 = vadd.f32 %v3721, %v4684
        %v4765 = vadd.f32 %v3722, %v4687
        %v4766 = vadd.f32 %v3723, %v4692
        %v4767 = vadd.f32 %v3724, %v4695
        %v4768 = vadd.f32 %v3725, %v4700
        %v4769 = vadd.f32 %v3726, %v4703
        %s4770 = scalar_lea.vmem [#allocation6], 24
        %v4771 = vld [vmem:[%s4770] sm:$0xf]
        %v4772 = vld [vmem:[%s4770 + $0x4] sm:$0xf]
        %v4773 = vld [vmem:[%s4770 + $0x8] sm:$0xf]
        %s4774 = scalar_lea.vmem [#allocation2], 16
        %v4775 = vld [vmem:[%s4774] sm:$0xff]
        %v4776 = vld [vmem:[%s4774 + $0x8] sm:$0xff]
        %v4777 = vld [vmem:[%s4774 + $0x10] sm:$0xff]
        %v4778 = vld [vmem:[%s4774 + $0x18] sm:$0xff]
        %v4779 = vld [vmem:[%s4774 + $0x20] sm:$0xff]
        %v4780 = vld [vmem:[%s4774 + $0x28] sm:$0xff]
        %v4781 = vld [vmem:[%s4774 + $0x30] sm:$0xff]
        %v4782 = vld [vmem:[%s4774 + $0x38] sm:$0xff]
        %v4783 = vld [vmem:[%s4774 + $0x40] sm:$0xff]
        %v4784 = vld [vmem:[%s4774 + $0x48] sm:$0xff]
        %v4785 = vld [vmem:[%s4774 + $0x50] sm:$0xff]
        %v4786 = vld [vmem:[%s4774 + $0x58] sm:$0xff]
        %v4787 = vld [vmem:[%s4774 + $0x60] sm:$0xff]
        %v4788 = vld [vmem:[%s4774 + $0x68] sm:$0xff]
        %v4789 = vld [vmem:[%s4774 + $0x70] sm:$0xff]
        %v4790 = vld [vmem:[%s4774 + $0x78] sm:$0xff]
        %v4791 = vld [vmem:[%s4774 + $0x80] sm:$0xff]
        %v4792 = vld [vmem:[%s4774 + $0x88] sm:$0xff]
        %v4793 = vld [vmem:[%s4774 + $0x90] sm:$0xff]
        %v4794 = vld [vmem:[%s4774 + $0x98] sm:$0xff]
        %v4795 = vld [vmem:[%s4774 + $0xa0] sm:$0xff]
        %v4796 = vld [vmem:[%s4774 + $0xa8] sm:$0xff]
        %v4797 = vld [vmem:[%s4774 + $0xb0] sm:$0xff]
        %v4798 = vld [vmem:[%s4774 + $0xb8] sm:$0xff]
        %v4799 = vld [vmem:[%s4774 + $0xc0] sm:$0xff]
        %v4800 = vld [vmem:[%s4774 + $0xc8] sm:$0xff]
        %v4801 = vld [vmem:[%s4774 + $0xd0] sm:$0xff]
        %v4802 = vld [vmem:[%s4774 + $0xd8] sm:$0xff]
        %v4803 = vld [vmem:[%s4774 + $0xe0] sm:$0xff]
        %v4804 = vld [vmem:[%s4774 + $0xe8] sm:$0xff]
        %v4805 = vld [vmem:[%s4774 + $0xf0] sm:$0xff]
        %v4806 = vld [vmem:[%s4774 + $0xf8] sm:$0xff]
        %v4810 = vunpack.c.l.b16 %v4771
        %v4811 = vunpack.c.l.b16 %v4772
        %v4812 = vunpack.c.l.b16 %v4773
        %v4813 = vpack.c.b16 %v4811, %v4810
        %v4814 = vpack.c.b16 %v4812, %v4812
        %v4817 = vsel %vm2533, %v4775, 0
        %v4820 = vsel %vm2533, %v4776, 0
        %v4823 = vsel %vm2533, %v4777, 0
        %v4826 = vsel %vm2533, %v4778, 0
        %v4829 = vsel %vm2533, %v4779, 0
        %v4832 = vsel %vm2533, %v4780, 0
        %v4835 = vsel %vm2533, %v4781, 0
        %v4838 = vsel %vm2533, %v4782, 0
        %v4841 = vsel %vm2533, %v4783, 0
        %v4844 = vsel %vm2533, %v4784, 0
        %v4847 = vsel %vm2533, %v4785, 0
        %v4850 = vsel %vm2533, %v4786, 0
        %v4853 = vsel %vm2533, %v4787, 0
        %v4856 = vsel %vm2533, %v4788, 0
        %v4859 = vsel %vm2533, %v4789, 0
        %v4862 = vsel %vm2533, %v4790, 0
        %v4865 = vsel %vm2533, %v4791, 0
        %v4868 = vsel %vm2533, %v4792, 0
        %v4871 = vsel %vm2533, %v4793, 0
        %v4874 = vsel %vm2533, %v4794, 0
        %v4877 = vsel %vm2533, %v4795, 0
        %v4880 = vsel %vm2533, %v4796, 0
        %v4883 = vsel %vm2533, %v4797, 0
        %v4886 = vsel %vm2533, %v4798, 0
        %v4889 = vsel %vm2533, %v4799, 0
        %v4892 = vsel %vm2533, %v4800, 0
        %v4895 = vsel %vm2533, %v4801, 0
        %v4898 = vsel %vm2533, %v4802, 0
        %v4901 = vsel %vm2533, %v4803, 0
        %v4904 = vsel %vm2533, %v4804, 0
        %v4907 = vsel %vm2533, %v4805, 0
        %v4910 = vsel %vm2533, %v4806, 0
        %v4913 = vsel %vm2819, %v4814, 0
        %4915 = vmatprep.subr.bf16.mxu0 0
        %4916 = vmatpush1.bf16.msra.mxu0 %v4813
        %4917 = vmatprep.subr.bf16.mxu0 0
        %4918 = vmatpush1.bf16.msra.mxu0 %v4913
        %4919 = vmatprep.subr.bf16.mxu0 0
        %4920 = vmatpush1.bf16.msra.mxu0 0
        %4921 = vmatprep.subr.bf16.mxu0 0
        %4922 = vmatpush1.bf16.msra.mxu0 0
        %4923 = vmatprep.subr.bf16.mxu0 0
        %4924 = vmatpush1.bf16.msra.mxu0 0
        %4925 = vmatprep.subr.bf16.mxu0 0
        %4926 = vmatpush1.bf16.msra.mxu0 0
        %4927 = vmatprep.subr.bf16.mxu0 0
        %4928 = vmatpush1.bf16.msra.mxu0 0
        %4929 = vmatprep.subr.bf16.mxu0 0
        %4930 = vmatpush1.bf16.msra.mxu0 0
        %4931 = vmatprep.subr.bf16.mxu0 0
        %4932 = vmatpush1.bf16.msra.mxu0 0
        %4933 = vmatprep.subr.bf16.mxu0 0
        %4934 = vmatpush1.bf16.msra.mxu0 0
        %4935 = vmatprep.subr.bf16.mxu0 0
        %4936 = vmatpush1.bf16.msra.mxu0 0
        %4937 = vmatprep.subr.bf16.mxu0 0
        %4938 = vmatpush1.bf16.msra.mxu0 0
        %4939 = vmatprep.subr.bf16.mxu0 0
        %4940 = vmatpush1.bf16.msra.mxu0 0
        %4941 = vmatprep.subr.bf16.mxu0 0
        %4942 = vmatpush1.bf16.msra.mxu0 0
        %4943 = vmatprep.subr.bf16.mxu0 0
        %4944 = vmatpush1.bf16.msra.mxu0 0
        %4945 = vmatprep.subr.bf16.mxu0 0
        %4946 = vmatpush1.bf16.msra.mxu0 0
        %4947 = vmatprep.mubr.bf16.mxu0 0
        %4948 = vmatmul.mubr.bf16.gmra.mrb[0].mxu0 %v4817
        %v4949 = vpop.f32.mrb[0].mxu0
        %v4950 = vadd.f32 0.0, %v4949
        %v4951 = vpop.f32.mrb[0].mxu0
        %v4952 = vpop.f32.mrb[0].mxu0
        %v4953 = vadd.f32 0.0, %v4952
        %v4954 = vpop.f32.mrb[0].mxu0
        %4955 = vmatprep.mubr.bf16.mxu0 0
        %4956 = vmatmul.mubr.bf16.gmra.mrb[0].mxu0 %v4820
        %v4957 = vpop.f32.mrb[0].mxu0
        %v4958 = vadd.f32 0.0, %v4957
        %v4959 = vpop.f32.mrb[0].mxu0
        %v4960 = vpop.f32.mrb[0].mxu0
        %v4961 = vadd.f32 0.0, %v4960
        %v4962 = vpop.f32.mrb[0].mxu0
        %4963 = vmatprep.mubr.bf16.mxu0 0
        %4964 = vmatmul.mubr.bf16.gmra.mrb[0].mxu0 %v4823
        %v4965 = vpop.f32.mrb[0].mxu0
        %v4966 = vadd.f32 0.0, %v4965
        %v4967 = vpop.f32.mrb[0].mxu0
        %v4968 = vpop.f32.mrb[0].mxu0
        %v4969 = vadd.f32 0.0, %v4968
        %v4970 = vpop.f32.mrb[0].mxu0
        %4971 = vmatprep.mubr.bf16.mxu0 0
        %4972 = vmatmul.mubr.bf16.gmra.mrb[0].mxu0 %v4826
        %v4973 = vpop.f32.mrb[0].mxu0
        %v4974 = vadd.f32 0.0, %v4973
        %v4975 = vpop.f32.mrb[0].mxu0
        %v4976 = vpop.f32.mrb[0].mxu0
        %v4977 = vadd.f32 0.0, %v4976
        %v4978 = vpop.f32.mrb[0].mxu0
        %4979 = vmatprep.mubr.bf16.mxu0 0
        %4980 = vmatmul.mubr.bf16.gmra.mrb[0].mxu0 %v4829
        %v4981 = vpop.f32.mrb[0].mxu0
        %v4982 = vadd.f32 0.0, %v4981
        %v4983 = vpop.f32.mrb[0].mxu0
        %v4984 = vpop.f32.mrb[0].mxu0
        %v4985 = vadd.f32 0.0, %v4984
        %v4986 = vpop.f32.mrb[0].mxu0
        %4987 = vmatprep.mubr.bf16.mxu0 0
        %4988 = vmatmul.mubr.bf16.gmra.mrb[0].mxu0 %v4832
        %v4989 = vpop.f32.mrb[0].mxu0
        %v4990 = vadd.f32 0.0, %v4989
        %v4991 = vpop.f32.mrb[0].mxu0
        %v4992 = vpop.f32.mrb[0].mxu0
        %v4993 = vadd.f32 0.0, %v4992
        %v4994 = vpop.f32.mrb[0].mxu0
        %4995 = vmatprep.mubr.bf16.mxu0 0
        %4996 = vmatmul.mubr.bf16.gmra.mrb[0].mxu0 %v4835
        %v4997 = vpop.f32.mrb[0].mxu0
        %v4998 = vadd.f32 0.0, %v4997
        %v4999 = vpop.f32.mrb[0].mxu0
        %v5000 = vpop.f32.mrb[0].mxu0
        %v5001 = vadd.f32 0.0, %v5000
        %v5002 = vpop.f32.mrb[0].mxu0
        %5003 = vmatprep.mubr.bf16.mxu0 0
        %5004 = vmatmul.mubr.bf16.gmra.mrb[0].mxu0 %v4838
        %v5005 = vpop.f32.mrb[0].mxu0
        %v5006 = vadd.f32 0.0, %v5005
        %v5007 = vpop.f32.mrb[0].mxu0
        %v5008 = vpop.f32.mrb[0].mxu0
        %v5009 = vadd.f32 0.0, %v5008
        %v5010 = vpop.f32.mrb[0].mxu0
        %5011 = vmatprep.mubr.bf16.mxu0 0
        %5012 = vmatmul.mubr.bf16.gmra.mrb[0].mxu0 %v4841
        %v5013 = vpop.f32.mrb[0].mxu0
        %v5014 = vadd.f32 0.0, %v5013
        %v5015 = vpop.f32.mrb[0].mxu0
        %v5016 = vpop.f32.mrb[0].mxu0
        %v5017 = vadd.f32 0.0, %v5016
        %v5018 = vpop.f32.mrb[0].mxu0
        %5019 = vmatprep.mubr.bf16.mxu0 0
        %5020 = vmatmul.mubr.bf16.gmra.mrb[0].mxu0 %v4844
        %v5021 = vpop.f32.mrb[0].mxu0
        %v5022 = vadd.f32 0.0, %v5021
        %v5023 = vpop.f32.mrb[0].mxu0
        %v5024 = vpop.f32.mrb[0].mxu0
        %v5025 = vadd.f32 0.0, %v5024
        %v5026 = vpop.f32.mrb[0].mxu0
        %5027 = vmatprep.mubr.bf16.mxu0 0
        %5028 = vmatmul.mubr.bf16.gmra.mrb[0].mxu0 %v4847
        %v5029 = vpop.f32.mrb[0].mxu0
        %v5030 = vadd.f32 0.0, %v5029
        %v5031 = vpop.f32.mrb[0].mxu0
        %v5032 = vpop.f32.mrb[0].mxu0
        %v5033 = vadd.f32 0.0, %v5032
        %v5034 = vpop.f32.mrb[0].mxu0
        %5035 = vmatprep.mubr.bf16.mxu0 0
        %5036 = vmatmul.mubr.bf16.gmra.mrb[0].mxu0 %v4850
        %v5037 = vpop.f32.mrb[0].mxu0
        %v5038 = vadd.f32 0.0, %v5037
        %v5039 = vpop.f32.mrb[0].mxu0
        %v5040 = vpop.f32.mrb[0].mxu0
        %v5041 = vadd.f32 0.0, %v5040
        %v5042 = vpop.f32.mrb[0].mxu0
        %5043 = vmatprep.mubr.bf16.mxu0 0
        %5044 = vmatmul.mubr.bf16.gmra.mrb[0].mxu0 %v4853
        %v5045 = vpop.f32.mrb[0].mxu0
        %v5046 = vadd.f32 0.0, %v5045
        %v5047 = vpop.f32.mrb[0].mxu0
        %v5048 = vpop.f32.mrb[0].mxu0
        %v5049 = vadd.f32 0.0, %v5048
        %v5050 = vpop.f32.mrb[0].mxu0
        %5051 = vmatprep.mubr.bf16.mxu0 0
        %5052 = vmatmul.mubr.bf16.gmra.mrb[0].mxu0 %v4856
        %v5053 = vpop.f32.mrb[0].mxu0
        %v5054 = vadd.f32 0.0, %v5053
        %v5055 = vpop.f32.mrb[0].mxu0
        %v5056 = vpop.f32.mrb[0].mxu0
        %v5057 = vadd.f32 0.0, %v5056
        %v5058 = vpop.f32.mrb[0].mxu0
        %5059 = vmatprep.mubr.bf16.mxu0 0
        %5060 = vmatmul.mubr.bf16.gmra.mrb[0].mxu0 %v4859
        %v5061 = vpop.f32.mrb[0].mxu0
        %v5062 = vadd.f32 0.0, %v5061
        %v5063 = vpop.f32.mrb[0].mxu0
        %v5064 = vpop.f32.mrb[0].mxu0
        %v5065 = vadd.f32 0.0, %v5064
        %v5066 = vpop.f32.mrb[0].mxu0
        %5067 = vmatprep.mubr.bf16.mxu0 0
        %5068 = vmatmul.mubr.bf16.gmra.mrb[0].mxu0 %v4862
        %v5069 = vpop.f32.mrb[0].mxu0
        %v5070 = vadd.f32 0.0, %v5069
        %v5071 = vpop.f32.mrb[0].mxu0
        %v5072 = vpop.f32.mrb[0].mxu0
        %v5073 = vadd.f32 0.0, %v5072
        %v5074 = vpop.f32.mrb[0].mxu0
        %5075 = vmatprep.mubr.bf16.mxu0 0
        %5076 = vmatmul.mubr.bf16.gmra.mrb[0].mxu0 %v4865
        %v5077 = vpop.f32.mrb[0].mxu0
        %v5078 = vadd.f32 0.0, %v5077
        %v5079 = vpop.f32.mrb[0].mxu0
        %v5080 = vpop.f32.mrb[0].mxu0
        %v5081 = vadd.f32 0.0, %v5080
        %v5082 = vpop.f32.mrb[0].mxu0
        %5083 = vmatprep.mubr.bf16.mxu0 0
        %5084 = vmatmul.mubr.bf16.gmra.mrb[0].mxu0 %v4868
        %v5085 = vpop.f32.mrb[0].mxu0
        %v5086 = vadd.f32 0.0, %v5085
        %v5087 = vpop.f32.mrb[0].mxu0
        %v5088 = vpop.f32.mrb[0].mxu0
        %v5089 = vadd.f32 0.0, %v5088
        %v5090 = vpop.f32.mrb[0].mxu0
        %5091 = vmatprep.mubr.bf16.mxu0 0
        %5092 = vmatmul.mubr.bf16.gmra.mrb[0].mxu0 %v4871
        %v5093 = vpop.f32.mrb[0].mxu0
        %v5094 = vadd.f32 0.0, %v5093
        %v5095 = vpop.f32.mrb[0].mxu0
        %v5096 = vpop.f32.mrb[0].mxu0
        %v5097 = vadd.f32 0.0, %v5096
        %v5098 = vpop.f32.mrb[0].mxu0
        %5099 = vmatprep.mubr.bf16.mxu0 0
        %5100 = vmatmul.mubr.bf16.gmra.mrb[0].mxu0 %v4874
        %v5101 = vpop.f32.mrb[0].mxu0
        %v5102 = vadd.f32 0.0, %v5101
        %v5103 = vpop.f32.mrb[0].mxu0
        %v5104 = vpop.f32.mrb[0].mxu0
        %v5105 = vadd.f32 0.0, %v5104
        %v5106 = vpop.f32.mrb[0].mxu0
        %5107 = vmatprep.mubr.bf16.mxu0 0
        %5108 = vmatmul.mubr.bf16.gmra.mrb[0].mxu0 %v4877
        %v5109 = vpop.f32.mrb[0].mxu0
        %v5110 = vadd.f32 0.0, %v5109
        %v5111 = vpop.f32.mrb[0].mxu0
        %v5112 = vpop.f32.mrb[0].mxu0
        %v5113 = vadd.f32 0.0, %v5112
        %v5114 = vpop.f32.mrb[0].mxu0
        %5115 = vmatprep.mubr.bf16.mxu0 0
        %5116 = vmatmul.mubr.bf16.gmra.mrb[0].mxu0 %v4880
        %v5117 = vpop.f32.mrb[0].mxu0
        %v5118 = vadd.f32 0.0, %v5117
        %v5119 = vpop.f32.mrb[0].mxu0
        %v5120 = vpop.f32.mrb[0].mxu0
        %v5121 = vadd.f32 0.0, %v5120
        %v5122 = vpop.f32.mrb[0].mxu0
        %5123 = vmatprep.mubr.bf16.mxu0 0
        %5124 = vmatmul.mubr.bf16.gmra.mrb[0].mxu0 %v4883
        %v5125 = vpop.f32.mrb[0].mxu0
        %v5126 = vadd.f32 0.0, %v5125
        %v5127 = vpop.f32.mrb[0].mxu0
        %v5128 = vpop.f32.mrb[0].mxu0
        %v5129 = vadd.f32 0.0, %v5128
        %v5130 = vpop.f32.mrb[0].mxu0
        %5131 = vmatprep.mubr.bf16.mxu0 0
        %5132 = vmatmul.mubr.bf16.gmra.mrb[0].mxu0 %v4886
        %v5133 = vpop.f32.mrb[0].mxu0
        %v5134 = vadd.f32 0.0, %v5133
        %v5135 = vpop.f32.mrb[0].mxu0
        %v5136 = vpop.f32.mrb[0].mxu0
        %v5137 = vadd.f32 0.0, %v5136
        %v5138 = vpop.f32.mrb[0].mxu0
        %5139 = vmatprep.mubr.bf16.mxu0 0
        %5140 = vmatmul.mubr.bf16.gmra.mrb[0].mxu0 %v4889
        %v5141 = vpop.f32.mrb[0].mxu0
        %v5142 = vadd.f32 0.0, %v5141
        %v5143 = vpop.f32.mrb[0].mxu0
        %v5144 = vpop.f32.mrb[0].mxu0
        %v5145 = vadd.f32 0.0, %v5144
        %v5146 = vpop.f32.mrb[0].mxu0
        %5147 = vmatprep.mubr.bf16.mxu0 0
        %5148 = vmatmul.mubr.bf16.gmra.mrb[0].mxu0 %v4892
        %v5149 = vpop.f32.mrb[0].mxu0
        %v5150 = vadd.f32 0.0, %v5149
        %v5151 = vpop.f32.mrb[0].mxu0
        %v5152 = vpop.f32.mrb[0].mxu0
        %v5153 = vadd.f32 0.0, %v5152
        %v5154 = vpop.f32.mrb[0].mxu0
        %5155 = vmatprep.mubr.bf16.mxu0 0
        %5156 = vmatmul.mubr.bf16.gmra.mrb[0].mxu0 %v4895
        %v5157 = vpop.f32.mrb[0].mxu0
        %v5158 = vadd.f32 0.0, %v5157
        %v5159 = vpop.f32.mrb[0].mxu0
        %v5160 = vpop.f32.mrb[0].mxu0
        %v5161 = vadd.f32 0.0, %v5160
        %v5162 = vpop.f32.mrb[0].mxu0
        %5163 = vmatprep.mubr.bf16.mxu0 0
        %5164 = vmatmul.mubr.bf16.gmra.mrb[0].mxu0 %v4898
        %v5165 = vpop.f32.mrb[0].mxu0
        %v5166 = vadd.f32 0.0, %v5165
        %v5167 = vpop.f32.mrb[0].mxu0
        %v5168 = vpop.f32.mrb[0].mxu0
        %v5169 = vadd.f32 0.0, %v5168
        %v5170 = vpop.f32.mrb[0].mxu0
        %5171 = vmatprep.mubr.bf16.mxu0 0
        %5172 = vmatmul.mubr.bf16.gmra.mrb[0].mxu0 %v4901
        %v5173 = vpop.f32.mrb[0].mxu0
        %v5174 = vadd.f32 0.0, %v5173
        %v5175 = vpop.f32.mrb[0].mxu0
        %v5176 = vpop.f32.mrb[0].mxu0
        %v5177 = vadd.f32 0.0, %v5176
        %v5178 = vpop.f32.mrb[0].mxu0
        %5179 = vmatprep.mubr.bf16.mxu0 0
        %5180 = vmatmul.mubr.bf16.gmra.mrb[0].mxu0 %v4904
        %v5181 = vpop.f32.mrb[0].mxu0
        %v5182 = vadd.f32 0.0, %v5181
        %v5183 = vpop.f32.mrb[0].mxu0
        %v5184 = vpop.f32.mrb[0].mxu0
        %v5185 = vadd.f32 0.0, %v5184
        %v5186 = vpop.f32.mrb[0].mxu0
        %5187 = vmatprep.mubr.bf16.mxu0 0
        %5188 = vmatmul.mubr.bf16.gmra.mrb[0].mxu0 %v4907
        %v5189 = vpop.f32.mrb[0].mxu0
        %v5190 = vadd.f32 0.0, %v5189
        %v5191 = vpop.f32.mrb[0].mxu0
        %v5192 = vpop.f32.mrb[0].mxu0
        %v5193 = vadd.f32 0.0, %v5192
        %v5194 = vpop.f32.mrb[0].mxu0
        %5195 = vmatprep.mubr.bf16.mxu0 0
        %5196 = vmatmul.mubr.bf16.gmra.mrb[0].mxu0 %v4910
        %v5197 = vpop.f32.mrb[0].mxu0
        %v5198 = vadd.f32 0.0, %v5197
        %v5199 = vpop.f32.mrb[0].mxu0
        %v5200 = vpop.f32.mrb[0].mxu0
        %v5201 = vadd.f32 0.0, %v5200
        %v5202 = vpop.f32.mrb[0].mxu0
        %5203 = vdwg.mxu0
        %v5204 = vadd.f32 %v4161, %v4950
        %v5205 = vadd.f32 %v4162, %v4953
        %v5206 = vadd.f32 %v4163, %v4958
        %v5207 = vadd.f32 %v4164, %v4961
        %v5208 = vadd.f32 %v4165, %v4966
        %v5209 = vadd.f32 %v4166, %v4969
        %v5210 = vadd.f32 %v4167, %v4974
        %v5211 = vadd.f32 %v4168, %v4977
        %v5212 = vadd.f32 %v4169, %v4982
        %v5213 = vadd.f32 %v4170, %v4985
        %v5214 = vadd.f32 %v4171, %v4990
        %v5215 = vadd.f32 %v4172, %v4993
        %v5216 = vadd.f32 %v4173, %v4998
        %v5217 = vadd.f32 %v4174, %v5001
        %v5218 = vadd.f32 %v4175, %v5006
        %v5219 = vadd.f32 %v4176, %v5009
        %v5220 = vadd.f32 %v4177, %v5014
        %v5221 = vadd.f32 %v4178, %v5017
        %v5222 = vadd.f32 %v4179, %v5022
        %v5223 = vadd.f32 %v4180, %v5025
        %v5224 = vadd.f32 %v4181, %v5030
        %v5225 = vadd.f32 %v4182, %v5033
        %v5226 = vadd.f32 %v4183, %v5038
        %v5227 = vadd.f32 %v4184, %v5041
        %v5228 = vadd.f32 %v4185, %v5046
        %v5229 = vadd.f32 %v4186, %v5049
        %v5230 = vadd.f32 %v4187, %v5054
        %v5231 = vadd.f32 %v4188, %v5057
        %v5232 = vadd.f32 %v4189, %v5062
        %v5233 = vadd.f32 %v4190, %v5065
        %v5234 = vadd.f32 %v4191, %v5070
        %v5235 = vadd.f32 %v4192, %v5073
        %v5236 = vadd.f32 %v4193, %v5078
        %v5237 = vadd.f32 %v4194, %v5081
        %v5238 = vadd.f32 %v4195, %v5086
        %v5239 = vadd.f32 %v4196, %v5089
        %v5240 = vadd.f32 %v4197, %v5094
        %v5241 = vadd.f32 %v4198, %v5097
        %v5242 = vadd.f32 %v4199, %v5102
        %v5243 = vadd.f32 %v4200, %v5105
        %v5244 = vadd.f32 %v4201, %v5110
        %v5245 = vadd.f32 %v4202, %v5113
        %v5246 = vadd.f32 %v4203, %v5118
        %v5247 = vadd.f32 %v4204, %v5121
        %v5248 = vadd.f32 %v4205, %v5126
        %v5249 = vadd.f32 %v4206, %v5129
        %v5250 = vadd.f32 %v4207, %v5134
        %v5251 = vadd.f32 %v4208, %v5137
        %v5252 = vadd.f32 %v4209, %v5142
        %v5253 = vadd.f32 %v4210, %v5145
        %v5254 = vadd.f32 %v4211, %v5150
        %v5255 = vadd.f32 %v4212, %v5153
        %v5256 = vadd.f32 %v4213, %v5158
        %v5257 = vadd.f32 %v4214, %v5161
        %v5258 = vadd.f32 %v4215, %v5166
        %v5259 = vadd.f32 %v4216, %v5169
        %v5260 = vadd.f32 %v4217, %v5174
        %v5261 = vadd.f32 %v4218, %v5177
        %v5262 = vadd.f32 %v4219, %v5182
        %v5263 = vadd.f32 %v4220, %v5185
        %v5264 = vadd.f32 %v4221, %v5190
        %v5265 = vadd.f32 %v4222, %v5193
        %v5266 = vadd.f32 %v4223, %v5198
        %v5267 = vadd.f32 %v4224, %v5201
        %5300 = vrot.lane.b32.xlu0 %v4775, 120
        %v5301 = vpop.permute.xlu0 %5300
        %5302 = vrot.lane.b32.xlu0 %v4776, 120
        %v5303 = vpop.permute.xlu0 %5302
        %5304 = vrot.lane.b32.xlu0 %v4777, 120
        %v5305 = vpop.permute.xlu0 %5304
        %5306 = vrot.lane.b32.xlu0 %v4778, 120
        %v5307 = vpop.permute.xlu0 %5306
        %5308 = vrot.lane.b32.xlu0 %v4779, 120
        %v5309 = vpop.permute.xlu0 %5308
        %5310 = vrot.lane.b32.xlu0 %v4780, 120
        %v5311 = vpop.permute.xlu0 %5310
        %5312 = vrot.lane.b32.xlu0 %v4781, 120
        %v5313 = vpop.permute.xlu0 %5312
        %5314 = vrot.lane.b32.xlu0 %v4782, 120
        %v5315 = vpop.permute.xlu0 %5314
        %5316 = vrot.lane.b32.xlu0 %v4783, 120
        %v5317 = vpop.permute.xlu0 %5316
        %5318 = vrot.lane.b32.xlu0 %v4784, 120
        %v5319 = vpop.permute.xlu0 %5318
        %5320 = vrot.lane.b32.xlu0 %v4785, 120
        %v5321 = vpop.permute.xlu0 %5320
        %5322 = vrot.lane.b32.xlu0 %v4786, 120
        %v5323 = vpop.permute.xlu0 %5322
        %5324 = vrot.lane.b32.xlu0 %v4787, 120
        %v5325 = vpop.permute.xlu0 %5324
        %5326 = vrot.lane.b32.xlu0 %v4788, 120
        %v5327 = vpop.permute.xlu0 %5326
        %5328 = vrot.lane.b32.xlu0 %v4789, 120
        %v5329 = vpop.permute.xlu0 %5328
        %5330 = vrot.lane.b32.xlu0 %v4790, 120
        %v5331 = vpop.permute.xlu0 %5330
        %5332 = vrot.lane.b32.xlu0 %v4791, 120
        %v5333 = vpop.permute.xlu0 %5332
        %5334 = vrot.lane.b32.xlu0 %v4792, 120
        %v5335 = vpop.permute.xlu0 %5334
        %5336 = vrot.lane.b32.xlu0 %v4793, 120
        %v5337 = vpop.permute.xlu0 %5336
        %5338 = vrot.lane.b32.xlu0 %v4794, 120
        %v5339 = vpop.permute.xlu0 %5338
        %5340 = vrot.lane.b32.xlu0 %v4795, 120
        %v5341 = vpop.permute.xlu0 %5340
        %5342 = vrot.lane.b32.xlu0 %v4796, 120
        %v5343 = vpop.permute.xlu0 %5342
        %5344 = vrot.lane.b32.xlu0 %v4797, 120
        %v5345 = vpop.permute.xlu0 %5344
        %5346 = vrot.lane.b32.xlu0 %v4798, 120
        %v5347 = vpop.permute.xlu0 %5346
        %5348 = vrot.lane.b32.xlu0 %v4799, 120
        %v5349 = vpop.permute.xlu0 %5348
        %5350 = vrot.lane.b32.xlu0 %v4800, 120
        %v5351 = vpop.permute.xlu0 %5350
        %5352 = vrot.lane.b32.xlu0 %v4801, 120
        %v5353 = vpop.permute.xlu0 %5352
        %5354 = vrot.lane.b32.xlu0 %v4802, 120
        %v5355 = vpop.permute.xlu0 %5354
        %5356 = vrot.lane.b32.xlu0 %v4803, 120
        %v5357 = vpop.permute.xlu0 %5356
        %5358 = vrot.lane.b32.xlu0 %v4804, 120
        %v5359 = vpop.permute.xlu0 %5358
        %5360 = vrot.lane.b32.xlu0 %v4805, 120
        %v5361 = vpop.permute.xlu0 %5360
        %5362 = vrot.lane.b32.xlu0 %v4806, 120
        %v5363 = vpop.permute.xlu0 %5362
        %v5365 = vsel %vm2533, %v5301, 0
        %v5368 = vsel %vm2533, %v5303, 0
        %v5371 = vsel %vm2533, %v5305, 0
        %v5374 = vsel %vm2533, %v5307, 0
        %v5377 = vsel %vm2533, %v5309, 0
        %v5380 = vsel %vm2533, %v5311, 0
        %v5383 = vsel %vm2533, %v5313, 0
        %v5386 = vsel %vm2533, %v5315, 0
        %v5389 = vsel %vm2533, %v5317, 0
        %v5392 = vsel %vm2533, %v5319, 0
        %v5395 = vsel %vm2533, %v5321, 0
        %v5398 = vsel %vm2533, %v5323, 0
        %v5401 = vsel %vm2533, %v5325, 0
        %v5404 = vsel %vm2533, %v5327, 0
        %v5407 = vsel %vm2533, %v5329, 0
        %v5410 = vsel %vm2533, %v5331, 0
        %v5413 = vsel %vm2533, %v5333, 0
        %v5416 = vsel %vm2533, %v5335, 0
        %v5419 = vsel %vm2533, %v5337, 0
        %v5422 = vsel %vm2533, %v5339, 0
        %v5425 = vsel %vm2533, %v5341, 0
        %v5428 = vsel %vm2533, %v5343, 0
        %v5431 = vsel %vm2533, %v5345, 0
        %v5434 = vsel %vm2533, %v5347, 0
        %v5437 = vsel %vm2533, %v5349, 0
        %v5440 = vsel %vm2533, %v5351, 0
        %v5443 = vsel %vm2533, %v5353, 0
        %v5446 = vsel %vm2533, %v5355, 0
        %v5449 = vsel %vm2533, %v5357, 0
        %v5452 = vsel %vm2533, %v5359, 0
        %v5455 = vsel %vm2533, %v5361, 0
        %v5458 = vsel %vm2533, %v5363, 0
        %5460 = vmatprep.subr.bf16.mxu0 0
        %5461 = vmatpush1.bf16.msra.mxu0 %v4813
        %5462 = vmatprep.subr.bf16.mxu0 0
        %5463 = vmatpush1.bf16.msra.mxu0 %v4913
        %5464 = vmatprep.subr.bf16.mxu0 0
        %5465 = vmatpush1.bf16.msra.mxu0 0
        %5466 = vmatprep.subr.bf16.mxu0 0
        %5467 = vmatpush1.bf16.msra.mxu0 0
        %5468 = vmatprep.subr.bf16.mxu0 0
        %5469 = vmatpush1.bf16.msra.mxu0 0
        %5470 = vmatprep.subr.bf16.mxu0 0
        %5471 = vmatpush1.bf16.msra.mxu0 0
        %5472 = vmatprep.subr.bf16.mxu0 0
        %5473 = vmatpush1.bf16.msra.mxu0 0
        %5474 = vmatprep.subr.bf16.mxu0 0
        %5475 = vmatpush1.bf16.msra.mxu0 0
        %5476 = vmatprep.subr.bf16.mxu0 0
        %5477 = vmatpush1.bf16.msra.mxu0 0
        %5478 = vmatprep.subr.bf16.mxu0 0
        %5479 = vmatpush1.bf16.msra.mxu0 0
        %5480 = vmatprep.subr.bf16.mxu0 0
        %5481 = vmatpush1.bf16.msra.mxu0 0
        %5482 = vmatprep.subr.bf16.mxu0 0
        %5483 = vmatpush1.bf16.msra.mxu0 0
        %5484 = vmatprep.subr.bf16.mxu0 0
        %5485 = vmatpush1.bf16.msra.mxu0 0
        %5486 = vmatprep.subr.bf16.mxu0 0
        %5487 = vmatpush1.bf16.msra.mxu0 0
        %5488 = vmatprep.subr.bf16.mxu0 0
        %5489 = vmatpush1.bf16.msra.mxu0 0
        %5490 = vmatprep.subr.bf16.mxu0 0
        %5491 = vmatpush1.bf16.msra.mxu0 0
        %5492 = vmatprep.mubr.bf16.mxu0 0
        %5493 = vmatmul.mubr.bf16.gmra.mrb[0].mxu0 %v5365
        %v5494 = vpop.f32.mrb[0].mxu0
        %v5495 = vadd.f32 0.0, %v5494
        %v5496 = vpop.f32.mrb[0].mxu0
        %v5497 = vpop.f32.mrb[0].mxu0
        %v5498 = vadd.f32 0.0, %v5497
        %v5499 = vpop.f32.mrb[0].mxu0
        %5500 = vmatprep.mubr.bf16.mxu0 0
        %5501 = vmatmul.mubr.bf16.gmra.mrb[0].mxu0 %v5368
        %v5502 = vpop.f32.mrb[0].mxu0
        %v5503 = vadd.f32 0.0, %v5502
        %v5504 = vpop.f32.mrb[0].mxu0
        %v5505 = vpop.f32.mrb[0].mxu0
        %v5506 = vadd.f32 0.0, %v5505
        %v5507 = vpop.f32.mrb[0].mxu0
        %5508 = vmatprep.mubr.bf16.mxu0 0
        %5509 = vmatmul.mubr.bf16.gmra.mrb[0].mxu0 %v5371
        %v5510 = vpop.f32.mrb[0].mxu0
        %v5511 = vadd.f32 0.0, %v5510
        %v5512 = vpop.f32.mrb[0].mxu0
        %v5513 = vpop.f32.mrb[0].mxu0
        %v5514 = vadd.f32 0.0, %v5513
        %v5515 = vpop.f32.mrb[0].mxu0
        %5516 = vmatprep.mubr.bf16.mxu0 0
        %5517 = vmatmul.mubr.bf16.gmra.mrb[0].mxu0 %v5374
        %v5518 = vpop.f32.mrb[0].mxu0
        %v5519 = vadd.f32 0.0, %v5518
        %v5520 = vpop.f32.mrb[0].mxu0
        %v5521 = vpop.f32.mrb[0].mxu0
        %v5522 = vadd.f32 0.0, %v5521
        %v5523 = vpop.f32.mrb[0].mxu0
        %5524 = vmatprep.mubr.bf16.mxu0 0
        %5525 = vmatmul.mubr.bf16.gmra.mrb[0].mxu0 %v5377
        %v5526 = vpop.f32.mrb[0].mxu0
        %v5527 = vadd.f32 0.0, %v5526
        %v5528 = vpop.f32.mrb[0].mxu0
        %v5529 = vpop.f32.mrb[0].mxu0
        %v5530 = vadd.f32 0.0, %v5529
        %v5531 = vpop.f32.mrb[0].mxu0
        %5532 = vmatprep.mubr.bf16.mxu0 0
        %5533 = vmatmul.mubr.bf16.gmra.mrb[0].mxu0 %v5380
        %v5534 = vpop.f32.mrb[0].mxu0
        %v5535 = vadd.f32 0.0, %v5534
        %v5536 = vpop.f32.mrb[0].mxu0
        %v5537 = vpop.f32.mrb[0].mxu0
        %v5538 = vadd.f32 0.0, %v5537
        %v5539 = vpop.f32.mrb[0].mxu0
        %5540 = vmatprep.mubr.bf16.mxu0 0
        %5541 = vmatmul.mubr.bf16.gmra.mrb[0].mxu0 %v5383
        %v5542 = vpop.f32.mrb[0].mxu0
        %v5543 = vadd.f32 0.0, %v5542
        %v5544 = vpop.f32.mrb[0].mxu0
        %v5545 = vpop.f32.mrb[0].mxu0
        %v5546 = vadd.f32 0.0, %v5545
        %v5547 = vpop.f32.mrb[0].mxu0
        %5548 = vmatprep.mubr.bf16.mxu0 0
        %5549 = vmatmul.mubr.bf16.gmra.mrb[0].mxu0 %v5386
        %v5550 = vpop.f32.mrb[0].mxu0
        %v5551 = vadd.f32 0.0, %v5550
        %v5552 = vpop.f32.mrb[0].mxu0
        %v5553 = vpop.f32.mrb[0].mxu0
        %v5554 = vadd.f32 0.0, %v5553
        %v5555 = vpop.f32.mrb[0].mxu0
        %5556 = vmatprep.mubr.bf16.mxu0 0
        %5557 = vmatmul.mubr.bf16.gmra.mrb[0].mxu0 %v5389
        %v5558 = vpop.f32.mrb[0].mxu0
        %v5559 = vadd.f32 0.0, %v5558
        %v5560 = vpop.f32.mrb[0].mxu0
        %v5561 = vpop.f32.mrb[0].mxu0
        %v5562 = vadd.f32 0.0, %v5561
        %v5563 = vpop.f32.mrb[0].mxu0
        %5564 = vmatprep.mubr.bf16.mxu0 0
        %5565 = vmatmul.mubr.bf16.gmra.mrb[0].mxu0 %v5392
        %v5566 = vpop.f32.mrb[0].mxu0
        %v5567 = vadd.f32 0.0, %v5566
        %v5568 = vpop.f32.mrb[0].mxu0
        %v5569 = vpop.f32.mrb[0].mxu0
        %v5570 = vadd.f32 0.0, %v5569
        %v5571 = vpop.f32.mrb[0].mxu0
        %5572 = vmatprep.mubr.bf16.mxu0 0
        %5573 = vmatmul.mubr.bf16.gmra.mrb[0].mxu0 %v5395
        %v5574 = vpop.f32.mrb[0].mxu0
        %v5575 = vadd.f32 0.0, %v5574
        %v5576 = vpop.f32.mrb[0].mxu0
        %v5577 = vpop.f32.mrb[0].mxu0
        %v5578 = vadd.f32 0.0, %v5577
        %v5579 = vpop.f32.mrb[0].mxu0
        %5580 = vmatprep.mubr.bf16.mxu0 0
        %5581 = vmatmul.mubr.bf16.gmra.mrb[0].mxu0 %v5398
        %v5582 = vpop.f32.mrb[0].mxu0
        %v5583 = vadd.f32 0.0, %v5582
        %v5584 = vpop.f32.mrb[0].mxu0
        %v5585 = vpop.f32.mrb[0].mxu0
        %v5586 = vadd.f32 0.0, %v5585
        %v5587 = vpop.f32.mrb[0].mxu0
        %5588 = vmatprep.mubr.bf16.mxu0 0
        %5589 = vmatmul.mubr.bf16.gmra.mrb[0].mxu0 %v5401
        %v5590 = vpop.f32.mrb[0].mxu0
        %v5591 = vadd.f32 0.0, %v5590
        %v5592 = vpop.f32.mrb[0].mxu0
        %v5593 = vpop.f32.mrb[0].mxu0
        %v5594 = vadd.f32 0.0, %v5593
        %v5595 = vpop.f32.mrb[0].mxu0
        %5596 = vmatprep.mubr.bf16.mxu0 0
        %5597 = vmatmul.mubr.bf16.gmra.mrb[0].mxu0 %v5404
        %v5598 = vpop.f32.mrb[0].mxu0
        %v5599 = vadd.f32 0.0, %v5598
        %v5600 = vpop.f32.mrb[0].mxu0
        %v5601 = vpop.f32.mrb[0].mxu0
        %v5602 = vadd.f32 0.0, %v5601
        %v5603 = vpop.f32.mrb[0].mxu0
        %5604 = vmatprep.mubr.bf16.mxu0 0
        %5605 = vmatmul.mubr.bf16.gmra.mrb[0].mxu0 %v5407
        %v5606 = vpop.f32.mrb[0].mxu0
        %v5607 = vadd.f32 0.0, %v5606
        %v5608 = vpop.f32.mrb[0].mxu0
        %v5609 = vpop.f32.mrb[0].mxu0
        %v5610 = vadd.f32 0.0, %v5609
        %v5611 = vpop.f32.mrb[0].mxu0
        %5612 = vmatprep.mubr.bf16.mxu0 0
        %5613 = vmatmul.mubr.bf16.gmra.mrb[0].mxu0 %v5410
        %v5614 = vpop.f32.mrb[0].mxu0
        %v5615 = vadd.f32 0.0, %v5614
        %v5616 = vpop.f32.mrb[0].mxu0
        %v5617 = vpop.f32.mrb[0].mxu0
        %v5618 = vadd.f32 0.0, %v5617
        %v5619 = vpop.f32.mrb[0].mxu0
        %5620 = vmatprep.mubr.bf16.mxu0 0
        %5621 = vmatmul.mubr.bf16.gmra.mrb[0].mxu0 %v5413
        %v5622 = vpop.f32.mrb[0].mxu0
        %v5623 = vadd.f32 0.0, %v5622
        %v5624 = vpop.f32.mrb[0].mxu0
        %v5625 = vpop.f32.mrb[0].mxu0
        %v5626 = vadd.f32 0.0, %v5625
        %v5627 = vpop.f32.mrb[0].mxu0
        %5628 = vmatprep.mubr.bf16.mxu0 0
        %5629 = vmatmul.mubr.bf16.gmra.mrb[0].mxu0 %v5416
        %v5630 = vpop.f32.mrb[0].mxu0
        %v5631 = vadd.f32 0.0, %v5630
        %v5632 = vpop.f32.mrb[0].mxu0
        %v5633 = vpop.f32.mrb[0].mxu0
        %v5634 = vadd.f32 0.0, %v5633
        %v5635 = vpop.f32.mrb[0].mxu0
        %5636 = vmatprep.mubr.bf16.mxu0 0
        %5637 = vmatmul.mubr.bf16.gmra.mrb[0].mxu0 %v5419
        %v5638 = vpop.f32.mrb[0].mxu0
        %v5639 = vadd.f32 0.0, %v5638
        %v5640 = vpop.f32.mrb[0].mxu0
        %v5641 = vpop.f32.mrb[0].mxu0
        %v5642 = vadd.f32 0.0, %v5641
        %v5643 = vpop.f32.mrb[0].mxu0
        %5644 = vmatprep.mubr.bf16.mxu0 0
        %5645 = vmatmul.mubr.bf16.gmra.mrb[0].mxu0 %v5422
        %v5646 = vpop.f32.mrb[0].mxu0
        %v5647 = vadd.f32 0.0, %v5646
        %v5648 = vpop.f32.mrb[0].mxu0
        %v5649 = vpop.f32.mrb[0].mxu0
        %v5650 = vadd.f32 0.0, %v5649
        %v5651 = vpop.f32.mrb[0].mxu0
        %5652 = vmatprep.mubr.bf16.mxu0 0
        %5653 = vmatmul.mubr.bf16.gmra.mrb[0].mxu0 %v5425
        %v5654 = vpop.f32.mrb[0].mxu0
        %v5655 = vadd.f32 0.0, %v5654
        %v5656 = vpop.f32.mrb[0].mxu0
        %v5657 = vpop.f32.mrb[0].mxu0
        %v5658 = vadd.f32 0.0, %v5657
        %v5659 = vpop.f32.mrb[0].mxu0
        %5660 = vmatprep.mubr.bf16.mxu0 0
        %5661 = vmatmul.mubr.bf16.gmra.mrb[0].mxu0 %v5428
        %v5662 = vpop.f32.mrb[0].mxu0
        %v5663 = vadd.f32 0.0, %v5662
        %v5664 = vpop.f32.mrb[0].mxu0
        %v5665 = vpop.f32.mrb[0].mxu0
        %v5666 = vadd.f32 0.0, %v5665
        %v5667 = vpop.f32.mrb[0].mxu0
        %5668 = vmatprep.mubr.bf16.mxu0 0
        %5669 = vmatmul.mubr.bf16.gmra.mrb[0].mxu0 %v5431
        %v5670 = vpop.f32.mrb[0].mxu0
        %v5671 = vadd.f32 0.0, %v5670
        %v5672 = vpop.f32.mrb[0].mxu0
        %v5673 = vpop.f32.mrb[0].mxu0
        %v5674 = vadd.f32 0.0, %v5673
        %v5675 = vpop.f32.mrb[0].mxu0
        %5676 = vmatprep.mubr.bf16.mxu0 0
        %5677 = vmatmul.mubr.bf16.gmra.mrb[0].mxu0 %v5434
        %v5678 = vpop.f32.mrb[0].mxu0
        %v5679 = vadd.f32 0.0, %v5678
        %v5680 = vpop.f32.mrb[0].mxu0
        %v5681 = vpop.f32.mrb[0].mxu0
        %v5682 = vadd.f32 0.0, %v5681
        %v5683 = vpop.f32.mrb[0].mxu0
        %5684 = vmatprep.mubr.bf16.mxu0 0
        %5685 = vmatmul.mubr.bf16.gmra.mrb[0].mxu0 %v5437
        %v5686 = vpop.f32.mrb[0].mxu0
        %v5687 = vadd.f32 0.0, %v5686
        %v5688 = vpop.f32.mrb[0].mxu0
        %v5689 = vpop.f32.mrb[0].mxu0
        %v5690 = vadd.f32 0.0, %v5689
        %v5691 = vpop.f32.mrb[0].mxu0
        %5692 = vmatprep.mubr.bf16.mxu0 0
        %5693 = vmatmul.mubr.bf16.gmra.mrb[0].mxu0 %v5440
        %v5694 = vpop.f32.mrb[0].mxu0
        %v5695 = vadd.f32 0.0, %v5694
        %v5696 = vpop.f32.mrb[0].mxu0
        %v5697 = vpop.f32.mrb[0].mxu0
        %v5698 = vadd.f32 0.0, %v5697
        %v5699 = vpop.f32.mrb[0].mxu0
        %5700 = vmatprep.mubr.bf16.mxu0 0
        %5701 = vmatmul.mubr.bf16.gmra.mrb[0].mxu0 %v5443
        %v5702 = vpop.f32.mrb[0].mxu0
        %v5703 = vadd.f32 0.0, %v5702
        %v5704 = vpop.f32.mrb[0].mxu0
        %v5705 = vpop.f32.mrb[0].mxu0
        %v5706 = vadd.f32 0.0, %v5705
        %v5707 = vpop.f32.mrb[0].mxu0
        %5708 = vmatprep.mubr.bf16.mxu0 0
        %5709 = vmatmul.mubr.bf16.gmra.mrb[0].mxu0 %v5446
        %v5710 = vpop.f32.mrb[0].mxu0
        %v5711 = vadd.f32 0.0, %v5710
        %v5712 = vpop.f32.mrb[0].mxu0
        %v5713 = vpop.f32.mrb[0].mxu0
        %v5714 = vadd.f32 0.0, %v5713
        %v5715 = vpop.f32.mrb[0].mxu0
        %5716 = vmatprep.mubr.bf16.mxu0 0
        %5717 = vmatmul.mubr.bf16.gmra.mrb[0].mxu0 %v5449
        %v5718 = vpop.f32.mrb[0].mxu0
        %v5719 = vadd.f32 0.0, %v5718
        %v5720 = vpop.f32.mrb[0].mxu0
        %v5721 = vpop.f32.mrb[0].mxu0
        %v5722 = vadd.f32 0.0, %v5721
        %v5723 = vpop.f32.mrb[0].mxu0
        %5724 = vmatprep.mubr.bf16.mxu0 0
        %5725 = vmatmul.mubr.bf16.gmra.mrb[0].mxu0 %v5452
        %v5726 = vpop.f32.mrb[0].mxu0
        %v5727 = vadd.f32 0.0, %v5726
        %v5728 = vpop.f32.mrb[0].mxu0
        %v5729 = vpop.f32.mrb[0].mxu0
        %v5730 = vadd.f32 0.0, %v5729
        %v5731 = vpop.f32.mrb[0].mxu0
        %5732 = vmatprep.mubr.bf16.mxu0 0
        %5733 = vmatmul.mubr.bf16.gmra.mrb[0].mxu0 %v5455
        %v5734 = vpop.f32.mrb[0].mxu0
        %v5735 = vadd.f32 0.0, %v5734
        %v5736 = vpop.f32.mrb[0].mxu0
        %v5737 = vpop.f32.mrb[0].mxu0
        %v5738 = vadd.f32 0.0, %v5737
        %v5739 = vpop.f32.mrb[0].mxu0
        %5740 = vmatprep.mubr.bf16.mxu0 0
        %5741 = vmatmul.mubr.bf16.gmra.mrb[0].mxu0 %v5458
        %v5742 = vpop.f32.mrb[0].mxu0
        %v5743 = vadd.f32 0.0, %v5742
        %v5744 = vpop.f32.mrb[0].mxu0
        %v5745 = vpop.f32.mrb[0].mxu0
        %v5746 = vadd.f32 0.0, %v5745
        %v5747 = vpop.f32.mrb[0].mxu0
        %5748 = vdwg.mxu0
        %v5749 = vadd.f32 %v4706, %v5495
        %v5750 = vadd.f32 %v4707, %v5498
        %v5751 = vadd.f32 %v4708, %v5503
        %v5752 = vadd.f32 %v4709, %v5506
        %v5753 = vadd.f32 %v4710, %v5511
        %v5754 = vadd.f32 %v4711, %v5514
        %v5755 = vadd.f32 %v4712, %v5519
        %v5756 = vadd.f32 %v4713, %v5522
        %v5757 = vadd.f32 %v4714, %v5527
        %v5758 = vadd.f32 %v4715, %v5530
        %v5759 = vadd.f32 %v4716, %v5535
        %v5760 = vadd.f32 %v4717, %v5538
        %v5761 = vadd.f32 %v4718, %v5543
        %v5762 = vadd.f32 %v4719, %v5546
        %v5763 = vadd.f32 %v4720, %v5551
        %v5764 = vadd.f32 %v4721, %v5554
        %v5765 = vadd.f32 %v4722, %v5559
        %v5766 = vadd.f32 %v4723, %v5562
        %v5767 = vadd.f32 %v4724, %v5567
        %v5768 = vadd.f32 %v4725, %v5570
        %v5769 = vadd.f32 %v4726, %v5575
        %v5770 = vadd.f32 %v4727, %v5578
        %v5771 = vadd.f32 %v4728, %v5583
        %v5772 = vadd.f32 %v4729, %v5586
        %v5773 = vadd.f32 %v4730, %v5591
        %v5774 = vadd.f32 %v4731, %v5594
        %v5775 = vadd.f32 %v4732, %v5599
        %v5776 = vadd.f32 %v4733, %v5602
        %v5777 = vadd.f32 %v4734, %v5607
        %v5778 = vadd.f32 %v4735, %v5610
        %v5779 = vadd.f32 %v4736, %v5615
        %v5780 = vadd.f32 %v4737, %v5618
        %v5781 = vadd.f32 %v4738, %v5623
        %v5782 = vadd.f32 %v4739, %v5626
        %v5783 = vadd.f32 %v4740, %v5631
        %v5784 = vadd.f32 %v4741, %v5634
        %v5785 = vadd.f32 %v4742, %v5639
        %v5786 = vadd.f32 %v4743, %v5642
        %v5787 = vadd.f32 %v4744, %v5647
        %v5788 = vadd.f32 %v4745, %v5650
        %v5789 = vadd.f32 %v4746, %v5655
        %v5790 = vadd.f32 %v4747, %v5658
        %v5791 = vadd.f32 %v4748, %v5663
        %v5792 = vadd.f32 %v4749, %v5666
        %v5793 = vadd.f32 %v4750, %v5671
        %v5794 = vadd.f32 %v4751, %v5674
        %v5795 = vadd.f32 %v4752, %v5679
        %v5796 = vadd.f32 %v4753, %v5682
        %v5797 = vadd.f32 %v4754, %v5687
        %v5798 = vadd.f32 %v4755, %v5690
        %v5799 = vadd.f32 %v4756, %v5695
        %v5800 = vadd.f32 %v4757, %v5698
        %v5801 = vadd.f32 %v4758, %v5703
        %v5802 = vadd.f32 %v4759, %v5706
        %v5803 = vadd.f32 %v4760, %v5711
        %v5804 = vadd.f32 %v4761, %v5714
        %v5805 = vadd.f32 %v4762, %v5719
        %v5806 = vadd.f32 %v4763, %v5722
        %v5807 = vadd.f32 %v4764, %v5727
        %v5808 = vadd.f32 %v4765, %v5730
        %v5809 = vadd.f32 %v4766, %v5735
        %v5810 = vadd.f32 %v4767, %v5738
        %v5811 = vadd.f32 %v4768, %v5743
        %v5812 = vadd.f32 %v4769, %v5746
        %v5813 = vpack.c.bf16 %v5205, %v5204
        %v5814 = vpack.c.bf16 %v5207, %v5206
        %v5815 = vpack.c.bf16 %v5209, %v5208
        %v5816 = vpack.c.bf16 %v5211, %v5210
        %v5817 = vpack.c.bf16 %v5213, %v5212
        %v5818 = vpack.c.bf16 %v5215, %v5214
        %v5819 = vpack.c.bf16 %v5217, %v5216
        %v5820 = vpack.c.bf16 %v5219, %v5218
        %v5821 = vpack.c.bf16 %v5221, %v5220
        %v5822 = vpack.c.bf16 %v5223, %v5222
        %v5823 = vpack.c.bf16 %v5225, %v5224
        %v5824 = vpack.c.bf16 %v5227, %v5226
        %v5825 = vpack.c.bf16 %v5229, %v5228
        %v5826 = vpack.c.bf16 %v5231, %v5230
        %v5827 = vpack.c.bf16 %v5233, %v5232
        %v5828 = vpack.c.bf16 %v5235, %v5234
        %v5829 = vpack.c.bf16 %v5237, %v5236
        %v5830 = vpack.c.bf16 %v5239, %v5238
        %v5831 = vpack.c.bf16 %v5241, %v5240
        %v5832 = vpack.c.bf16 %v5243, %v5242
        %v5833 = vpack.c.bf16 %v5245, %v5244
        %v5834 = vpack.c.bf16 %v5247, %v5246
        %v5835 = vpack.c.bf16 %v5249, %v5248
        %v5836 = vpack.c.bf16 %v5251, %v5250
        %v5837 = vpack.c.bf16 %v5253, %v5252
        %v5838 = vpack.c.bf16 %v5255, %v5254
        %v5839 = vpack.c.bf16 %v5257, %v5256
        %v5840 = vpack.c.bf16 %v5259, %v5258
        %v5841 = vpack.c.bf16 %v5261, %v5260
        %v5842 = vpack.c.bf16 %v5263, %v5262
        %v5843 = vpack.c.bf16 %v5265, %v5264
        %v5844 = vpack.c.bf16 %v5267, %v5266
        %v5877 = vunpack.c.l.b16 %v5813
        %v5878 = vunpack.c.h.b16 %v5813
        %v5879 = vunpack.c.l.b16 %v5814
        %v5880 = vunpack.c.h.b16 %v5814
        %v5881 = vunpack.c.l.b16 %v5815
        %v5882 = vunpack.c.h.b16 %v5815
        %v5883 = vunpack.c.l.b16 %v5816
        %v5884 = vunpack.c.h.b16 %v5816
        %v5885 = vunpack.c.l.b16 %v5817
        %v5886 = vunpack.c.h.b16 %v5817
        %v5887 = vunpack.c.l.b16 %v5818
        %v5888 = vunpack.c.h.b16 %v5818
        %v5889 = vunpack.c.l.b16 %v5819
        %v5890 = vunpack.c.h.b16 %v5819
        %v5891 = vunpack.c.l.b16 %v5820
        %v5892 = vunpack.c.h.b16 %v5820
        %v5893 = vunpack.c.l.b16 %v5821
        %v5894 = vunpack.c.h.b16 %v5821
        %v5895 = vunpack.c.l.b16 %v5822
        %v5896 = vunpack.c.h.b16 %v5822
        %v5897 = vunpack.c.l.b16 %v5823
        %v5898 = vunpack.c.h.b16 %v5823
        %v5899 = vunpack.c.l.b16 %v5824
        %v5900 = vunpack.c.h.b16 %v5824
        %v5901 = vunpack.c.l.b16 %v5825
        %v5902 = vunpack.c.h.b16 %v5825
        %v5903 = vunpack.c.l.b16 %v5826
        %v5904 = vunpack.c.h.b16 %v5826
        %v5905 = vunpack.c.l.b16 %v5827
        %v5906 = vunpack.c.h.b16 %v5827
        %v5907 = vunpack.c.l.b16 %v5828
        %v5908 = vunpack.c.h.b16 %v5828
        %v5909 = vunpack.c.l.b16 %v5829
        %v5910 = vunpack.c.h.b16 %v5829
        %v5911 = vunpack.c.l.b16 %v5830
        %v5912 = vunpack.c.h.b16 %v5830
        %v5913 = vunpack.c.l.b16 %v5831
        %v5914 = vunpack.c.h.b16 %v5831
        %v5915 = vunpack.c.l.b16 %v5832
        %v5916 = vunpack.c.h.b16 %v5832
        %v5917 = vunpack.c.l.b16 %v5833
        %v5918 = vunpack.c.h.b16 %v5833
        %v5919 = vunpack.c.l.b16 %v5834
        %v5920 = vunpack.c.h.b16 %v5834
        %v5921 = vunpack.c.l.b16 %v5835
        %v5922 = vunpack.c.h.b16 %v5835
        %v5923 = vunpack.c.l.b16 %v5836
        %v5924 = vunpack.c.h.b16 %v5836
        %v5925 = vunpack.c.l.b16 %v5837
        %v5926 = vunpack.c.h.b16 %v5837
        %v5927 = vunpack.c.l.b16 %v5838
        %v5928 = vunpack.c.h.b16 %v5838
        %v5929 = vunpack.c.l.b16 %v5839
        %v5930 = vunpack.c.h.b16 %v5839
        %v5931 = vunpack.c.l.b16 %v5840
        %v5932 = vunpack.c.h.b16 %v5840
        %v5933 = vunpack.c.l.b16 %v5841
        %v5934 = vunpack.c.h.b16 %v5841
        %v5935 = vunpack.c.l.b16 %v5842
        %v5936 = vunpack.c.h.b16 %v5842
        %v5937 = vunpack.c.l.b16 %v5843
        %v5938 = vunpack.c.h.b16 %v5843
        %v5939 = vunpack.c.l.b16 %v5844
        %v5940 = vunpack.c.h.b16 %v5844
        %v5941 = vpack.c.b16 %v5877, %v5877
        %v5942 = vpack.c.b16 %v5878, %v5878
        %v5943 = vpack.c.b16 %v5879, %v5879
        %v5944 = vpack.c.b16 %v5880, %v5880
        %v5945 = vpack.c.b16 %v5881, %v5881
        %v5946 = vpack.c.b16 %v5882, %v5882
        %v5947 = vpack.c.b16 %v5883, %v5883
        %v5948 = vpack.c.b16 %v5884, %v5884
        %v5949 = vpack.c.b16 %v5885, %v5885
        %v5950 = vpack.c.b16 %v5886, %v5886
        %v5951 = vpack.c.b16 %v5887, %v5887
        %v5952 = vpack.c.b16 %v5888, %v5888
        %v5953 = vpack.c.b16 %v5889, %v5889
        %v5954 = vpack.c.b16 %v5890, %v5890
        %v5955 = vpack.c.b16 %v5891, %v5891
        %v5956 = vpack.c.b16 %v5892, %v5892
        %v5957 = vpack.c.b16 %v5893, %v5893
        %v5958 = vpack.c.b16 %v5894, %v5894
        %v5959 = vpack.c.b16 %v5895, %v5895
        %v5960 = vpack.c.b16 %v5896, %v5896
        %v5961 = vpack.c.b16 %v5897, %v5897
        %v5962 = vpack.c.b16 %v5898, %v5898
        %v5963 = vpack.c.b16 %v5899, %v5899
        %v5964 = vpack.c.b16 %v5900, %v5900
        %v5965 = vpack.c.b16 %v5901, %v5901
        %v5966 = vpack.c.b16 %v5902, %v5902
        %v5967 = vpack.c.b16 %v5903, %v5903
        %v5968 = vpack.c.b16 %v5904, %v5904
        %v5969 = vpack.c.b16 %v5905, %v5905
        %v5970 = vpack.c.b16 %v5906, %v5906
        %v5971 = vpack.c.b16 %v5907, %v5907
        %v5972 = vpack.c.b16 %v5908, %v5908
        %v5973 = vpack.c.b16 %v5909, %v5909
        %v5974 = vpack.c.b16 %v5910, %v5910
        %v5975 = vpack.c.b16 %v5911, %v5911
        %v5976 = vpack.c.b16 %v5912, %v5912
        %v5977 = vpack.c.b16 %v5913, %v5913
        %v5978 = vpack.c.b16 %v5914, %v5914
        %v5979 = vpack.c.b16 %v5915, %v5915
        %v5980 = vpack.c.b16 %v5916, %v5916
        %v5981 = vpack.c.b16 %v5917, %v5917
        %v5982 = vpack.c.b16 %v5918, %v5918
        %v5983 = vpack.c.b16 %v5919, %v5919
        %v5984 = vpack.c.b16 %v5920, %v5920
        %v5985 = vpack.c.b16 %v5921, %v5921
        %v5986 = vpack.c.b16 %v5922, %v5922
        %v5987 = vpack.c.b16 %v5923, %v5923
        %v5988 = vpack.c.b16 %v5924, %v5924
        %v5989 = vpack.c.b16 %v5925, %v5925
        %v5990 = vpack.c.b16 %v5926, %v5926
        %v5991 = vpack.c.b16 %v5927, %v5927
        %v5992 = vpack.c.b16 %v5928, %v5928
        %v5993 = vpack.c.b16 %v5929, %v5929
        %v5994 = vpack.c.b16 %v5930, %v5930
        %v5995 = vpack.c.b16 %v5931, %v5931
        %v5996 = vpack.c.b16 %v5932, %v5932
        %v5997 = vpack.c.b16 %v5933, %v5933
        %v5998 = vpack.c.b16 %v5934, %v5934
        %v5999 = vpack.c.b16 %v5935, %v5935
        %v6000 = vpack.c.b16 %v5936, %v5936
        %v6001 = vpack.c.b16 %v5937, %v5937
        %v6002 = vpack.c.b16 %v5938, %v5938
        %v6003 = vpack.c.b16 %v5939, %v5939
        %v6004 = vpack.c.b16 %v5940, %v5940
        %vm6069 = vcmask 27648
        %6070 = vst.msk [vmem:[%s229] sm:$0xf] %vm6069, %v5941
        %6071 = vst.msk [vmem:[%s229 + $0x4] sm:$0xf] %vm6069, %v5942
        %6072 = vst.msk [vmem:[%s229 + $0x8] sm:$0xf] %vm6069, %v5943
        %6073 = vst.msk [vmem:[%s229 + $0xc] sm:$0xf] %vm6069, %v5944
        %6074 = vst.msk [vmem:[%s229 + $0x10] sm:$0xf] %vm6069, %v5945
        %6075 = vst.msk [vmem:[%s229 + $0x14] sm:$0xf] %vm6069, %v5946
        %6076 = vst.msk [vmem:[%s229 + $0x18] sm:$0xf] %vm6069, %v5947
        %6077 = vst.msk [vmem:[%s229 + $0x1c] sm:$0xf] %vm6069, %v5948
        %6078 = vst.msk [vmem:[%s229 + $0x20] sm:$0xf] %vm6069, %v5949
        %6079 = vst.msk [vmem:[%s229 + $0x24] sm:$0xf] %vm6069, %v5950
        %6080 = vst.msk [vmem:[%s229 + $0x28] sm:$0xf] %vm6069, %v5951
        %6081 = vst.msk [vmem:[%s229 + $0x2c] sm:$0xf] %vm6069, %v5952
        %6082 = vst.msk [vmem:[%s229 + $0x30] sm:$0xf] %vm6069, %v5953
        %6083 = vst.msk [vmem:[%s229 + $0x34] sm:$0xf] %vm6069, %v5954
        %6084 = vst.msk [vmem:[%s229 + $0x38] sm:$0xf] %vm6069, %v5955
        %6085 = vst.msk [vmem:[%s229 + $0x3c] sm:$0xf] %vm6069, %v5956
        %6086 = vst.msk [vmem:[%s229 + $0x40] sm:$0xf] %vm6069, %v5957
        %6087 = vst.msk [vmem:[%s229 + $0x44] sm:$0xf] %vm6069, %v5958
        %6088 = vst.msk [vmem:[%s229 + $0x48] sm:$0xf] %vm6069, %v5959
        %6089 = vst.msk [vmem:[%s229 + $0x4c] sm:$0xf] %vm6069, %v5960
        %6090 = vst.msk [vmem:[%s229 + $0x50] sm:$0xf] %vm6069, %v5961
        %6091 = vst.msk [vmem:[%s229 + $0x54] sm:$0xf] %vm6069, %v5962
        %6092 = vst.msk [vmem:[%s229 + $0x58] sm:$0xf] %vm6069, %v5963
        %6093 = vst.msk [vmem:[%s229 + $0x5c] sm:$0xf] %vm6069, %v5964
        %6094 = vst.msk [vmem:[%s229 + $0x60] sm:$0xf] %vm6069, %v5965
        %6095 = vst.msk [vmem:[%s229 + $0x64] sm:$0xf] %vm6069, %v5966
        %6096 = vst.msk [vmem:[%s229 + $0x68] sm:$0xf] %vm6069, %v5967
        %6097 = vst.msk [vmem:[%s229 + $0x6c] sm:$0xf] %vm6069, %v5968
        %6098 = vst.msk [vmem:[%s229 + $0x70] sm:$0xf] %vm6069, %v5969
        %6099 = vst.msk [vmem:[%s229 + $0x74] sm:$0xf] %vm6069, %v5970
        %6100 = vst.msk [vmem:[%s229 + $0x78] sm:$0xf] %vm6069, %v5971
        %6101 = vst.msk [vmem:[%s229 + $0x7c] sm:$0xf] %vm6069, %v5972
        %6102 = vst.msk [vmem:[%s229 + $0x80] sm:$0xf] %vm6069, %v5973
        %6103 = vst.msk [vmem:[%s229 + $0x84] sm:$0xf] %vm6069, %v5974
        %6104 = vst.msk [vmem:[%s229 + $0x88] sm:$0xf] %vm6069, %v5975
        %6105 = vst.msk [vmem:[%s229 + $0x8c] sm:$0xf] %vm6069, %v5976
        %6106 = vst.msk [vmem:[%s229 + $0x90] sm:$0xf] %vm6069, %v5977
        %6107 = vst.msk [vmem:[%s229 + $0x94] sm:$0xf] %vm6069, %v5978
        %6108 = vst.msk [vmem:[%s229 + $0x98] sm:$0xf] %vm6069, %v5979
        %6109 = vst.msk [vmem:[%s229 + $0x9c] sm:$0xf] %vm6069, %v5980
        %6110 = vst.msk [vmem:[%s229 + $0xa0] sm:$0xf] %vm6069, %v5981
        %6111 = vst.msk [vmem:[%s229 + $0xa4] sm:$0xf] %vm6069, %v5982
        %6112 = vst.msk [vmem:[%s229 + $0xa8] sm:$0xf] %vm6069, %v5983
        %6113 = vst.msk [vmem:[%s229 + $0xac] sm:$0xf] %vm6069, %v5984
        %6114 = vst.msk [vmem:[%s229 + $0xb0] sm:$0xf] %vm6069, %v5985
        %6115 = vst.msk [vmem:[%s229 + $0xb4] sm:$0xf] %vm6069, %v5986
        %6116 = vst.msk [vmem:[%s229 + $0xb8] sm:$0xf] %vm6069, %v5987
        %6117 = vst.msk [vmem:[%s229 + $0xbc] sm:$0xf] %vm6069, %v5988
        %6118 = vst.msk [vmem:[%s229 + $0xc0] sm:$0xf] %vm6069, %v5989
        %6119 = vst.msk [vmem:[%s229 + $0xc4] sm:$0xf] %vm6069, %v5990
        %6120 = vst.msk [vmem:[%s229 + $0xc8] sm:$0xf] %vm6069, %v5991
        %6121 = vst.msk [vmem:[%s229 + $0xcc] sm:$0xf] %vm6069, %v5992
        %6122 = vst.msk [vmem:[%s229 + $0xd0] sm:$0xf] %vm6069, %v5993
        %6123 = vst.msk [vmem:[%s229 + $0xd4] sm:$0xf] %vm6069, %v5994
        %6124 = vst.msk [vmem:[%s229 + $0xd8] sm:$0xf] %vm6069, %v5995
        %6125 = vst.msk [vmem:[%s229 + $0xdc] sm:$0xf] %vm6069, %v5996
        %6126 = vst.msk [vmem:[%s229 + $0xe0] sm:$0xf] %vm6069, %v5997
        %6127 = vst.msk [vmem:[%s229 + $0xe4] sm:$0xf] %vm6069, %v5998
        %6128 = vst.msk [vmem:[%s229 + $0xe8] sm:$0xf] %vm6069, %v5999
        %6129 = vst.msk [vmem:[%s229 + $0xec] sm:$0xf] %vm6069, %v6000
        %6130 = vst.msk [vmem:[%s229 + $0xf0] sm:$0xf] %vm6069, %v6001
        %6131 = vst.msk [vmem:[%s229 + $0xf4] sm:$0xf] %vm6069, %v6002
        %6132 = vst.msk [vmem:[%s229 + $0xf8] sm:$0xf] %vm6069, %v6003
        %6133 = vst.msk [vmem:[%s229 + $0xfc] sm:$0xf] %vm6069, %v6004
        %v6134 = vpack.c.bf16 %v5750, %v5749
        %v6135 = vpack.c.bf16 %v5752, %v5751
        %v6136 = vpack.c.bf16 %v5754, %v5753
        %v6137 = vpack.c.bf16 %v5756, %v5755
        %v6138 = vpack.c.bf16 %v5758, %v5757
        %v6139 = vpack.c.bf16 %v5760, %v5759
        %v6140 = vpack.c.bf16 %v5762, %v5761
        %v6141 = vpack.c.bf16 %v5764, %v5763
        %v6142 = vpack.c.bf16 %v5766, %v5765
        %v6143 = vpack.c.bf16 %v5768, %v5767
        %v6144 = vpack.c.bf16 %v5770, %v5769
        %v6145 = vpack.c.bf16 %v5772, %v5771
        %v6146 = vpack.c.bf16 %v5774, %v5773
        %v6147 = vpack.c.bf16 %v5776, %v5775
        %v6148 = vpack.c.bf16 %v5778, %v5777
        %v6149 = vpack.c.bf16 %v5780, %v5779
        %v6150 = vpack.c.bf16 %v5782, %v5781
        %v6151 = vpack.c.bf16 %v5784, %v5783
        %v6152 = vpack.c.bf16 %v5786, %v5785
        %v6153 = vpack.c.bf16 %v5788, %v5787
        %v6154 = vpack.c.bf16 %v5790, %v5789
        %v6155 = vpack.c.bf16 %v5792, %v5791
        %v6156 = vpack.c.bf16 %v5794, %v5793
        %v6157 = vpack.c.bf16 %v5796, %v5795
        %v6158 = vpack.c.bf16 %v5798, %v5797
        %v6159 = vpack.c.bf16 %v5800, %v5799
        %v6160 = vpack.c.bf16 %v5802, %v5801
        %v6161 = vpack.c.bf16 %v5804, %v5803
        %v6162 = vpack.c.bf16 %v5806, %v5805
        %v6163 = vpack.c.bf16 %v5808, %v5807
        %v6164 = vpack.c.bf16 %v5810, %v5809
        %v6165 = vpack.c.bf16 %v5812, %v5811
        %v6198 = vunpack.c.l.b16 %v6134
        %v6199 = vunpack.c.h.b16 %v6134
        %v6200 = vunpack.c.l.b16 %v6135
        %v6201 = vunpack.c.h.b16 %v6135
        %v6202 = vunpack.c.l.b16 %v6136
        %v6203 = vunpack.c.h.b16 %v6136
        %v6204 = vunpack.c.l.b16 %v6137
        %v6205 = vunpack.c.h.b16 %v6137
        %v6206 = vunpack.c.l.b16 %v6138
        %v6207 = vunpack.c.h.b16 %v6138
        %v6208 = vunpack.c.l.b16 %v6139
        %v6209 = vunpack.c.h.b16 %v6139
        %v6210 = vunpack.c.l.b16 %v6140
        %v6211 = vunpack.c.h.b16 %v6140
        %v6212 = vunpack.c.l.b16 %v6141
        %v6213 = vunpack.c.h.b16 %v6141
        %v6214 = vunpack.c.l.b16 %v6142
        %v6215 = vunpack.c.h.b16 %v6142
        %v6216 = vunpack.c.l.b16 %v6143
        %v6217 = vunpack.c.h.b16 %v6143
        %v6218 = vunpack.c.l.b16 %v6144
        %v6219 = vunpack.c.h.b16 %v6144
        %v6220 = vunpack.c.l.b16 %v6145
        %v6221 = vunpack.c.h.b16 %v6145
        %v6222 = vunpack.c.l.b16 %v6146
        %v6223 = vunpack.c.h.b16 %v6146
        %v6224 = vunpack.c.l.b16 %v6147
        %v6225 = vunpack.c.h.b16 %v6147
        %v6226 = vunpack.c.l.b16 %v6148
        %v6227 = vunpack.c.h.b16 %v6148
        %v6228 = vunpack.c.l.b16 %v6149
        %v6229 = vunpack.c.h.b16 %v6149
        %v6230 = vunpack.c.l.b16 %v6150
        %v6231 = vunpack.c.h.b16 %v6150
        %v6232 = vunpack.c.l.b16 %v6151
        %v6233 = vunpack.c.h.b16 %v6151
        %v6234 = vunpack.c.l.b16 %v6152
        %v6235 = vunpack.c.h.b16 %v6152
        %v6236 = vunpack.c.l.b16 %v6153
        %v6237 = vunpack.c.h.b16 %v6153
        %v6238 = vunpack.c.l.b16 %v6154
        %v6239 = vunpack.c.h.b16 %v6154
        %v6240 = vunpack.c.l.b16 %v6155
        %v6241 = vunpack.c.h.b16 %v6155
        %v6242 = vunpack.c.l.b16 %v6156
        %v6243 = vunpack.c.h.b16 %v6156
        %v6244 = vunpack.c.l.b16 %v6157
        %v6245 = vunpack.c.h.b16 %v6157
        %v6246 = vunpack.c.l.b16 %v6158
        %v6247 = vunpack.c.h.b16 %v6158
        %v6248 = vunpack.c.l.b16 %v6159
        %v6249 = vunpack.c.h.b16 %v6159
        %v6250 = vunpack.c.l.b16 %v6160
        %v6251 = vunpack.c.h.b16 %v6160
        %v6252 = vunpack.c.l.b16 %v6161
        %v6253 = vunpack.c.h.b16 %v6161
        %v6254 = vunpack.c.l.b16 %v6162
        %v6255 = vunpack.c.h.b16 %v6162
        %v6256 = vunpack.c.l.b16 %v6163
        %v6257 = vunpack.c.h.b16 %v6163
        %v6258 = vunpack.c.l.b16 %v6164
        %v6259 = vunpack.c.h.b16 %v6164
        %v6260 = vunpack.c.l.b16 %v6165
        %v6261 = vunpack.c.h.b16 %v6165
        %v6262 = vpack.c.b16 %v6198, %v6198
        %v6263 = vpack.c.b16 %v6199, %v6199
        %v6264 = vpack.c.b16 %v6200, %v6200
        %v6265 = vpack.c.b16 %v6201, %v6201
        %v6266 = vpack.c.b16 %v6202, %v6202
        %v6267 = vpack.c.b16 %v6203, %v6203
        %v6268 = vpack.c.b16 %v6204, %v6204
        %v6269 = vpack.c.b16 %v6205, %v6205
        %v6270 = vpack.c.b16 %v6206, %v6206
        %v6271 = vpack.c.b16 %v6207, %v6207
        %v6272 = vpack.c.b16 %v6208, %v6208
        %v6273 = vpack.c.b16 %v6209, %v6209
        %v6274 = vpack.c.b16 %v6210, %v6210
        %v6275 = vpack.c.b16 %v6211, %v6211
        %v6276 = vpack.c.b16 %v6212, %v6212
        %v6277 = vpack.c.b16 %v6213, %v6213
        %v6278 = vpack.c.b16 %v6214, %v6214
        %v6279 = vpack.c.b16 %v6215, %v6215
        %v6280 = vpack.c.b16 %v6216, %v6216
        %v6281 = vpack.c.b16 %v6217, %v6217
        %v6282 = vpack.c.b16 %v6218, %v6218
        %v6283 = vpack.c.b16 %v6219, %v6219
        %v6284 = vpack.c.b16 %v6220, %v6220
        %v6285 = vpack.c.b16 %v6221, %v6221
        %v6286 = vpack.c.b16 %v6222, %v6222
        %v6287 = vpack.c.b16 %v6223, %v6223
        %v6288 = vpack.c.b16 %v6224, %v6224
        %v6289 = vpack.c.b16 %v6225, %v6225
        %v6290 = vpack.c.b16 %v6226, %v6226
        %v6291 = vpack.c.b16 %v6227, %v6227
        %v6292 = vpack.c.b16 %v6228, %v6228
        %v6293 = vpack.c.b16 %v6229, %v6229
        %v6294 = vpack.c.b16 %v6230, %v6230
        %v6295 = vpack.c.b16 %v6231, %v6231
        %v6296 = vpack.c.b16 %v6232, %v6232
        %v6297 = vpack.c.b16 %v6233, %v6233
        %v6298 = vpack.c.b16 %v6234, %v6234
        %v6299 = vpack.c.b16 %v6235, %v6235
        %v6300 = vpack.c.b16 %v6236, %v6236
        %v6301 = vpack.c.b16 %v6237, %v6237
        %v6302 = vpack.c.b16 %v6238, %v6238
        %v6303 = vpack.c.b16 %v6239, %v6239
        %v6304 = vpack.c.b16 %v6240, %v6240
        %v6305 = vpack.c.b16 %v6241, %v6241
        %v6306 = vpack.c.b16 %v6242, %v6242
        %v6307 = vpack.c.b16 %v6243, %v6243
        %v6308 = vpack.c.b16 %v6244, %v6244
        %v6309 = vpack.c.b16 %v6245, %v6245
        %v6310 = vpack.c.b16 %v6246, %v6246
        %v6311 = vpack.c.b16 %v6247, %v6247
        %v6312 = vpack.c.b16 %v6248, %v6248
        %v6313 = vpack.c.b16 %v6249, %v6249
        %v6314 = vpack.c.b16 %v6250, %v6250
        %v6315 = vpack.c.b16 %v6251, %v6251
        %v6316 = vpack.c.b16 %v6252, %v6252
        %v6317 = vpack.c.b16 %v6253, %v6253
        %v6318 = vpack.c.b16 %v6254, %v6254
        %v6319 = vpack.c.b16 %v6255, %v6255
        %v6320 = vpack.c.b16 %v6256, %v6256
        %v6321 = vpack.c.b16 %v6257, %v6257
        %v6322 = vpack.c.b16 %v6258, %v6258
        %v6323 = vpack.c.b16 %v6259, %v6259
        %v6324 = vpack.c.b16 %v6260, %v6260
        %v6325 = vpack.c.b16 %v6261, %v6261
        %s6390 = scalar_lea.vmem %s229, 256 [#allocation9]
        %6391 = vst.msk [vmem:[%s6390] sm:$0xf] %vm6069, %v6262
        %6392 = vst.msk [vmem:[%s6390 + $0x4] sm:$0xf] %vm6069, %v6263
        %6393 = vst.msk [vmem:[%s6390 + $0x8] sm:$0xf] %vm6069, %v6264
        %6394 = vst.msk [vmem:[%s6390 + $0xc] sm:$0xf] %vm6069, %v6265
        %6395 = vst.msk [vmem:[%s6390 + $0x10] sm:$0xf] %vm6069, %v6266
        %6396 = vst.msk [vmem:[%s6390 + $0x14] sm:$0xf] %vm6069, %v6267
        %6397 = vst.msk [vmem:[%s6390 + $0x18] sm:$0xf] %vm6069, %v6268
        %6398 = vst.msk [vmem:[%s6390 + $0x1c] sm:$0xf] %vm6069, %v6269
        %6399 = vst.msk [vmem:[%s6390 + $0x20] sm:$0xf] %vm6069, %v6270
        %6400 = vst.msk [vmem:[%s6390 + $0x24] sm:$0xf] %vm6069, %v6271
        %6401 = vst.msk [vmem:[%s6390 + $0x28] sm:$0xf] %vm6069, %v6272
        %6402 = vst.msk [vmem:[%s6390 + $0x2c] sm:$0xf] %vm6069, %v6273
        %6403 = vst.msk [vmem:[%s6390 + $0x30] sm:$0xf] %vm6069, %v6274
        %6404 = vst.msk [vmem:[%s6390 + $0x34] sm:$0xf] %vm6069, %v6275
        %6405 = vst.msk [vmem:[%s6390 + $0x38] sm:$0xf] %vm6069, %v6276
        %6406 = vst.msk [vmem:[%s6390 + $0x3c] sm:$0xf] %vm6069, %v6277
        %6407 = vst.msk [vmem:[%s6390 + $0x40] sm:$0xf] %vm6069, %v6278
        %6408 = vst.msk [vmem:[%s6390 + $0x44] sm:$0xf] %vm6069, %v6279
        %6409 = vst.msk [vmem:[%s6390 + $0x48] sm:$0xf] %vm6069, %v6280
        %6410 = vst.msk [vmem:[%s6390 + $0x4c] sm:$0xf] %vm6069, %v6281
        %6411 = vst.msk [vmem:[%s6390 + $0x50] sm:$0xf] %vm6069, %v6282
        %6412 = vst.msk [vmem:[%s6390 + $0x54] sm:$0xf] %vm6069, %v6283
        %6413 = vst.msk [vmem:[%s6390 + $0x58] sm:$0xf] %vm6069, %v6284
        %6414 = vst.msk [vmem:[%s6390 + $0x5c] sm:$0xf] %vm6069, %v6285
        %6415 = vst.msk [vmem:[%s6390 + $0x60] sm:$0xf] %vm6069, %v6286
        %6416 = vst.msk [vmem:[%s6390 + $0x64] sm:$0xf] %vm6069, %v6287
        %6417 = vst.msk [vmem:[%s6390 + $0x68] sm:$0xf] %vm6069, %v6288
        %6418 = vst.msk [vmem:[%s6390 + $0x6c] sm:$0xf] %vm6069, %v6289
        %6419 = vst.msk [vmem:[%s6390 + $0x70] sm:$0xf] %vm6069, %v6290
        %6420 = vst.msk [vmem:[%s6390 + $0x74] sm:$0xf] %vm6069, %v6291
        %6421 = vst.msk [vmem:[%s6390 + $0x78] sm:$0xf] %vm6069, %v6292
        %6422 = vst.msk [vmem:[%s6390 + $0x7c] sm:$0xf] %vm6069, %v6293
        %6423 = vst.msk [vmem:[%s6390 + $0x80] sm:$0xf] %vm6069, %v6294
        %6424 = vst.msk [vmem:[%s6390 + $0x84] sm:$0xf] %vm6069, %v6295
        %6425 = vst.msk [vmem:[%s6390 + $0x88] sm:$0xf] %vm6069, %v6296
        %6426 = vst.msk [vmem:[%s6390 + $0x8c] sm:$0xf] %vm6069, %v6297
        %6427 = vst.msk [vmem:[%s6390 + $0x90] sm:$0xf] %vm6069, %v6298
        %6428 = vst.msk [vmem:[%s6390 + $0x94] sm:$0xf] %vm6069, %v6299
        %6429 = vst.msk [vmem:[%s6390 + $0x98] sm:$0xf] %vm6069, %v6300
        %6430 = vst.msk [vmem:[%s6390 + $0x9c] sm:$0xf] %vm6069, %v6301
        %6431 = vst.msk [vmem:[%s6390 + $0xa0] sm:$0xf] %vm6069, %v6302
        %6432 = vst.msk [vmem:[%s6390 + $0xa4] sm:$0xf] %vm6069, %v6303
        %6433 = vst.msk [vmem:[%s6390 + $0xa8] sm:$0xf] %vm6069, %v6304
        %6434 = vst.msk [vmem:[%s6390 + $0xac] sm:$0xf] %vm6069, %v6305
        %6435 = vst.msk [vmem:[%s6390 + $0xb0] sm:$0xf] %vm6069, %v6306
        %6436 = vst.msk [vmem:[%s6390 + $0xb4] sm:$0xf] %vm6069, %v6307
        %6437 = vst.msk [vmem:[%s6390 + $0xb8] sm:$0xf] %vm6069, %v6308
        %6438 = vst.msk [vmem:[%s6390 + $0xbc] sm:$0xf] %vm6069, %v6309
        %6439 = vst.msk [vmem:[%s6390 + $0xc0] sm:$0xf] %vm6069, %v6310
        %6440 = vst.msk [vmem:[%s6390 + $0xc4] sm:$0xf] %vm6069, %v6311
        %6441 = vst.msk [vmem:[%s6390 + $0xc8] sm:$0xf] %vm6069, %v6312
        %6442 = vst.msk [vmem:[%s6390 + $0xcc] sm:$0xf] %vm6069, %v6313
        %6443 = vst.msk [vmem:[%s6390 + $0xd0] sm:$0xf] %vm6069, %v6314
        %6444 = vst.msk [vmem:[%s6390 + $0xd4] sm:$0xf] %vm6069, %v6315
        %6445 = vst.msk [vmem:[%s6390 + $0xd8] sm:$0xf] %vm6069, %v6316
        %6446 = vst.msk [vmem:[%s6390 + $0xdc] sm:$0xf] %vm6069, %v6317
        %6447 = vst.msk [vmem:[%s6390 + $0xe0] sm:$0xf] %vm6069, %v6318
        %6448 = vst.msk [vmem:[%s6390 + $0xe4] sm:$0xf] %vm6069, %v6319
        %6449 = vst.msk [vmem:[%s6390 + $0xe8] sm:$0xf] %vm6069, %v6320
        %6450 = vst.msk [vmem:[%s6390 + $0xec] sm:$0xf] %vm6069, %v6321
        %6451 = vst.msk [vmem:[%s6390 + $0xf0] sm:$0xf] %vm6069, %v6322
        %6452 = vst.msk [vmem:[%s6390 + $0xf4] sm:$0xf] %vm6069, %v6323
        %6453 = vst.msk [vmem:[%s6390 + $0xf8] sm:$0xf] %vm6069, %v6324
        %6454 = vst.msk [vmem:[%s6390 + $0xfc] sm:$0xf] %vm6069, %v6325
        %s6455 = sand.u32 %s111, 1
        %s6456 = scalar_lea.sflag [#allocation5], %s6455
        %s6457 = sand.u32 %s111, 1
        %s6458 = smul.addr %s6457, 512
        %s6459 = scalar_lea.vmem [#allocation9], %s6458
        // Predicated region
        $region49: #{tpu_custom_call.1} parent=31 // pred_check
          %p6460 = pneg %p121
        $region50: #{tpu_custom_call.1} parent=31 // pred_check_branch
          %6462 = sbr.rel (%p6460) target = $region52
        $region51: #{tpu_custom_call.1} parent=31 // pred_region
          %s6463 = smul.u32 32, %s26
          %s6465 = ssub.s32 8192, 8192
          %6466 = vsyncadd %s6456, %s6465
          %s6467 = smul.addr %s6463, 2
          %s6468 = smul.addr %s25, 128
          %s6469 = sadd.s32 %s6467, %s6468
          %s6470 = smul.addr %s6469, 64
          %s6471 = scalar_lea.hbm %s3, %s6470
          %s6472 = sshll.u32 %s6459, 4
          %s6473 = int_to_ptr.vmem [resolvable:$true] %s6472
          %6478 = dma.vmem_to_hbm [thread:$0]  %s6473, 8192, %s6471, %s6456, 64, 64, 4
        $region52: #{tpu_custom_call.1} parent=31 // pred_fallthru
          _
      $region32: #{tpu_custom_call.1} parent=5 // pred_fallthru
        _
      %p6479 = scmp.le.s32.totalorder 2, %s16
      // Predicated region
      $region53: #{tpu_custom_call.1} parent=5 // pred_check
        %p6480 = pneg %p6479
      $region54: #{tpu_custom_call.1} parent=5 // pred_check_branch
        %6482 = sbr.rel (%p6480) target = $region56
      $region55: #{tpu_custom_call.1} parent=5 // pred_region
        %s6483 = ssub.s32 %s16, 2
        // Predicated region
        $region57: #{tpu_custom_call.1} parent=55 // pred_check
          %p6484 = pneg %p127
        $region58: #{tpu_custom_call.1} parent=55 // pred_check_branch
          %6486 = sbr.rel (%p6484) target = $region60
        $region59: #{tpu_custom_call.1} parent=55 // pred_region
          %s6487 = sand.u32 %s112, 1
          %s6488 = scalar_lea.sflag [#allocation5], %s6487
          %s6489 = sand.u32 %s112, 1
          %s6490 = smul.addr %s6489, 512
          %s6491 = scalar_lea.vmem [#allocation9], %s6490
          %6492 = dma.done %s6488, 8192
        $region60: #{tpu_custom_call.1} parent=55 // pred_fallthru
          _
      $region56: #{tpu_custom_call.1} parent=5 // pred_fallthru
        _
    $region6: #{tpu_custom_call.1} parent=1 // loop_footer
      %s20 = sadd.s32 1, %s16
    $region7: #{tpu_custom_call.1} parent=1 // loop_footer_branch
      %15 = sbr.rel target = $region3
    $region8: #{tpu_custom_call.1} parent=1 // loop_exit
      _
    %6493 = vsyncpa [#allocation4], 1
    %s6494 = scalar_lea.sflag [#allocation4], 1
    %6495 = vsyncpa %s6494, 1
    %6496 = vsyncpa [#allocation7], 1
    %6497 = vsyncpa [#allocation5], 1
    %s6498 = scalar_lea.sflag [#allocation5], 1
    %6499 = vsyncpa %s6498, 1

</llo_original>
